<compile_context>
chip_gen: v5e
topology: v5e:2x2
jax: 0.10.0
libtpu: 0.0.40
codegen_flags: <defaults>
</compile_context>

<pallas_src>
import math
import functools

import jax
import jax.numpy as jnp
from jax.experimental import pallas as pl
from jax.experimental.pallas import tpu as pltpu


# ---------------------------------------------------------------------------
# Fused Transformer encoder layer (post-norm, relu, eps=1e-5 torch defaults)
# ---------------------------------------------------------------------------

def _encoder_layer_kernel(x_ref, wqkv_ref, bqkv_ref, wo_ref, bo_ref,
                          g1_ref, be1_ref, w1_ref, b1_ref, w2_ref, b2_ref,
                          g2_ref, be2_ref, o_ref, attn_scr,
                          *, B, S, E, nhead):
    """x is batch-major (B*S, E): rows b*S:(b+1)*S are sequence b (so every
    per-head / per-batch attention slice is a contiguous row block)."""
    dh = E // nhead
    x = x_ref[...]                                     # (B*S, E) f32
    xb = x.astype(jnp.bfloat16)

    # Fused QKV projection (1/sqrt(dh) already folded into the Q columns).
    qkv = jnp.dot(xb, wqkv_ref[...],
                  preferred_element_type=jnp.float32) + bqkv_ref[...]   # (B*S, 3E)

    # Per-head attention (static loop; nhead is tiny). Head merge goes through
    # a VMEM scratch slab so no value-level lane concatenation is needed.
    for h in range(nhead):
        q = qkv[:, h * dh:(h + 1) * dh].reshape(B, S, dh).astype(jnp.bfloat16)
        k = qkv[:, E + h * dh:E + (h + 1) * dh].reshape(B, S, dh).astype(jnp.bfloat16)
        v = qkv[:, 2 * E + h * dh:2 * E + (h + 1) * dh].reshape(B, S, dh).astype(jnp.bfloat16)
        s = jnp.einsum("bqd,bkd->bqk", q, k,
                       preferred_element_type=jnp.float32)              # (B, S, S)
        s = s - jnp.max(s, axis=-1, keepdims=True)
        p = jnp.exp(s)
        denom = jnp.sum(p, axis=-1, keepdims=True)
        o = jnp.einsum("bqk,bkd->bqd", p.astype(jnp.bfloat16), v,
                       preferred_element_type=jnp.float32)              # (B, S, dh)
        o = o * pl.reciprocal(denom, approx=True)
        attn_scr[:, h * dh:(h + 1) * dh] = o.reshape(B * S, dh)

    attn = attn_scr[...]                                                # (B*S, E)

    # out_proj + residual + LayerNorm1
    y = jnp.dot(attn.astype(jnp.bfloat16), wo_ref[...],
                preferred_element_type=jnp.float32) + bo_ref[...] + x
    mean = jnp.mean(y, axis=-1, keepdims=True)
    var = jnp.mean((y - mean) ** 2, axis=-1, keepdims=True)
    y = (y - mean) * jax.lax.rsqrt(var + 1e-5) * g1_ref[...] + be1_ref[...]

    # FFN (lin1 + relu + lin2) + residual + LayerNorm2
    hdd = jnp.dot(y.astype(jnp.bfloat16), w1_ref[...],
                  preferred_element_type=jnp.float32) + b1_ref[...]
    hdd = jnp.maximum(hdd, 0.0)
    z = jnp.dot(hdd.astype(jnp.bfloat16), w2_ref[...],
                preferred_element_type=jnp.float32) + b2_ref[...] + y
    mean = jnp.mean(z, axis=-1, keepdims=True)
    var = jnp.mean((z - mean) ** 2, axis=-1, keepdims=True)
    o_ref[...] = (z - mean) * jax.lax.rsqrt(var + 1e-5) * g2_ref[...] + be2_ref[...]


def encoder_layer(x, p, *, B, S, E, nhead):
    """x: (B*S, E) f32 batch-major -> (B*S, E) f32."""
    return pl.pallas_call(
        functools.partial(_encoder_layer_kernel, B=B, S=S, E=E, nhead=nhead),
        out_shape=jax.ShapeDtypeStruct((B * S, E), jnp.float32),
        scratch_shapes=[pltpu.VMEM((B * S, E), jnp.float32)],
    )(x, p["in_proj_wt"], p["in_proj_b"], p["out_proj_wt"], p["out_proj_b"],
      p["norm1_g"], p["norm1_b"], p["lin1_wt"], p["lin1_b"],
      p["lin2_wt"], p["lin2_b"], p["norm2_g"], p["norm2_b"])


# ---------------------------------------------------------------------------
# Fused 2-layer bidirectional LSTM + final fc — one kernel, one launch.
#
# Packed gate layout (columns of wih / whh / b, built at init):
#   [i_f, i_b, f_f, f_b, g_f, g_b, o_f, o_b], each block H lanes wide.
# h and c live as (B, 2H) = [fwd H lanes | bwd H lanes], so h itself is the
# recurrent-matmul LHS and also directly [fwd_final | bwd_final] at the end.
# ---------------------------------------------------------------------------

def _bilstm_fc_kernel(x_ref, wih0_ref, whh0_ref, b0_ref,
                      wih1_ref, whh1_ref, b1_ref, fcw_ref, fcb_ref,
                      o_ref, x1_scr, *, S, B, H):
    G = 8 * H
    # fwd lanes of the packed gate vector: (lane mod 2H) < H
    fwd_gate_mask = (jax.lax.broadcasted_iota(jnp.int32, (B, G), 1) % (2 * H)) < H
    # fwd half of the (B, 2H) hidden state
    fwd_h_mask = jax.lax.broadcasted_iota(jnp.int32, (B, 2 * H), 1) < H

    def run_layer(x_val, wih_ref, whh_ref, b_ref, collect):
        # Whole-layer input projection in one MXU call (bias pre-folded).
        gx = jnp.dot(x_val.astype(jnp.bfloat16), wih_ref[...],
                     preferred_element_type=jnp.float32) + b_ref[...]   # (S*B, 8H)
        whh = whh_ref[...]                                              # (2H, 8H) bf16, resident
        h = jnp.zeros((B, 2 * H), jnp.float32)
        c = jnp.zeros((B, 2 * H), jnp.float32)
        outs = []
        for t in range(S):                    # statically unrolled recurrence
            tb = S - 1 - t                    # backward direction time index
            # fwd lanes take the time-t projection, bwd lanes the time-(S-1-t)
            # projection: one full-width select, no reversed input copy.
            gin = jnp.where(fwd_gate_mask,
                            gx[t * B:(t + 1) * B, :],
                            gx[tb * B:(tb + 1) * B, :])
            gates = gin + jnp.dot(h.astype(jnp.bfloat16), whh,
                                  preferred_element_type=jnp.float32)   # (B, 8H)
            sig = jax.nn.sigmoid(gates)       # one full-width EUP pass
            i = sig[:, 0:2 * H]
            f = sig[:, 2 * H:4 * H]
            g = jnp.tanh(gates[:, 4 * H:6 * H])
            o = sig[:, 6 * H:8 * H]
            c = f * c + i * g
            h = o * jnp.tanh(c)
            if collect:
                outs.append(h)                # stays in registers; no HBM store
        return h, outs

    # ---- layer 0 ----
    _, outs0 = run_layer(x_ref[...], wih0_ref, whh0_ref, b0_ref, collect=True)

    # Build layer-1 input (time-major (S*B, 2H)) in VMEM scratch, off the
    # recurrent chain: row block t = [fwd_h(t) | bwd_h(t)].
    for t in range(S):
        x1_scr[t * B:(t + 1) * B, :] = jnp.where(fwd_h_mask, outs0[t],
                                                 outs0[S - 1 - t])

    # ---- layer 1 (outputs never needed, only final hidden) ----
    h1, _ = run_layer(x1_scr[...], wih1_ref, whh1_ref, b1_ref, collect=False)

    # h1 = [top-layer fwd final h | top-layer bwd final h] == torch
    # cat(hidden[-2], hidden[-1], dim=1); dropout is identity; fused fc.
    o_ref[...] = jnp.dot(h1.astype(jnp.bfloat16), fcw_ref[...],
                         preferred_element_type=jnp.float32) + fcb_ref[...]


def bilstm_fc(x_tm, lstm_params, fc_wt, fc_b, *, S, B, H, output_dim):
    """x_tm: (S*B, I) f32 time-major. Returns (B, output_dim)."""
    assert len(lstm_params) == 2, "fused kernel is written for n_layers=2"
    l0, l1 = lstm_params
    return pl.pallas_call(
        functools.partial(_bilstm_fc_kernel, S=S, B=B, H=H),
        out_shape=jax.ShapeDtypeStruct((B, output_dim), jnp.float32),
        scratch_shapes=[pltpu.VMEM((S * B, 2 * H), jnp.float32)],
    )(x_tm, l0["wih"], l0["whh"], l0["b"], l1["wih"], l1["whh"], l1["b"],
      fc_wt, fc_b)


# ---------------------------------------------------------------------------
# Model glue (plain JAX): embedding, positional encoding, layer wiring
# ---------------------------------------------------------------------------

def positional_encoding(S, D):
    pos = jnp.arange(S, dtype=jnp.float32)[:, None]
    div = jnp.exp(jnp.arange(0, D, 2, dtype=jnp.float32) * (-math.log(10000.0) / D))
    pe = jnp.zeros((S, D), jnp.float32)
    pe = pe.at[:, 0::2].set(jnp.sin(pos * div))
    pe = pe.at[:, 1::2].set(jnp.cos(pos * div))
    return pe


def te_bilstm_forward(text, params, cfg):
    """text: (S, B) int32 token ids -> (B, output_dim)."""
    S, B = text.shape
    D, H = cfg["d_model"], cfg["hidden_dim"]

    # TODO(synk): embedding gather + positional encoding stay in XLA (no
    # Pallas win at this size). Batch-major so attention row blocks are
    # contiguous inside the encoder kernels.
    emb = jnp.take(params["embedding"], text.T, axis=0) * math.sqrt(D)  # (B, S, D)
    emb = emb + positional_encoding(S, D)[None, :, :]
    x = emb.reshape(B * S, D)

    for lp in params["layers"]:
        x = encoder_layer(x, lp, B=B, S=S, E=D, nhead=cfg["nhead"])     # (B*S, D)

    # single tiny XLA transpose back to time-major rows for the LSTM kernel
    x_tm = x.reshape(B, S, D).transpose(1, 0, 2).reshape(S * B, D)

    return bilstm_fc(x_tm, params["lstm"], params["fc_wt"], params["fc_b"],
                     S=S, B=B, H=H, output_dim=cfg["output_dim"])


# ---------------------------------------------------------------------------
# Deterministic parameter initialization (kernel-ready layout: weights
# pre-transposed to (in, out), bf16 MXU operands, attention scale folded into
# Q, LSTM biases folded and gate columns packed for the interleaved kernel).
# ---------------------------------------------------------------------------

def init_params(key, cfg):
    D, nhid, H, nhead = cfg["d_model"], cfg["nhid"], cfg["hidden_dim"], cfg["nhead"]
    dh = D // nhead
    keys = iter(jax.random.split(key, 256))

    def rnd(shape, scale=0.02):
        return jax.random.normal(next(keys), shape, jnp.float32) * scale

    params = {"embedding": rnd((cfg["ntoken"], D), 0.1)}

    attn_scale = 1.0 / math.sqrt(dh)
    layers = []
    for _ in range(cfg["te_nlayers"]):
        wq, wk, wv = rnd((D, D)), rnd((D, D)), rnd((D, D))
        bq, bk, bv = rnd((1, D), 0.01), rnd((1, D), 0.01), rnd((1, D), 0.01)
        layers.append({
            # attention scale folded into the Q projection (weight and bias)
            "in_proj_wt": jnp.concatenate([wq * attn_scale, wk, wv], axis=1
                                          ).astype(jnp.bfloat16),
            "in_proj_b": jnp.concatenate([bq * attn_scale, bk, bv], axis=1),
            "out_proj_wt": rnd((D, D)).astype(jnp.bfloat16),
            "out_proj_b": rnd((1, D), 0.01),
            "lin1_wt": rnd((D, nhid)).astype(jnp.bfloat16),
            "lin1_b": rnd((1, nhid), 0.01),
            "lin2_wt": rnd((nhid, D)).astype(jnp.bfloat16),
            "lin2_b": rnd((1, D), 0.01),
            "norm1_g": jnp.ones((1, D), jnp.float32),
            "norm1_b": jnp.zeros((1, D), jnp.float32),
            "norm2_g": jnp.ones((1, D), jnp.float32),
            "norm2_b": jnp.zeros((1, D), jnp.float32),
        })
    params["layers"] = layers

    def pack_dirs(fwd, bwd):
        # fwd/bwd: (..., 4H) in torch gate order [i,f,g,o] ->
        # (..., 8H) with columns [i_f, i_b, f_f, f_b, g_f, g_b, o_f, o_b].
        lead = fwd.shape[:-1]
        f4 = fwd.reshape(lead + (4, H))
        b4 = bwd.reshape(lead + (4, H))
        return jnp.stack([f4, b4], axis=-2).reshape(lead + (8 * H,))

    lstm = []
    for l in range(cfg["n_layers"]):
        in_size = D if l == 0 else 2 * H
        wih_f, wih_b = rnd((in_size, 4 * H), 0.05), rnd((in_size, 4 * H), 0.05)
        whh_f, whh_b = rnd((H, 4 * H), 0.05), rnd((H, 4 * H), 0.05)
        b_f = rnd((1, 4 * H), 0.01) + rnd((1, 4 * H), 0.01)   # b_ih + b_hh folded
        b_b = rnd((1, 4 * H), 0.01) + rnd((1, 4 * H), 0.01)
        z = jnp.zeros((H, 4 * H), jnp.float32)
        # block structure: h_fwd rows feed only fwd gate columns, h_bwd only bwd
        whh_f_full = jnp.concatenate([whh_f, z], axis=0)      # (2H, 4H)
        whh_b_full = jnp.concatenate([z, whh_b], axis=0)      # (2H, 4H)
        lstm.append({
            "wih": pack_dirs(wih_f, wih_b).astype(jnp.bfloat16),          # (in, 8H)
            "whh": pack_dirs(whh_f_full, whh_b_full).astype(jnp.bfloat16),  # (2H, 8H)
            "b": pack_dirs(b_f, b_b),                                       # (1, 8H) f32
        })
    params["lstm"] = lstm

    params["fc_wt"] = rnd((2 * H, cfg["output_dim"]), 0.05).astype(jnp.bfloat16)
    params["fc_b"] = rnd((1, cfg["output_dim"]), 0.01)
    return params


# ---------------------------------------------------------------------------
# Demo
# ---------------------------------------------------------------------------

if __name__ == "__main__":
    cfg = dict(ntoken=100, d_model=64, nhead=4, nhid=64, te_nlayers=2,
               n_layers=2, hidden_dim=32, output_dim=1)
    S, B = 8, 2

    key = jax.random.PRNGKey(0)
    k_text, k_params = jax.random.split(key)
    text = jax.random.randint(k_text, (S, B), 0, cfg["ntoken"], dtype=jnp.int32)
    params = init_params(k_params, cfg)

    fwd = jax.jit(functools.partial(te_bilstm_forward, cfg=cfg))
    out = fwd(text, params)
    out = jax.block_until_ready(out)
    assert out.shape == (B, cfg["output_dim"]), out.shape
    assert bool(jnp.all(jnp.isfinite(out)))
    print("KERNEL_OK")
</pallas_src>

<mosaic_0001>
module attributes {stable_mosaic.version = 11 : i64} {
  func.func @_encoder_layer_kernel(%arg0: memref<16x64xf32, #tpu.memory_space<vmem>>, %arg1: memref<64x192xbf16, #tpu.memory_space<vmem>>, %arg2: memref<1x192xf32, #tpu.memory_space<vmem>>, %arg3: memref<64x64xbf16, #tpu.memory_space<vmem>>, %arg4: memref<1x64xf32, #tpu.memory_space<vmem>>, %arg5: memref<1x64xf32, #tpu.memory_space<vmem>>, %arg6: memref<1x64xf32, #tpu.memory_space<vmem>>, %arg7: memref<64x64xbf16, #tpu.memory_space<vmem>>, %arg8: memref<1x64xf32, #tpu.memory_space<vmem>>, %arg9: memref<64x64xbf16, #tpu.memory_space<vmem>>, %arg10: memref<1x64xf32, #tpu.memory_space<vmem>>, %arg11: memref<1x64xf32, #tpu.memory_space<vmem>>, %arg12: memref<1x64xf32, #tpu.memory_space<vmem>>, %arg13: memref<16x64xf32, #tpu.memory_space<vmem>>, %arg14: memref<16x64xf32, #tpu.memory_space<vmem>>) attributes {dimension_semantics = [], scalar_prefetch = 0 : i64, scratch_operands = 1 : i64, tpu.core_type = #tpu.core_type<tc>} {
    %c0 = arith.constant 0 : index
    %c0_0 = arith.constant 0 : index
    %0 = vector.load %arg0[%c0, %c0_0] : memref<16x64xf32, #tpu.memory_space<vmem>>, vector<16x64xf32>
    %1 = arith.truncf %0 : vector<16x64xf32> to vector<16x64xbf16>
    %c0_1 = arith.constant 0 : index
    %c0_2 = arith.constant 0 : index
    %2 = vector.load %arg1[%c0_1, %c0_2] : memref<64x192xbf16, #tpu.memory_space<vmem>>, vector<64x192xbf16>
    %cst = arith.constant dense<0.000000e+00> : vector<16x192xf32>
    %3 = tpu.matmul %1, %2, %cst {dimension_numbers = #tpu.dot_dimension_numbers<[1], [0], [0], [1], [0, 0, 1, 1], [], []>} : vector<16x64xbf16>, vector<64x192xbf16>, vector<16x192xf32> -> vector<16x192xf32>
    %c0_3 = arith.constant 0 : index
    %c0_4 = arith.constant 0 : index
    %4 = vector.load %arg2[%c0_3, %c0_4] : memref<1x192xf32, #tpu.memory_space<vmem>>, vector<1x192xf32>
    %5 = vector.broadcast %4 : vector<1x192xf32> to vector<16x192xf32>
    %6 = arith.addf %3, %5 : vector<16x192xf32>
    %7 = vector.extract_strided_slice %6 {offsets = [0, 0], sizes = [16, 16], strides = [1, 1]} : vector<16x192xf32> to vector<16x16xf32>
    %8 = vector.shape_cast %7 : vector<16x16xf32> to vector<2x8x16xf32>
    %9 = arith.truncf %8 : vector<2x8x16xf32> to vector<2x8x16xbf16>
    %10 = vector.extract_strided_slice %6 {offsets = [0, 64], sizes = [16, 16], strides = [1, 1]} : vector<16x192xf32> to vector<16x16xf32>
    %11 = vector.shape_cast %10 : vector<16x16xf32> to vector<2x8x16xf32>
    %12 = arith.truncf %11 : vector<2x8x16xf32> to vector<2x8x16xbf16>
    %13 = vector.extract_strided_slice %6 {offsets = [0, 128], sizes = [16, 16], strides = [1, 1]} : vector<16x192xf32> to vector<16x16xf32>
    %14 = vector.shape_cast %13 : vector<16x16xf32> to vector<2x8x16xf32>
    %15 = arith.truncf %14 : vector<2x8x16xf32> to vector<2x8x16xbf16>
    "tpu.trace_start"() <{level = 10 : i32, message = "bqd,bkd->bqk"}> : () -> ()
    %cst_5 = arith.constant dense<0.000000e+00> : vector<2x8x8xf32>
    %16 = tpu.matmul %9, %12, %cst_5 {dimension_numbers = #tpu.dot_dimension_numbers<[2], [2], [1], [1], [0, 0, 0, 1, 1, 1], [0], [0]>} : vector<2x8x16xbf16>, vector<2x8x16xbf16>, vector<2x8x8xf32> -> vector<2x8x8xf32>
    "tpu.trace_stop"() : () -> ()
    %cst_6 = arith.constant dense<0xFF800000> : vector<2x8xf32>
    %17 = vector.multi_reduction <maximumf>, %16, %cst_6 [2] : vector<2x8x8xf32> to vector<2x8xf32>
    %18 = vector.shape_cast %17 : vector<2x8xf32> to vector<2x8x1xf32>
    %19 = vector.broadcast %18 : vector<2x8x1xf32> to vector<2x8x8xf32>
    %20 = arith.subf %16, %19 : vector<2x8x8xf32>
    %21 = math.exp %20 : vector<2x8x8xf32>
    %cst_7 = arith.constant dense<0.000000e+00> : vector<2x8xf32>
    %22 = vector.multi_reduction <add>, %21, %cst_7 [2] : vector<2x8x8xf32> to vector<2x8xf32>
    %23 = vector.shape_cast %22 : vector<2x8xf32> to vector<2x8x1xf32>
    %24 = arith.truncf %21 : vector<2x8x8xf32> to vector<2x8x8xbf16>
    "tpu.trace_start"() <{level = 10 : i32, message = "bqk,bkd->bqd"}> : () -> ()
    %cst_8 = arith.constant dense<0.000000e+00> : vector<2x8x16xf32>
    %25 = tpu.matmul %24, %15, %cst_8 {dimension_numbers = #tpu.dot_dimension_numbers<[2], [1], [1], [2], [0, 0, 0, 1, 1, 2], [0], [0]>} : vector<2x8x8xbf16>, vector<2x8x16xbf16>, vector<2x8x16xf32> -> vector<2x8x16xf32>
    "tpu.trace_stop"() : () -> ()
    %26 = tpu.reciprocal %23 {approx = true} : vector<2x8x1xf32> -> vector<2x8x1xf32>
    %27 = vector.broadcast %26 : vector<2x8x1xf32> to vector<2x8x16xf32>
    %28 = arith.mulf %25, %27 : vector<2x8x16xf32>
    %29 = vector.shape_cast %28 : vector<2x8x16xf32> to vector<16x16xf32>
    %c0_9 = arith.constant 0 : index
    %c0_10 = arith.constant 0 : index
    %30 = vector.load %arg14[%c0_9, %c0_10] : memref<16x64xf32, #tpu.memory_space<vmem>>, vector<16x16xf32>
    tpu.vector_store %arg14[%c0_9, %c0_10], %29 {strides = array<i32>} : memref<16x64xf32, #tpu.memory_space<vmem>>, vector<16x16xf32>,
    %31 = vector.extract_strided_slice %6 {offsets = [0, 16], sizes = [16, 16], strides = [1, 1]} : vector<16x192xf32> to vector<16x16xf32>
    %32 = vector.shape_cast %31 : vector<16x16xf32> to vector<2x8x16xf32>
    %33 = arith.truncf %32 : vector<2x8x16xf32> to vector<2x8x16xbf16>
    %34 = vector.extract_strided_slice %6 {offsets = [0, 80], sizes = [16, 16], strides = [1, 1]} : vector<16x192xf32> to vector<16x16xf32>
    %35 = vector.shape_cast %34 : vector<16x16xf32> to vector<2x8x16xf32>
    %36 = arith.truncf %35 : vector<2x8x16xf32> to vector<2x8x16xbf16>
    %37 = vector.extract_strided_slice %6 {offsets = [0, 144], sizes = [16, 16], strides = [1, 1]} : vector<16x192xf32> to vector<16x16xf32>
    %38 = vector.shape_cast %37 : vector<16x16xf32> to vector<2x8x16xf32>
    %39 = arith.truncf %38 : vector<2x8x16xf32> to vector<2x8x16xbf16>
    "tpu.trace_start"() <{level = 10 : i32, message = "bqd,bkd->bqk"}> : () -> ()
    %cst_11 = arith.constant dense<0.000000e+00> : vector<2x8x8xf32>
    %40 = tpu.matmul %33, %36, %cst_11 {dimension_numbers = #tpu.dot_dimension_numbers<[2], [2], [1], [1], [0, 0, 0, 1, 1, 1], [0], [0]>} : vector<2x8x16xbf16>, vector<2x8x16xbf16>, vector<2x8x8xf32> -> vector<2x8x8xf32>
    "tpu.trace_stop"() : () -> ()
    %cst_12 = arith.constant dense<0xFF800000> : vector<2x8xf32>
    %41 = vector.multi_reduction <maximumf>, %40, %cst_12 [2] : vector<2x8x8xf32> to vector<2x8xf32>
    %42 = vector.shape_cast %41 : vector<2x8xf32> to vector<2x8x1xf32>
    %43 = vector.broadcast %42 : vector<2x8x1xf32> to vector<2x8x8xf32>
    %44 = arith.subf %40, %43 : vector<2x8x8xf32>
    %45 = math.exp %44 : vector<2x8x8xf32>
    %cst_13 = arith.constant dense<0.000000e+00> : vector<2x8xf32>
    %46 = vector.multi_reduction <add>, %45, %cst_13 [2] : vector<2x8x8xf32> to vector<2x8xf32>
    %47 = vector.shape_cast %46 : vector<2x8xf32> to vector<2x8x1xf32>
    %48 = arith.truncf %45 : vector<2x8x8xf32> to vector<2x8x8xbf16>
    "tpu.trace_start"() <{level = 10 : i32, message = "bqk,bkd->bqd"}> : () -> ()
    %cst_14 = arith.constant dense<0.000000e+00> : vector<2x8x16xf32>
    %49 = tpu.matmul %48, %39, %cst_14 {dimension_numbers = #tpu.dot_dimension_numbers<[2], [1], [1], [2], [0, 0, 0, 1, 1, 2], [0], [0]>} : vector<2x8x8xbf16>, vector<2x8x16xbf16>, vector<2x8x16xf32> -> vector<2x8x16xf32>
    "tpu.trace_stop"() : () -> ()
    %50 = tpu.reciprocal %47 {approx = true} : vector<2x8x1xf32> -> vector<2x8x1xf32>
    %51 = vector.broadcast %50 : vector<2x8x1xf32> to vector<2x8x16xf32>
    %52 = arith.mulf %49, %51 : vector<2x8x16xf32>
    %53 = vector.shape_cast %52 : vector<2x8x16xf32> to vector<16x16xf32>
    %c0_15 = arith.constant 0 : index
    %c16 = arith.constant 16 : index
    %54 = vector.load %arg14[%c0_15, %c16] : memref<16x64xf32, #tpu.memory_space<vmem>>, vector<16x16xf32>
    tpu.vector_store %arg14[%c0_15, %c16], %53 {strides = array<i32>} : memref<16x64xf32, #tpu.memory_space<vmem>>, vector<16x16xf32>,
    %55 = vector.extract_strided_slice %6 {offsets = [0, 32], sizes = [16, 16], strides = [1, 1]} : vector<16x192xf32> to vector<16x16xf32>
    %56 = vector.shape_cast %55 : vector<16x16xf32> to vector<2x8x16xf32>
    %57 = arith.truncf %56 : vector<2x8x16xf32> to vector<2x8x16xbf16>
    %58 = vector.extract_strided_slice %6 {offsets = [0, 96], sizes = [16, 16], strides = [1, 1]} : vector<16x192xf32> to vector<16x16xf32>
    %59 = vector.shape_cast %58 : vector<16x16xf32> to vector<2x8x16xf32>
    %60 = arith.truncf %59 : vector<2x8x16xf32> to vector<2x8x16xbf16>
    %61 = vector.extract_strided_slice %6 {offsets = [0, 160], sizes = [16, 16], strides = [1, 1]} : vector<16x192xf32> to vector<16x16xf32>
    %62 = vector.shape_cast %61 : vector<16x16xf32> to vector<2x8x16xf32>
    %63 = arith.truncf %62 : vector<2x8x16xf32> to vector<2x8x16xbf16>
    "tpu.trace_start"() <{level = 10 : i32, message = "bqd,bkd->bqk"}> : () -> ()
    %cst_16 = arith.constant dense<0.000000e+00> : vector<2x8x8xf32>
    %64 = tpu.matmul %57, %60, %cst_16 {dimension_numbers = #tpu.dot_dimension_numbers<[2], [2], [1], [1], [0, 0, 0, 1, 1, 1], [0], [0]>} : vector<2x8x16xbf16>, vector<2x8x16xbf16>, vector<2x8x8xf32> -> vector<2x8x8xf32>
    "tpu.trace_stop"() : () -> ()
    %cst_17 = arith.constant dense<0xFF800000> : vector<2x8xf32>
    %65 = vector.multi_reduction <maximumf>, %64, %cst_17 [2] : vector<2x8x8xf32> to vector<2x8xf32>
    %66 = vector.shape_cast %65 : vector<2x8xf32> to vector<2x8x1xf32>
    %67 = vector.broadcast %66 : vector<2x8x1xf32> to vector<2x8x8xf32>
    %68 = arith.subf %64, %67 : vector<2x8x8xf32>
    %69 = math.exp %68 : vector<2x8x8xf32>
    %cst_18 = arith.constant dense<0.000000e+00> : vector<2x8xf32>
    %70 = vector.multi_reduction <add>, %69, %cst_18 [2] : vector<2x8x8xf32> to vector<2x8xf32>
    %71 = vector.shape_cast %70 : vector<2x8xf32> to vector<2x8x1xf32>
    %72 = arith.truncf %69 : vector<2x8x8xf32> to vector<2x8x8xbf16>
    "tpu.trace_start"() <{level = 10 : i32, message = "bqk,bkd->bqd"}> : () -> ()
    %cst_19 = arith.constant dense<0.000000e+00> : vector<2x8x16xf32>
    %73 = tpu.matmul %72, %63, %cst_19 {dimension_numbers = #tpu.dot_dimension_numbers<[2], [1], [1], [2], [0, 0, 0, 1, 1, 2], [0], [0]>} : vector<2x8x8xbf16>, vector<2x8x16xbf16>, vector<2x8x16xf32> -> vector<2x8x16xf32>
    "tpu.trace_stop"() : () -> ()
    %74 = tpu.reciprocal %71 {approx = true} : vector<2x8x1xf32> -> vector<2x8x1xf32>
    %75 = vector.broadcast %74 : vector<2x8x1xf32> to vector<2x8x16xf32>
    %76 = arith.mulf %73, %75 : vector<2x8x16xf32>
    %77 = vector.shape_cast %76 : vector<2x8x16xf32> to vector<16x16xf32>
    %c0_20 = arith.constant 0 : index
    %c32 = arith.constant 32 : index
    %78 = vector.load %arg14[%c0_20, %c32] : memref<16x64xf32, #tpu.memory_space<vmem>>, vector<16x16xf32>
    tpu.vector_store %arg14[%c0_20, %c32], %77 {strides = array<i32>} : memref<16x64xf32, #tpu.memory_space<vmem>>, vector<16x16xf32>,
    %79 = vector.extract_strided_slice %6 {offsets = [0, 48], sizes = [16, 16], strides = [1, 1]} : vector<16x192xf32> to vector<16x16xf32>
    %80 = vector.shape_cast %79 : vector<16x16xf32> to vector<2x8x16xf32>
    %81 = arith.truncf %80 : vector<2x8x16xf32> to vector<2x8x16xbf16>
    %82 = vector.extract_strided_slice %6 {offsets = [0, 112], sizes = [16, 16], strides = [1, 1]} : vector<16x192xf32> to vector<16x16xf32>
    %83 = vector.shape_cast %82 : vector<16x16xf32> to vector<2x8x16xf32>
    %84 = arith.truncf %83 : vector<2x8x16xf32> to vector<2x8x16xbf16>
    %85 = vector.extract_strided_slice %6 {offsets = [0, 176], sizes = [16, 16], strides = [1, 1]} : vector<16x192xf32> to vector<16x16xf32>
    %86 = vector.shape_cast %85 : vector<16x16xf32> to vector<2x8x16xf32>
    %87 = arith.truncf %86 : vector<2x8x16xf32> to vector<2x8x16xbf16>
    "tpu.trace_start"() <{level = 10 : i32, message = "bqd,bkd->bqk"}> : () -> ()
    %cst_21 = arith.constant dense<0.000000e+00> : vector<2x8x8xf32>
    %88 = tpu.matmul %81, %84, %cst_21 {dimension_numbers = #tpu.dot_dimension_numbers<[2], [2], [1], [1], [0, 0, 0, 1, 1, 1], [0], [0]>} : vector<2x8x16xbf16>, vector<2x8x16xbf16>, vector<2x8x8xf32> -> vector<2x8x8xf32>
    "tpu.trace_stop"() : () -> ()
    %cst_22 = arith.constant dense<0xFF800000> : vector<2x8xf32>
    %89 = vector.multi_reduction <maximumf>, %88, %cst_22 [2] : vector<2x8x8xf32> to vector<2x8xf32>
    %90 = vector.shape_cast %89 : vector<2x8xf32> to vector<2x8x1xf32>
    %91 = vector.broadcast %90 : vector<2x8x1xf32> to vector<2x8x8xf32>
    %92 = arith.subf %88, %91 : vector<2x8x8xf32>
    %93 = math.exp %92 : vector<2x8x8xf32>
    %cst_23 = arith.constant dense<0.000000e+00> : vector<2x8xf32>
    %94 = vector.multi_reduction <add>, %93, %cst_23 [2] : vector<2x8x8xf32> to vector<2x8xf32>
    %95 = vector.shape_cast %94 : vector<2x8xf32> to vector<2x8x1xf32>
    %96 = arith.truncf %93 : vector<2x8x8xf32> to vector<2x8x8xbf16>
    "tpu.trace_start"() <{level = 10 : i32, message = "bqk,bkd->bqd"}> : () -> ()
    %cst_24 = arith.constant dense<0.000000e+00> : vector<2x8x16xf32>
    %97 = tpu.matmul %96, %87, %cst_24 {dimension_numbers = #tpu.dot_dimension_numbers<[2], [1], [1], [2], [0, 0, 0, 1, 1, 2], [0], [0]>} : vector<2x8x8xbf16>, vector<2x8x16xbf16>, vector<2x8x16xf32> -> vector<2x8x16xf32>
    "tpu.trace_stop"() : () -> ()
    %98 = tpu.reciprocal %95 {approx = true} : vector<2x8x1xf32> -> vector<2x8x1xf32>
    %99 = vector.broadcast %98 : vector<2x8x1xf32> to vector<2x8x16xf32>
    %100 = arith.mulf %97, %99 : vector<2x8x16xf32>
    %101 = vector.shape_cast %100 : vector<2x8x16xf32> to vector<16x16xf32>
    %c0_25 = arith.constant 0 : index
    %c48 = arith.constant 48 : index
    %102 = vector.load %arg14[%c0_25, %c48] : memref<16x64xf32, #tpu.memory_space<vmem>>, vector<16x16xf32>
    tpu.vector_store %arg14[%c0_25, %c48], %101 {strides = array<i32>} : memref<16x64xf32, #tpu.memory_space<vmem>>, vector<16x16xf32>,
    %c0_26 = arith.constant 0 : index
    %c0_27 = arith.constant 0 : index
    %103 = vector.load %arg14[%c0_26, %c0_27] : memref<16x64xf32, #tpu.memory_space<vmem>>, vector<16x64xf32>
    %104 = arith.truncf %103 : vector<16x64xf32> to vector<16x64xbf16>
    %c0_28 = arith.constant 0 : index
    %c0_29 = arith.constant 0 : index
    %105 = vector.load %arg3[%c0_28, %c0_29] : memref<64x64xbf16, #tpu.memory_space<vmem>>, vector<64x64xbf16>
    %cst_30 = arith.constant dense<0.000000e+00> : vector<16x64xf32>
    %106 = tpu.matmul %104, %105, %cst_30 {dimension_numbers = #tpu.dot_dimension_numbers<[1], [0], [0], [1], [0, 0, 1, 1], [], []>} : vector<16x64xbf16>, vector<64x64xbf16>, vector<16x64xf32> -> vector<16x64xf32>
    %c0_31 = arith.constant 0 : index
    %c0_32 = arith.constant 0 : index
    %107 = vector.load %arg4[%c0_31, %c0_32] : memref<1x64xf32, #tpu.memory_space<vmem>>, vector<1x64xf32>
    %108 = vector.broadcast %107 : vector<1x64xf32> to vector<16x64xf32>
    %109 = arith.addf %106, %108 : vector<16x64xf32>
    %110 = arith.addf %109, %0 : vector<16x64xf32>
    %cst_33 = arith.constant dense<0.000000e+00> : vector<16xf32>
    %111 = vector.multi_reduction <add>, %110, %cst_33 [1] : vector<16x64xf32> to vector<16xf32>
    %112 = vector.shape_cast %111 : vector<16xf32> to vector<16x1xf32>
    %cst_34 = arith.constant 6.400000e+01 : f32
    %113 = vector.broadcast %cst_34 : f32 to vector<16x1xf32>
    %114 = arith.divf %112, %113 : vector<16x1xf32>
    %115 = vector.broadcast %114 : vector<16x1xf32> to vector<16x64xf32>
    %116 = arith.subf %110, %115 : vector<16x64xf32>
    %117 = arith.mulf %116, %116 : vector<16x64xf32>
    %cst_35 = arith.constant dense<0.000000e+00> : vector<16xf32>
    %118 = vector.multi_reduction <add>, %117, %cst_35 [1] : vector<16x64xf32> to vector<16xf32>
    %119 = vector.shape_cast %118 : vector<16xf32> to vector<16x1xf32>
    %cst_36 = arith.constant 6.400000e+01 : f32
    %120 = vector.broadcast %cst_36 : f32 to vector<16x1xf32>
    %121 = arith.divf %119, %120 : vector<16x1xf32>
    %122 = vector.broadcast %114 : vector<16x1xf32> to vector<16x64xf32>
    %123 = arith.subf %110, %122 : vector<16x64xf32>
    %cst_37 = arith.constant 9.99999974E-6 : f32
    %124 = vector.broadcast %cst_37 : f32 to vector<16x1xf32>
    %125 = arith.addf %121, %124 : vector<16x1xf32>
    %126 = math.rsqrt %125 : vector<16x1xf32>
    %127 = vector.broadcast %126 : vector<16x1xf32> to vector<16x64xf32>
    %128 = arith.mulf %123, %127 : vector<16x64xf32>
    %c0_38 = arith.constant 0 : index
    %c0_39 = arith.constant 0 : index
    %129 = vector.load %arg5[%c0_38, %c0_39] : memref<1x64xf32, #tpu.memory_space<vmem>>, vector<1x64xf32>
    %130 = vector.broadcast %129 : vector<1x64xf32> to vector<16x64xf32>
    %131 = arith.mulf %128, %130 : vector<16x64xf32>
    %c0_40 = arith.constant 0 : index
    %c0_41 = arith.constant 0 : index
    %132 = vector.load %arg6[%c0_40, %c0_41] : memref<1x64xf32, #tpu.memory_space<vmem>>, vector<1x64xf32>
    %133 = vector.broadcast %132 : vector<1x64xf32> to vector<16x64xf32>
    %134 = arith.addf %131, %133 : vector<16x64xf32>
    %135 = arith.truncf %134 : vector<16x64xf32> to vector<16x64xbf16>
    %c0_42 = arith.constant 0 : index
    %c0_43 = arith.constant 0 : index
    %136 = vector.load %arg7[%c0_42, %c0_43] : memref<64x64xbf16, #tpu.memory_space<vmem>>, vector<64x64xbf16>
    %cst_44 = arith.constant dense<0.000000e+00> : vector<16x64xf32>
    %137 = tpu.matmul %135, %136, %cst_44 {dimension_numbers = #tpu.dot_dimension_numbers<[1], [0], [0], [1], [0, 0, 1, 1], [], []>} : vector<16x64xbf16>, vector<64x64xbf16>, vector<16x64xf32> -> vector<16x64xf32>
    %c0_45 = arith.constant 0 : index
    %c0_46 = arith.constant 0 : index
    %138 = vector.load %arg8[%c0_45, %c0_46] : memref<1x64xf32, #tpu.memory_space<vmem>>, vector<1x64xf32>
    %139 = vector.broadcast %138 : vector<1x64xf32> to vector<16x64xf32>
    %140 = arith.addf %137, %139 : vector<16x64xf32>
    %cst_47 = arith.constant 0.000000e+00 : f32
    %141 = vector.broadcast %cst_47 : f32 to vector<16x64xf32>
    %142 = arith.maximumf %140, %141 : vector<16x64xf32>
    %143 = arith.truncf %142 : vector<16x64xf32> to vector<16x64xbf16>
    %c0_48 = arith.constant 0 : index
    %c0_49 = arith.constant 0 : index
    %144 = vector.load %arg9[%c0_48, %c0_49] : memref<64x64xbf16, #tpu.memory_space<vmem>>, vector<64x64xbf16>
    %cst_50 = arith.constant dense<0.000000e+00> : vector<16x64xf32>
    %145 = tpu.matmul %143, %144, %cst_50 {dimension_numbers = #tpu.dot_dimension_numbers<[1], [0], [0], [1], [0, 0, 1, 1], [], []>} : vector<16x64xbf16>, vector<64x64xbf16>, vector<16x64xf32> -> vector<16x64xf32>
    %c0_51 = arith.constant 0 : index
    %c0_52 = arith.constant 0 : index
    %146 = vector.load %arg10[%c0_51, %c0_52] : memref<1x64xf32, #tpu.memory_space<vmem>>, vector<1x64xf32>
    %147 = vector.broadcast %146 : vector<1x64xf32> to vector<16x64xf32>
    %148 = arith.addf %145, %147 : vector<16x64xf32>
    %149 = arith.addf %148, %134 : vector<16x64xf32>
    %cst_53 = arith.constant dense<0.000000e+00> : vector<16xf32>
    %150 = vector.multi_reduction <add>, %149, %cst_53 [1] : vector<16x64xf32> to vector<16xf32>
    %151 = vector.shape_cast %150 : vector<16xf32> to vector<16x1xf32>
    %cst_54 = arith.constant 6.400000e+01 : f32
    %152 = vector.broadcast %cst_54 : f32 to vector<16x1xf32>
    %153 = arith.divf %151, %152 : vector<16x1xf32>
    %154 = vector.broadcast %153 : vector<16x1xf32> to vector<16x64xf32>
    %155 = arith.subf %149, %154 : vector<16x64xf32>
    %156 = arith.mulf %155, %155 : vector<16x64xf32>
    %cst_55 = arith.constant dense<0.000000e+00> : vector<16xf32>
    %157 = vector.multi_reduction <add>, %156, %cst_55 [1] : vector<16x64xf32> to vector<16xf32>
    %158 = vector.shape_cast %157 : vector<16xf32> to vector<16x1xf32>
    %cst_56 = arith.constant 6.400000e+01 : f32
    %159 = vector.broadcast %cst_56 : f32 to vector<16x1xf32>
    %160 = arith.divf %158, %159 : vector<16x1xf32>
    %161 = vector.broadcast %153 : vector<16x1xf32> to vector<16x64xf32>
    %162 = arith.subf %149, %161 : vector<16x64xf32>
    %cst_57 = arith.constant 9.99999974E-6 : f32
    %163 = vector.broadcast %cst_57 : f32 to vector<16x1xf32>
    %164 = arith.addf %160, %163 : vector<16x1xf32>
    %165 = math.rsqrt %164 : vector<16x1xf32>
    %166 = vector.broadcast %165 : vector<16x1xf32> to vector<16x64xf32>
    %167 = arith.mulf %162, %166 : vector<16x64xf32>
    %c0_58 = arith.constant 0 : index
    %c0_59 = arith.constant 0 : index
    %168 = vector.load %arg11[%c0_58, %c0_59] : memref<1x64xf32, #tpu.memory_space<vmem>>, vector<1x64xf32>
    %169 = vector.broadcast %168 : vector<1x64xf32> to vector<16x64xf32>
    %170 = arith.mulf %167, %169 : vector<16x64xf32>
    %c0_60 = arith.constant 0 : index
    %c0_61 = arith.constant 0 : index
    %171 = vector.load %arg12[%c0_60, %c0_61] : memref<1x64xf32, #tpu.memory_space<vmem>>, vector<1x64xf32>
    %172 = vector.broadcast %171 : vector<1x64xf32> to vector<16x64xf32>
    %173 = arith.addf %170, %172 : vector<16x64xf32>
    %c0_62 = arith.constant 0 : index
    %c0_63 = arith.constant 0 : index
    %174 = vector.load %arg13[%c0_62, %c0_63] : memref<16x64xf32, #tpu.memory_space<vmem>>, vector<16x64xf32>
    tpu.vector_store %arg13[%c0_62, %c0_63], %173 {strides = array<i32>} : memref<16x64xf32, #tpu.memory_space<vmem>>, vector<16x64xf32>,
    return
  }
}

module attributes {stable_mosaic.version = 11 : i64} {
  func.func @_encoder_layer_kernel(%arg0: memref<16x64xf32, #tpu.memory_space<vmem>>, %arg1: memref<64x192xbf16, #tpu.memory_space<vmem>>, %arg2: memref<1x192xf32, #tpu.memory_space<vmem>>, %arg3: memref<64x64xbf16, #tpu.memory_space<vmem>>, %arg4: memref<1x64xf32, #tpu.memory_space<vmem>>, %arg5: memref<1x64xf32, #tpu.memory_space<vmem>>, %arg6: memref<1x64xf32, #tpu.memory_space<vmem>>, %arg7: memref<64x64xbf16, #tpu.memory_space<vmem>>, %arg8: memref<1x64xf32, #tpu.memory_space<vmem>>, %arg9: memref<64x64xbf16, #tpu.memory_space<vmem>>, %arg10: memref<1x64xf32, #tpu.memory_space<vmem>>, %arg11: memref<1x64xf32, #tpu.memory_space<vmem>>, %arg12: memref<1x64xf32, #tpu.memory_space<vmem>>, %arg13: memref<16x64xf32, #tpu.memory_space<vmem>>, %arg14: memref<16x64xf32, #tpu.memory_space<vmem>>) attributes {dimension_semantics = [], scalar_prefetch = 0 : i64, scratch_operands = 1 : i64, tpu.core_type = #tpu.core_type<tc>} {
    %c0 = arith.constant 0 : index
    %c0_0 = arith.constant 0 : index
    %0 = vector.load %arg0[%c0, %c0_0] : memref<16x64xf32, #tpu.memory_space<vmem>>, vector<16x64xf32>
    %1 = arith.truncf %0 : vector<16x64xf32> to vector<16x64xbf16>
    %c0_1 = arith.constant 0 : index
    %c0_2 = arith.constant 0 : index
    %2 = vector.load %arg1[%c0_1, %c0_2] : memref<64x192xbf16, #tpu.memory_space<vmem>>, vector<64x192xbf16>
    %cst = arith.constant dense<0.000000e+00> : vector<16x192xf32>
    %3 = tpu.matmul %1, %2, %cst {dimension_numbers = #tpu.dot_dimension_numbers<[1], [0], [0], [1], [0, 0, 1, 1], [], []>} : vector<16x64xbf16>, vector<64x192xbf16>, vector<16x192xf32> -> vector<16x192xf32>
    %c0_3 = arith.constant 0 : index
    %c0_4 = arith.constant 0 : index
    %4 = vector.load %arg2[%c0_3, %c0_4] : memref<1x192xf32, #tpu.memory_space<vmem>>, vector<1x192xf32>
    %5 = vector.broadcast %4 : vector<1x192xf32> to vector<16x192xf32>
    %6 = arith.addf %3, %5 : vector<16x192xf32>
    %7 = vector.extract_strided_slice %6 {offsets = [0, 0], sizes = [16, 16], strides = [1, 1]} : vector<16x192xf32> to vector<16x16xf32>
    %8 = vector.shape_cast %7 : vector<16x16xf32> to vector<2x8x16xf32>
    %9 = arith.truncf %8 : vector<2x8x16xf32> to vector<2x8x16xbf16>
    %10 = vector.extract_strided_slice %6 {offsets = [0, 64], sizes = [16, 16], strides = [1, 1]} : vector<16x192xf32> to vector<16x16xf32>
    %11 = vector.shape_cast %10 : vector<16x16xf32> to vector<2x8x16xf32>
    %12 = arith.truncf %11 : vector<2x8x16xf32> to vector<2x8x16xbf16>
    %13 = vector.extract_strided_slice %6 {offsets = [0, 128], sizes = [16, 16], strides = [1, 1]} : vector<16x192xf32> to vector<16x16xf32>
    %14 = vector.shape_cast %13 : vector<16x16xf32> to vector<2x8x16xf32>
    %15 = arith.truncf %14 : vector<2x8x16xf32> to vector<2x8x16xbf16>
    "tpu.trace_start"() <{level = 10 : i32, message = "bqd,bkd->bqk"}> : () -> ()
    %cst_5 = arith.constant dense<0.000000e+00> : vector<2x8x8xf32>
    %16 = tpu.matmul %9, %12, %cst_5 {dimension_numbers = #tpu.dot_dimension_numbers<[2], [2], [1], [1], [0, 0, 0, 1, 1, 1], [0], [0]>} : vector<2x8x16xbf16>, vector<2x8x16xbf16>, vector<2x8x8xf32> -> vector<2x8x8xf32>
    "tpu.trace_stop"() : () -> ()
    %cst_6 = arith.constant dense<0xFF800000> : vector<2x8xf32>
    %17 = vector.multi_reduction <maximumf>, %16, %cst_6 [2] : vector<2x8x8xf32> to vector<2x8xf32>
    %18 = vector.shape_cast %17 : vector<2x8xf32> to vector<2x8x1xf32>
    %19 = vector.broadcast %18 : vector<2x8x1xf32> to vector<2x8x8xf32>
    %20 = arith.subf %16, %19 : vector<2x8x8xf32>
    %21 = math.exp %20 : vector<2x8x8xf32>
    %cst_7 = arith.constant dense<0.000000e+00> : vector<2x8xf32>
    %22 = vector.multi_reduction <add>, %21, %cst_7 [2] : vector<2x8x8xf32> to vector<2x8xf32>
    %23 = vector.shape_cast %22 : vector<2x8xf32> to vector<2x8x1xf32>
    %24 = arith.truncf %21 : vector<2x8x8xf32> to vector<2x8x8xbf16>
    "tpu.trace_start"() <{level = 10 : i32, message = "bqk,bkd->bqd"}> : () -> ()
    %cst_8 = arith.constant dense<0.000000e+00> : vector<2x8x16xf32>
    %25 = tpu.matmul %24, %15, %cst_8 {dimension_numbers = #tpu.dot_dimension_numbers<[2], [1], [1], [2], [0, 0, 0, 1, 1, 2], [0], [0]>} : vector<2x8x8xbf16>, vector<2x8x16xbf16>, vector<2x8x16xf32> -> vector<2x8x16xf32>
    "tpu.trace_stop"() : () -> ()
    %26 = tpu.reciprocal %23 {approx = true} : vector<2x8x1xf32> -> vector<2x8x1xf32>
    %27 = vector.broadcast %26 : vector<2x8x1xf32> to vector<2x8x16xf32>
    %28 = arith.mulf %25, %27 : vector<2x8x16xf32>
    %29 = vector.shape_cast %28 : vector<2x8x16xf32> to vector<16x16xf32>
    %c0_9 = arith.constant 0 : index
    %c0_10 = arith.constant 0 : index
    %30 = vector.load %arg14[%c0_9, %c0_10] : memref<16x64xf32, #tpu.memory_space<vmem>>, vector<16x16xf32>
    tpu.vector_store %arg14[%c0_9, %c0_10], %29 {strides = array<i32>} : memref<16x64xf32, #tpu.memory_space<vmem>>, vector<16x16xf32>,
    %31 = vector.extract_strided_slice %6 {offsets = [0, 16], sizes = [16, 16], strides = [1, 1]} : vector<16x192xf32> to vector<16x16xf32>
    %32 = vector.shape_cast %31 : vector<16x16xf32> to vector<2x8x16xf32>
    %33 = arith.truncf %32 : vector<2x8x16xf32> to vector<2x8x16xbf16>
    %34 = vector.extract_strided_slice %6 {offsets = [0, 80], sizes = [16, 16], strides = [1, 1]} : vector<16x192xf32> to vector<16x16xf32>
    %35 = vector.shape_cast %34 : vector<16x16xf32> to vector<2x8x16xf32>
    %36 = arith.truncf %35 : vector<2x8x16xf32> to vector<2x8x16xbf16>
    %37 = vector.extract_strided_slice %6 {offsets = [0, 144], sizes = [16, 16], strides = [1, 1]} : vector<16x192xf32> to vector<16x16xf32>
    %38 = vector.shape_cast %37 : vector<16x16xf32> to vector<2x8x16xf32>
    %39 = arith.truncf %38 : vector<2x8x16xf32> to vector<2x8x16xbf16>
    "tpu.trace_start"() <{level = 10 : i32, message = "bqd,bkd->bqk"}> : () -> ()
    %cst_11 = arith.constant dense<0.000000e+00> : vector<2x8x8xf32>
    %40 = tpu.matmul %33, %36, %cst_11 {dimension_numbers = #tpu.dot_dimension_numbers<[2], [2], [1], [1], [0, 0, 0, 1, 1, 1], [0], [0]>} : vector<2x8x16xbf16>, vector<2x8x16xbf16>, vector<2x8x8xf32> -> vector<2x8x8xf32>
    "tpu.trace_stop"() : () -> ()
    %cst_12 = arith.constant dense<0xFF800000> : vector<2x8xf32>
    %41 = vector.multi_reduction <maximumf>, %40, %cst_12 [2] : vector<2x8x8xf32> to vector<2x8xf32>
    %42 = vector.shape_cast %41 : vector<2x8xf32> to vector<2x8x1xf32>
    %43 = vector.broadcast %42 : vector<2x8x1xf32> to vector<2x8x8xf32>
    %44 = arith.subf %40, %43 : vector<2x8x8xf32>
    %45 = math.exp %44 : vector<2x8x8xf32>
    %cst_13 = arith.constant dense<0.000000e+00> : vector<2x8xf32>
    %46 = vector.multi_reduction <add>, %45, %cst_13 [2] : vector<2x8x8xf32> to vector<2x8xf32>
    %47 = vector.shape_cast %46 : vector<2x8xf32> to vector<2x8x1xf32>
    %48 = arith.truncf %45 : vector<2x8x8xf32> to vector<2x8x8xbf16>
    "tpu.trace_start"() <{level = 10 : i32, message = "bqk,bkd->bqd"}> : () -> ()
    %cst_14 = arith.constant dense<0.000000e+00> : vector<2x8x16xf32>
    %49 = tpu.matmul %48, %39, %cst_14 {dimension_numbers = #tpu.dot_dimension_numbers<[2], [1], [1], [2], [0, 0, 0, 1, 1, 2], [0], [0]>} : vector<2x8x8xbf16>, vector<2x8x16xbf16>, vector<2x8x16xf32> -> vector<2x8x16xf32>
    "tpu.trace_stop"() : () -> ()
    %50 = tpu.reciprocal %47 {approx = true} : vector<2x8x1xf32> -> vector<2x8x1xf32>
    %51 = vector.broadcast %50 : vector<2x8x1xf32> to vector<2x8x16xf32>
    %52 = arith.mulf %49, %51 : vector<2x8x16xf32>
    %53 = vector.shape_cast %52 : vector<2x8x16xf32> to vector<16x16xf32>
    %c0_15 = arith.constant 0 : index
    %c16 = arith.constant 16 : index
    %54 = vector.load %arg14[%c0_15, %c16] : memref<16x64xf32, #tpu.memory_space<vmem>>, vector<16x16xf32>
    tpu.vector_store %arg14[%c0_15, %c16], %53 {strides = array<i32>} : memref<16x64xf32, #tpu.memory_space<vmem>>, vector<16x16xf32>,
    %55 = vector.extract_strided_slice %6 {offsets = [0, 32], sizes = [16, 16], strides = [1, 1]} : vector<16x192xf32> to vector<16x16xf32>
    %56 = vector.shape_cast %55 : vector<16x16xf32> to vector<2x8x16xf32>
    %57 = arith.truncf %56 : vector<2x8x16xf32> to vector<2x8x16xbf16>
    %58 = vector.extract_strided_slice %6 {offsets = [0, 96], sizes = [16, 16], strides = [1, 1]} : vector<16x192xf32> to vector<16x16xf32>
    %59 = vector.shape_cast %58 : vector<16x16xf32> to vector<2x8x16xf32>
    %60 = arith.truncf %59 : vector<2x8x16xf32> to vector<2x8x16xbf16>
    %61 = vector.extract_strided_slice %6 {offsets = [0, 160], sizes = [16, 16], strides = [1, 1]} : vector<16x192xf32> to vector<16x16xf32>
    %62 = vector.shape_cast %61 : vector<16x16xf32> to vector<2x8x16xf32>
    %63 = arith.truncf %62 : vector<2x8x16xf32> to vector<2x8x16xbf16>
    "tpu.trace_start"() <{level = 10 : i32, message = "bqd,bkd->bqk"}> : () -> ()
    %cst_16 = arith.constant dense<0.000000e+00> : vector<2x8x8xf32>
    %64 = tpu.matmul %57, %60, %cst_16 {dimension_numbers = #tpu.dot_dimension_numbers<[2], [2], [1], [1], [0, 0, 0, 1, 1, 1], [0], [0]>} : vector<2x8x16xbf16>, vector<2x8x16xbf16>, vector<2x8x8xf32> -> vector<2x8x8xf32>
    "tpu.trace_stop"() : () -> ()
    %cst_17 = arith.constant dense<0xFF800000> : vector<2x8xf32>
    %65 = vector.multi_reduction <maximumf>, %64, %cst_17 [2] : vector<2x8x8xf32> to vector<2x8xf32>
    %66 = vector.shape_cast %65 : vector<2x8xf32> to vector<2x8x1xf32>
    %67 = vector.broadcast %66 : vector<2x8x1xf32> to vector<2x8x8xf32>
    %68 = arith.subf %64, %67 : vector<2x8x8xf32>
    %69 = math.exp %68 : vector<2x8x8xf32>
    %cst_18 = arith.constant dense<0.000000e+00> : vector<2x8xf32>
    %70 = vector.multi_reduction <add>, %69, %cst_18 [2] : vector<2x8x8xf32> to vector<2x8xf32>
    %71 = vector.shape_cast %70 : vector<2x8xf32> to vector<2x8x1xf32>
    %72 = arith.truncf %69 : vector<2x8x8xf32> to vector<2x8x8xbf16>
    "tpu.trace_start"() <{level = 10 : i32, message = "bqk,bkd->bqd"}> : () -> ()
    %cst_19 = arith.constant dense<0.000000e+00> : vector<2x8x16xf32>
    %73 = tpu.matmul %72, %63, %cst_19 {dimension_numbers = #tpu.dot_dimension_numbers<[2], [1], [1], [2], [0, 0, 0, 1, 1, 2], [0], [0]>} : vector<2x8x8xbf16>, vector<2x8x16xbf16>, vector<2x8x16xf32> -> vector<2x8x16xf32>
    "tpu.trace_stop"() : () -> ()
    %74 = tpu.reciprocal %71 {approx = true} : vector<2x8x1xf32> -> vector<2x8x1xf32>
    %75 = vector.broadcast %74 : vector<2x8x1xf32> to vector<2x8x16xf32>
    %76 = arith.mulf %73, %75 : vector<2x8x16xf32>
    %77 = vector.shape_cast %76 : vector<2x8x16xf32> to vector<16x16xf32>
    %c0_20 = arith.constant 0 : index
    %c32 = arith.constant 32 : index
    %78 = vector.load %arg14[%c0_20, %c32] : memref<16x64xf32, #tpu.memory_space<vmem>>, vector<16x16xf32>
    tpu.vector_store %arg14[%c0_20, %c32], %77 {strides = array<i32>} : memref<16x64xf32, #tpu.memory_space<vmem>>, vector<16x16xf32>,
    %79 = vector.extract_strided_slice %6 {offsets = [0, 48], sizes = [16, 16], strides = [1, 1]} : vector<16x192xf32> to vector<16x16xf32>
    %80 = vector.shape_cast %79 : vector<16x16xf32> to vector<2x8x16xf32>
    %81 = arith.truncf %80 : vector<2x8x16xf32> to vector<2x8x16xbf16>
    %82 = vector.extract_strided_slice %6 {offsets = [0, 112], sizes = [16, 16], strides = [1, 1]} : vector<16x192xf32> to vector<16x16xf32>
    %83 = vector.shape_cast %82 : vector<16x16xf32> to vector<2x8x16xf32>
    %84 = arith.truncf %83 : vector<2x8x16xf32> to vector<2x8x16xbf16>
    %85 = vector.extract_strided_slice %6 {offsets = [0, 176], sizes = [16, 16], strides = [1, 1]} : vector<16x192xf32> to vector<16x16xf32>
    %86 = vector.shape_cast %85 : vector<16x16xf32> to vector<2x8x16xf32>
    %87 = arith.truncf %86 : vector<2x8x16xf32> to vector<2x8x16xbf16>
    "tpu.trace_start"() <{level = 10 : i32, message = "bqd,bkd->bqk"}> : () -> ()
    %cst_21 = arith.constant dense<0.000000e+00> : vector<2x8x8xf32>
    %88 = tpu.matmul %81, %84, %cst_21 {dimension_numbers = #tpu.dot_dimension_numbers<[2], [2], [1], [1], [0, 0, 0, 1, 1, 1], [0], [0]>} : vector<2x8x16xbf16>, vector<2x8x16xbf16>, vector<2x8x8xf32> -> vector<2x8x8xf32>
    "tpu.trace_stop"() : () -> ()
    %cst_22 = arith.constant dense<0xFF800000> : vector<2x8xf32>
    %89 = vector.multi_reduction <maximumf>, %88, %cst_22 [2] : vector<2x8x8xf32> to vector<2x8xf32>
    %90 = vector.shape_cast %89 : vector<2x8xf32> to vector<2x8x1xf32>
    %91 = vector.broadcast %90 : vector<2x8x1xf32> to vector<2x8x8xf32>
    %92 = arith.subf %88, %91 : vector<2x8x8xf32>
    %93 = math.exp %92 : vector<2x8x8xf32>
    %cst_23 = arith.constant dense<0.000000e+00> : vector<2x8xf32>
    %94 = vector.multi_reduction <add>, %93, %cst_23 [2] : vector<2x8x8xf32> to vector<2x8xf32>
    %95 = vector.shape_cast %94 : vector<2x8xf32> to vector<2x8x1xf32>
    %96 = arith.truncf %93 : vector<2x8x8xf32> to vector<2x8x8xbf16>
    "tpu.trace_start"() <{level = 10 : i32, message = "bqk,bkd->bqd"}> : () -> ()
    %cst_24 = arith.constant dense<0.000000e+00> : vector<2x8x16xf32>
    %97 = tpu.matmul %96, %87, %cst_24 {dimension_numbers = #tpu.dot_dimension_numbers<[2], [1], [1], [2], [0, 0, 0, 1, 1, 2], [0], [0]>} : vector<2x8x8xbf16>, vector<2x8x16xbf16>, vector<2x8x16xf32> -> vector<2x8x16xf32>
    "tpu.trace_stop"() : () -> ()
    %98 = tpu.reciprocal %95 {approx = true} : vector<2x8x1xf32> -> vector<2x8x1xf32>
    %99 = vector.broadcast %98 : vector<2x8x1xf32> to vector<2x8x16xf32>
    %100 = arith.mulf %97, %99 : vector<2x8x16xf32>
    %101 = vector.shape_cast %100 : vector<2x8x16xf32> to vector<16x16xf32>
    %c0_25 = arith.constant 0 : index
    %c48 = arith.constant 48 : index
    %102 = vector.load %arg14[%c0_25, %c48] : memref<16x64xf32, #tpu.memory_space<vmem>>, vector<16x16xf32>
    tpu.vector_store %arg14[%c0_25, %c48], %101 {strides = array<i32>} : memref<16x64xf32, #tpu.memory_space<vmem>>, vector<16x16xf32>,
    %c0_26 = arith.constant 0 : index
    %c0_27 = arith.constant 0 : index
    %103 = vector.load %arg14[%c0_26, %c0_27] : memref<16x64xf32, #tpu.memory_space<vmem>>, vector<16x64xf32>
    %104 = arith.truncf %103 : vector<16x64xf32> to vector<16x64xbf16>
    %c0_28 = arith.constant 0 : index
    %c0_29 = arith.constant 0 : index
    %105 = vector.load %arg3[%c0_28, %c0_29] : memref<64x64xbf16, #tpu.memory_space<vmem>>, vector<64x64xbf16>
    %cst_30 = arith.constant dense<0.000000e+00> : vector<16x64xf32>
    %106 = tpu.matmul %104, %105, %cst_30 {dimension_numbers = #tpu.dot_dimension_numbers<[1], [0], [0], [1], [0, 0, 1, 1], [], []>} : vector<16x64xbf16>, vector<64x64xbf16>, vector<16x64xf32> -> vector<16x64xf32>
    %c0_31 = arith.constant 0 : index
    %c0_32 = arith.constant 0 : index
    %107 = vector.load %arg4[%c0_31, %c0_32] : memref<1x64xf32, #tpu.memory_space<vmem>>, vector<1x64xf32>
    %108 = vector.broadcast %107 : vector<1x64xf32> to vector<16x64xf32>
    %109 = arith.addf %106, %108 : vector<16x64xf32>
    %110 = arith.addf %109, %0 : vector<16x64xf32>
    %cst_33 = arith.constant dense<0.000000e+00> : vector<16xf32>
    %111 = vector.multi_reduction <add>, %110, %cst_33 [1] : vector<16x64xf32> to vector<16xf32>
    %112 = vector.shape_cast %111 : vector<16xf32> to vector<16x1xf32>
    %cst_34 = arith.constant 6.400000e+01 : f32
    %113 = vector.broadcast %cst_34 : f32 to vector<16x1xf32>
    %114 = arith.divf %112, %113 : vector<16x1xf32>
    %115 = vector.broadcast %114 : vector<16x1xf32> to vector<16x64xf32>
    %116 = arith.subf %110, %115 : vector<16x64xf32>
    %117 = arith.mulf %116, %116 : vector<16x64xf32>
    %cst_35 = arith.constant dense<0.000000e+00> : vector<16xf32>
    %118 = vector.multi_reduction <add>, %117, %cst_35 [1] : vector<16x64xf32> to vector<16xf32>
    %119 = vector.shape_cast %118 : vector<16xf32> to vector<16x1xf32>
    %cst_36 = arith.constant 6.400000e+01 : f32
    %120 = vector.broadcast %cst_36 : f32 to vector<16x1xf32>
    %121 = arith.divf %119, %120 : vector<16x1xf32>
    %122 = vector.broadcast %114 : vector<16x1xf32> to vector<16x64xf32>
    %123 = arith.subf %110, %122 : vector<16x64xf32>
    %cst_37 = arith.constant 9.99999974E-6 : f32
    %124 = vector.broadcast %cst_37 : f32 to vector<16x1xf32>
    %125 = arith.addf %121, %124 : vector<16x1xf32>
    %126 = math.rsqrt %125 : vector<16x1xf32>
    %127 = vector.broadcast %126 : vector<16x1xf32> to vector<16x64xf32>
    %128 = arith.mulf %123, %127 : vector<16x64xf32>
    %c0_38 = arith.constant 0 : index
    %c0_39 = arith.constant 0 : index
    %129 = vector.load %arg5[%c0_38, %c0_39] : memref<1x64xf32, #tpu.memory_space<vmem>>, vector<1x64xf32>
    %130 = vector.broadcast %129 : vector<1x64xf32> to vector<16x64xf32>
    %131 = arith.mulf %128, %130 : vector<16x64xf32>
    %c0_40 = arith.constant 0 : index
    %c0_41 = arith.constant 0 : index
    %132 = vector.load %arg6[%c0_40, %c0_41] : memref<1x64xf32, #tpu.memory_space<vmem>>, vector<1x64xf32>
    %133 = vector.broadcast %132 : vector<1x64xf32> to vector<16x64xf32>
    %134 = arith.addf %131, %133 : vector<16x64xf32>
    %135 = arith.truncf %134 : vector<16x64xf32> to vector<16x64xbf16>
    %c0_42 = arith.constant 0 : index
    %c0_43 = arith.constant 0 : index
    %136 = vector.load %arg7[%c0_42, %c0_43] : memref<64x64xbf16, #tpu.memory_space<vmem>>, vector<64x64xbf16>
    %cst_44 = arith.constant dense<0.000000e+00> : vector<16x64xf32>
    %137 = tpu.matmul %135, %136, %cst_44 {dimension_numbers = #tpu.dot_dimension_numbers<[1], [0], [0], [1], [0, 0, 1, 1], [], []>} : vector<16x64xbf16>, vector<64x64xbf16>, vector<16x64xf32> -> vector<16x64xf32>
    %c0_45 = arith.constant 0 : index
    %c0_46 = arith.constant 0 : index
    %138 = vector.load %arg8[%c0_45, %c0_46] : memref<1x64xf32, #tpu.memory_space<vmem>>, vector<1x64xf32>
    %139 = vector.broadcast %138 : vector<1x64xf32> to vector<16x64xf32>
    %140 = arith.addf %137, %139 : vector<16x64xf32>
    %cst_47 = arith.constant 0.000000e+00 : f32
    %141 = vector.broadcast %cst_47 : f32 to vector<16x64xf32>
    %142 = arith.maximumf %140, %141 : vector<16x64xf32>
    %143 = arith.truncf %142 : vector<16x64xf32> to vector<16x64xbf16>
    %c0_48 = arith.constant 0 : index
    %c0_49 = arith.constant 0 : index
    %144 = vector.load %arg9[%c0_48, %c0_49] : memref<64x64xbf16, #tpu.memory_space<vmem>>, vector<64x64xbf16>
    %cst_50 = arith.constant dense<0.000000e+00> : vector<16x64xf32>
    %145 = tpu.matmul %143, %144, %cst_50 {dimension_numbers = #tpu.dot_dimension_numbers<[1], [0], [0], [1], [0, 0, 1, 1], [], []>} : vector<16x64xbf16>, vector<64x64xbf16>, vector<16x64xf32> -> vector<16x64xf32>
    %c0_51 = arith.constant 0 : index
    %c0_52 = arith.constant 0 : index
    %146 = vector.load %arg10[%c0_51, %c0_52] : memref<1x64xf32, #tpu.memory_space<vmem>>, vector<1x64xf32>
    %147 = vector.broadcast %146 : vector<1x64xf32> to vector<16x64xf32>
    %148 = arith.addf %145, %147 : vector<16x64xf32>
    %149 = arith.addf %148, %134 : vector<16x64xf32>
    %cst_53 = arith.constant dense<0.000000e+00> : vector<16xf32>
    %150 = vector.multi_reduction <add>, %149, %cst_53 [1] : vector<16x64xf32> to vector<16xf32>
    %151 = vector.shape_cast %150 : vector<16xf32> to vector<16x1xf32>
    %cst_54 = arith.constant 6.400000e+01 : f32
    %152 = vector.broadcast %cst_54 : f32 to vector<16x1xf32>
    %153 = arith.divf %151, %152 : vector<16x1xf32>
    %154 = vector.broadcast %153 : vector<16x1xf32> to vector<16x64xf32>
    %155 = arith.subf %149, %154 : vector<16x64xf32>
    %156 = arith.mulf %155, %155 : vector<16x64xf32>
    %cst_55 = arith.constant dense<0.000000e+00> : vector<16xf32>
    %157 = vector.multi_reduction <add>, %156, %cst_55 [1] : vector<16x64xf32> to vector<16xf32>
    %158 = vector.shape_cast %157 : vector<16xf32> to vector<16x1xf32>
    %cst_56 = arith.constant 6.400000e+01 : f32
    %159 = vector.broadcast %cst_56 : f32 to vector<16x1xf32>
    %160 = arith.divf %158, %159 : vector<16x1xf32>
    %161 = vector.broadcast %153 : vector<16x1xf32> to vector<16x64xf32>
    %162 = arith.subf %149, %161 : vector<16x64xf32>
    %cst_57 = arith.constant 9.99999974E-6 : f32
    %163 = vector.broadcast %cst_57 : f32 to vector<16x1xf32>
    %164 = arith.addf %160, %163 : vector<16x1xf32>
    %165 = math.rsqrt %164 : vector<16x1xf32>
    %166 = vector.broadcast %165 : vector<16x1xf32> to vector<16x64xf32>
    %167 = arith.mulf %162, %166 : vector<16x64xf32>
    %c0_58 = arith.constant 0 : index
    %c0_59 = arith.constant 0 : index
    %168 = vector.load %arg11[%c0_58, %c0_59] : memref<1x64xf32, #tpu.memory_space<vmem>>, vector<1x64xf32>
    %169 = vector.broadcast %168 : vector<1x64xf32> to vector<16x64xf32>
    %170 = arith.mulf %167, %169 : vector<16x64xf32>
    %c0_60 = arith.constant 0 : index
    %c0_61 = arith.constant 0 : index
    %171 = vector.load %arg12[%c0_60, %c0_61] : memref<1x64xf32, #tpu.memory_space<vmem>>, vector<1x64xf32>
    %172 = vector.broadcast %171 : vector<1x64xf32> to vector<16x64xf32>
    %173 = arith.addf %170, %172 : vector<16x64xf32>
    %c0_62 = arith.constant 0 : index
    %c0_63 = arith.constant 0 : index
    %174 = vector.load %arg13[%c0_62, %c0_63] : memref<16x64xf32, #tpu.memory_space<vmem>>, vector<16x64xf32>
    tpu.vector_store %arg13[%c0_62, %c0_63], %173 {strides = array<i32>} : memref<16x64xf32, #tpu.memory_space<vmem>>, vector<16x64xf32>,
    return
  }
}

module attributes {stable_mosaic.version = 11 : i64} {
  func.func @_bilstm_fc_kernel(%arg0: memref<16x64xf32, #tpu.memory_space<vmem>>, %arg1: memref<64x256xbf16, #tpu.memory_space<vmem>>, %arg2: memref<64x256xbf16, #tpu.memory_space<vmem>>, %arg3: memref<1x256xf32, #tpu.memory_space<vmem>>, %arg4: memref<64x256xbf16, #tpu.memory_space<vmem>>, %arg5: memref<64x256xbf16, #tpu.memory_space<vmem>>, %arg6: memref<1x256xf32, #tpu.memory_space<vmem>>, %arg7: memref<64x1xbf16, #tpu.memory_space<vmem>>, %arg8: memref<1x1xf32, #tpu.memory_space<vmem>>, %arg9: memref<2x1xf32, #tpu.memory_space<vmem>>, %arg10: memref<16x64xf32, #tpu.memory_space<vmem>>) attributes {dimension_semantics = [], scalar_prefetch = 0 : i64, scratch_operands = 1 : i64, tpu.core_type = #tpu.core_type<tc>} {
    %0 = tpu.iota {dimensions = array<i32: 1>} : vector<2x256xi32>
    %c64_i32 = arith.constant 64 : i32
    %c0_i32 = arith.constant 0 : i32
    %1 = arith.cmpi eq, %c64_i32, %c0_i32 : i32
    %c1_i32 = arith.constant 1 : i32
    %2 = arith.select %1, %c1_i32, %c64_i32 : i32
    %3 = vector.broadcast %2 : i32 to vector<2x256xi32>
    %4 = arith.remsi %0, %3 : vector<2x256xi32>
    %c0_i32_0 = arith.constant 0 : i32
    %5 = vector.broadcast %c0_i32_0 : i32 to vector<2x256xi32>
    %6 = arith.cmpi ne, %4, %5 : vector<2x256xi32>
    %c0_i32_1 = arith.constant 0 : i32
    %7 = vector.broadcast %c0_i32_1 : i32 to vector<2x256xi32>
    %8 = arith.cmpi slt, %4, %7 : vector<2x256xi32>
    %c0_i32_2 = arith.constant 0 : i32
    %9 = arith.cmpi slt, %2, %c0_i32_2 : i32
    %10 = vector.broadcast %9 : i1 to vector<2x256xi1>
    %11 = vector.broadcast %10 : vector<2x256xi1> to vector<2x256xi1>
    %12 = arith.xori %8, %11 : vector<2x256xi1>
    %13 = arith.andi %12, %6 : vector<2x256xi1>
    %14 = vector.broadcast %2 : i32 to vector<2x256xi32>
    %15 = arith.addi %4, %14 : vector<2x256xi32>
    %16 = arith.select %13, %15, %4 : vector<2x256xi1>, vector<2x256xi32>
    %c32_i32 = arith.constant 32 : i32
    %17 = vector.broadcast %c32_i32 : i32 to vector<2x256xi32>
    %18 = arith.cmpi slt, %16, %17 : vector<2x256xi32>
    %19 = tpu.iota {dimensions = array<i32: 1>} : vector<2x64xi32>
    %c32_i32_3 = arith.constant 32 : i32
    %20 = vector.broadcast %c32_i32_3 : i32 to vector<2x64xi32>
    %21 = arith.cmpi slt, %19, %20 : vector<2x64xi32>
    %c0 = arith.constant 0 : index
    %c0_4 = arith.constant 0 : index
    %22 = vector.load %arg0[%c0, %c0_4] : memref<16x64xf32, #tpu.memory_space<vmem>>, vector<16x64xf32>
    %23 = arith.truncf %22 : vector<16x64xf32> to vector<16x64xbf16>
    %c0_5 = arith.constant 0 : index
    %c0_6 = arith.constant 0 : index
    %24 = vector.load %arg1[%c0_5, %c0_6] : memref<64x256xbf16, #tpu.memory_space<vmem>>, vector<64x256xbf16>
    %cst = arith.constant dense<0.000000e+00> : vector<16x256xf32>
    %25 = tpu.matmul %23, %24, %cst {dimension_numbers = #tpu.dot_dimension_numbers<[1], [0], [0], [1], [0, 0, 1, 1], [], []>} : vector<16x64xbf16>, vector<64x256xbf16>, vector<16x256xf32> -> vector<16x256xf32>
    %c0_7 = arith.constant 0 : index
    %c0_8 = arith.constant 0 : index
    %26 = vector.load %arg3[%c0_7, %c0_8] : memref<1x256xf32, #tpu.memory_space<vmem>>, vector<1x256xf32>
    %27 = vector.broadcast %26 : vector<1x256xf32> to vector<16x256xf32>
    %28 = arith.addf %25, %27 : vector<16x256xf32>
    %c0_9 = arith.constant 0 : index
    %c0_10 = arith.constant 0 : index
    %29 = vector.load %arg2[%c0_9, %c0_10] : memref<64x256xbf16, #tpu.memory_space<vmem>>, vector<64x256xbf16>
    %cst_11 = arith.constant 0.000000e+00 : f32
    %30 = vector.broadcast %cst_11 : f32 to vector<2x64xf32>
    %cst_12 = arith.constant 0.000000e+00 : f32
    %31 = vector.broadcast %cst_12 : f32 to vector<2x64xf32>
    %32 = vector.extract_strided_slice %28 {offsets = [0, 0], sizes = [2, 256], strides = [1, 1]} : vector<16x256xf32> to vector<2x256xf32>
    %33 = vector.extract_strided_slice %28 {offsets = [14, 0], sizes = [2, 256], strides = [1, 1]} : vector<16x256xf32> to vector<2x256xf32>
    %34 = arith.select %18, %32, %33 : vector<2x256xi1>, vector<2x256xf32>
    %35 = arith.truncf %30 : vector<2x64xf32> to vector<2x64xbf16>
    %cst_13 = arith.constant dense<0.000000e+00> : vector<2x256xf32>
    %36 = tpu.matmul %35, %29, %cst_13 {dimension_numbers = #tpu.dot_dimension_numbers<[1], [0], [0], [1], [0, 0, 1, 1], [], []>} : vector<2x64xbf16>, vector<64x256xbf16>, vector<2x256xf32> -> vector<2x256xf32>
    %37 = arith.addf %34, %36 : vector<2x256xf32>
    %38 = arith.negf %37 : vector<2x256xf32>
    %39 = math.exp %38 : vector<2x256xf32>
    %cst_14 = arith.constant 1.000000e+00 : f32
    %40 = vector.broadcast %cst_14 : f32 to vector<2x256xf32>
    %41 = arith.addf %40, %39 : vector<2x256xf32>
    %42 = arith.divf %40, %41 : vector<2x256xf32>
    %43 = vector.extract_strided_slice %42 {offsets = [0, 0], sizes = [2, 64], strides = [1, 1]} : vector<2x256xf32> to vector<2x64xf32>
    %44 = vector.extract_strided_slice %42 {offsets = [0, 64], sizes = [2, 64], strides = [1, 1]} : vector<2x256xf32> to vector<2x64xf32>
    %45 = vector.extract_strided_slice %37 {offsets = [0, 128], sizes = [2, 64], strides = [1, 1]} : vector<2x256xf32> to vector<2x64xf32>
    %46 = math.tanh %45 : vector<2x64xf32>
    %47 = vector.extract_strided_slice %42 {offsets = [0, 192], sizes = [2, 64], strides = [1, 1]} : vector<2x256xf32> to vector<2x64xf32>
    %48 = arith.mulf %44, %31 : vector<2x64xf32>
    %49 = arith.mulf %43, %46 : vector<2x64xf32>
    %50 = arith.addf %48, %49 : vector<2x64xf32>
    %51 = math.tanh %50 : vector<2x64xf32>
    %52 = arith.mulf %47, %51 : vector<2x64xf32>
    %53 = vector.extract_strided_slice %28 {offsets = [2, 0], sizes = [2, 256], strides = [1, 1]} : vector<16x256xf32> to vector<2x256xf32>
    %54 = vector.extract_strided_slice %28 {offsets = [12, 0], sizes = [2, 256], strides = [1, 1]} : vector<16x256xf32> to vector<2x256xf32>
    %55 = arith.select %18, %53, %54 : vector<2x256xi1>, vector<2x256xf32>
    %56 = arith.truncf %52 : vector<2x64xf32> to vector<2x64xbf16>
    %cst_15 = arith.constant dense<0.000000e+00> : vector<2x256xf32>
    %57 = tpu.matmul %56, %29, %cst_15 {dimension_numbers = #tpu.dot_dimension_numbers<[1], [0], [0], [1], [0, 0, 1, 1], [], []>} : vector<2x64xbf16>, vector<64x256xbf16>, vector<2x256xf32> -> vector<2x256xf32>
    %58 = arith.addf %55, %57 : vector<2x256xf32>
    %59 = arith.negf %58 : vector<2x256xf32>
    %60 = math.exp %59 : vector<2x256xf32>
    %cst_16 = arith.constant 1.000000e+00 : f32
    %61 = vector.broadcast %cst_16 : f32 to vector<2x256xf32>
    %62 = arith.addf %61, %60 : vector<2x256xf32>
    %63 = arith.divf %61, %62 : vector<2x256xf32>
    %64 = vector.extract_strided_slice %63 {offsets = [0, 0], sizes = [2, 64], strides = [1, 1]} : vector<2x256xf32> to vector<2x64xf32>
    %65 = vector.extract_strided_slice %63 {offsets = [0, 64], sizes = [2, 64], strides = [1, 1]} : vector<2x256xf32> to vector<2x64xf32>
    %66 = vector.extract_strided_slice %58 {offsets = [0, 128], sizes = [2, 64], strides = [1, 1]} : vector<2x256xf32> to vector<2x64xf32>
    %67 = math.tanh %66 : vector<2x64xf32>
    %68 = vector.extract_strided_slice %63 {offsets = [0, 192], sizes = [2, 64], strides = [1, 1]} : vector<2x256xf32> to vector<2x64xf32>
    %69 = arith.mulf %65, %50 : vector<2x64xf32>
    %70 = arith.mulf %64, %67 : vector<2x64xf32>
    %71 = arith.addf %69, %70 : vector<2x64xf32>
    %72 = math.tanh %71 : vector<2x64xf32>
    %73 = arith.mulf %68, %72 : vector<2x64xf32>
    %74 = vector.extract_strided_slice %28 {offsets = [4, 0], sizes = [2, 256], strides = [1, 1]} : vector<16x256xf32> to vector<2x256xf32>
    %75 = vector.extract_strided_slice %28 {offsets = [10, 0], sizes = [2, 256], strides = [1, 1]} : vector<16x256xf32> to vector<2x256xf32>
    %76 = arith.select %18, %74, %75 : vector<2x256xi1>, vector<2x256xf32>
    %77 = arith.truncf %73 : vector<2x64xf32> to vector<2x64xbf16>
    %cst_17 = arith.constant dense<0.000000e+00> : vector<2x256xf32>
    %78 = tpu.matmul %77, %29, %cst_17 {dimension_numbers = #tpu.dot_dimension_numbers<[1], [0], [0], [1], [0, 0, 1, 1], [], []>} : vector<2x64xbf16>, vector<64x256xbf16>, vector<2x256xf32> -> vector<2x256xf32>
    %79 = arith.addf %76, %78 : vector<2x256xf32>
    %80 = arith.negf %79 : vector<2x256xf32>
    %81 = math.exp %80 : vector<2x256xf32>
    %cst_18 = arith.constant 1.000000e+00 : f32
    %82 = vector.broadcast %cst_18 : f32 to vector<2x256xf32>
    %83 = arith.addf %82, %81 : vector<2x256xf32>
    %84 = arith.divf %82, %83 : vector<2x256xf32>
    %85 = vector.extract_strided_slice %84 {offsets = [0, 0], sizes = [2, 64], strides = [1, 1]} : vector<2x256xf32> to vector<2x64xf32>
    %86 = vector.extract_strided_slice %84 {offsets = [0, 64], sizes = [2, 64], strides = [1, 1]} : vector<2x256xf32> to vector<2x64xf32>
    %87 = vector.extract_strided_slice %79 {offsets = [0, 128], sizes = [2, 64], strides = [1, 1]} : vector<2x256xf32> to vector<2x64xf32>
    %88 = math.tanh %87 : vector<2x64xf32>
    %89 = vector.extract_strided_slice %84 {offsets = [0, 192], sizes = [2, 64], strides = [1, 1]} : vector<2x256xf32> to vector<2x64xf32>
    %90 = arith.mulf %86, %71 : vector<2x64xf32>
    %91 = arith.mulf %85, %88 : vector<2x64xf32>
    %92 = arith.addf %90, %91 : vector<2x64xf32>
    %93 = math.tanh %92 : vector<2x64xf32>
    %94 = arith.mulf %89, %93 : vector<2x64xf32>
    %95 = vector.extract_strided_slice %28 {offsets = [6, 0], sizes = [2, 256], strides = [1, 1]} : vector<16x256xf32> to vector<2x256xf32>
    %96 = vector.extract_strided_slice %28 {offsets = [8, 0], sizes = [2, 256], strides = [1, 1]} : vector<16x256xf32> to vector<2x256xf32>
    %97 = arith.select %18, %95, %96 : vector<2x256xi1>, vector<2x256xf32>
    %98 = arith.truncf %94 : vector<2x64xf32> to vector<2x64xbf16>
    %cst_19 = arith.constant dense<0.000000e+00> : vector<2x256xf32>
    %99 = tpu.matmul %98, %29, %cst_19 {dimension_numbers = #tpu.dot_dimension_numbers<[1], [0], [0], [1], [0, 0, 1, 1], [], []>} : vector<2x64xbf16>, vector<64x256xbf16>, vector<2x256xf32> -> vector<2x256xf32>
    %100 = arith.addf %97, %99 : vector<2x256xf32>
    %101 = arith.negf %100 : vector<2x256xf32>
    %102 = math.exp %101 : vector<2x256xf32>
    %cst_20 = arith.constant 1.000000e+00 : f32
    %103 = vector.broadcast %cst_20 : f32 to vector<2x256xf32>
    %104 = arith.addf %103, %102 : vector<2x256xf32>
    %105 = arith.divf %103, %104 : vector<2x256xf32>
    %106 = vector.extract_strided_slice %105 {offsets = [0, 0], sizes = [2, 64], strides = [1, 1]} : vector<2x256xf32> to vector<2x64xf32>
    %107 = vector.extract_strided_slice %105 {offsets = [0, 64], sizes = [2, 64], strides = [1, 1]} : vector<2x256xf32> to vector<2x64xf32>
    %108 = vector.extract_strided_slice %100 {offsets = [0, 128], sizes = [2, 64], strides = [1, 1]} : vector<2x256xf32> to vector<2x64xf32>
    %109 = math.tanh %108 : vector<2x64xf32>
    %110 = vector.extract_strided_slice %105 {offsets = [0, 192], sizes = [2, 64], strides = [1, 1]} : vector<2x256xf32> to vector<2x64xf32>
    %111 = arith.mulf %107, %92 : vector<2x64xf32>
    %112 = arith.mulf %106, %109 : vector<2x64xf32>
    %113 = arith.addf %111, %112 : vector<2x64xf32>
    %114 = math.tanh %113 : vector<2x64xf32>
    %115 = arith.mulf %110, %114 : vector<2x64xf32>
    %116 = vector.extract_strided_slice %28 {offsets = [8, 0], sizes = [2, 256], strides = [1, 1]} : vector<16x256xf32> to vector<2x256xf32>
    %117 = vector.extract_strided_slice %28 {offsets = [6, 0], sizes = [2, 256], strides = [1, 1]} : vector<16x256xf32> to vector<2x256xf32>
    %118 = arith.select %18, %116, %117 : vector<2x256xi1>, vector<2x256xf32>
    %119 = arith.truncf %115 : vector<2x64xf32> to vector<2x64xbf16>
    %cst_21 = arith.constant dense<0.000000e+00> : vector<2x256xf32>
    %120 = tpu.matmul %119, %29, %cst_21 {dimension_numbers = #tpu.dot_dimension_numbers<[1], [0], [0], [1], [0, 0, 1, 1], [], []>} : vector<2x64xbf16>, vector<64x256xbf16>, vector<2x256xf32> -> vector<2x256xf32>
    %121 = arith.addf %118, %120 : vector<2x256xf32>
    %122 = arith.negf %121 : vector<2x256xf32>
    %123 = math.exp %122 : vector<2x256xf32>
    %cst_22 = arith.constant 1.000000e+00 : f32
    %124 = vector.broadcast %cst_22 : f32 to vector<2x256xf32>
    %125 = arith.addf %124, %123 : vector<2x256xf32>
    %126 = arith.divf %124, %125 : vector<2x256xf32>
    %127 = vector.extract_strided_slice %126 {offsets = [0, 0], sizes = [2, 64], strides = [1, 1]} : vector<2x256xf32> to vector<2x64xf32>
    %128 = vector.extract_strided_slice %126 {offsets = [0, 64], sizes = [2, 64], strides = [1, 1]} : vector<2x256xf32> to vector<2x64xf32>
    %129 = vector.extract_strided_slice %121 {offsets = [0, 128], sizes = [2, 64], strides = [1, 1]} : vector<2x256xf32> to vector<2x64xf32>
    %130 = math.tanh %129 : vector<2x64xf32>
    %131 = vector.extract_strided_slice %126 {offsets = [0, 192], sizes = [2, 64], strides = [1, 1]} : vector<2x256xf32> to vector<2x64xf32>
    %132 = arith.mulf %128, %113 : vector<2x64xf32>
    %133 = arith.mulf %127, %130 : vector<2x64xf32>
    %134 = arith.addf %132, %133 : vector<2x64xf32>
    %135 = math.tanh %134 : vector<2x64xf32>
    %136 = arith.mulf %131, %135 : vector<2x64xf32>
    %137 = vector.extract_strided_slice %28 {offsets = [10, 0], sizes = [2, 256], strides = [1, 1]} : vector<16x256xf32> to vector<2x256xf32>
    %138 = vector.extract_strided_slice %28 {offsets = [4, 0], sizes = [2, 256], strides = [1, 1]} : vector<16x256xf32> to vector<2x256xf32>
    %139 = arith.select %18, %137, %138 : vector<2x256xi1>, vector<2x256xf32>
    %140 = arith.truncf %136 : vector<2x64xf32> to vector<2x64xbf16>
    %cst_23 = arith.constant dense<0.000000e+00> : vector<2x256xf32>
    %141 = tpu.matmul %140, %29, %cst_23 {dimension_numbers = #tpu.dot_dimension_numbers<[1], [0], [0], [1], [0, 0, 1, 1], [], []>} : vector<2x64xbf16>, vector<64x256xbf16>, vector<2x256xf32> -> vector<2x256xf32>
    %142 = arith.addf %139, %141 : vector<2x256xf32>
    %143 = arith.negf %142 : vector<2x256xf32>
    %144 = math.exp %143 : vector<2x256xf32>
    %cst_24 = arith.constant 1.000000e+00 : f32
    %145 = vector.broadcast %cst_24 : f32 to vector<2x256xf32>
    %146 = arith.addf %145, %144 : vector<2x256xf32>
    %147 = arith.divf %145, %146 : vector<2x256xf32>
    %148 = vector.extract_strided_slice %147 {offsets = [0, 0], sizes = [2, 64], strides = [1, 1]} : vector<2x256xf32> to vector<2x64xf32>
    %149 = vector.extract_strided_slice %147 {offsets = [0, 64], sizes = [2, 64], strides = [1, 1]} : vector<2x256xf32> to vector<2x64xf32>
    %150 = vector.extract_strided_slice %142 {offsets = [0, 128], sizes = [2, 64], strides = [1, 1]} : vector<2x256xf32> to vector<2x64xf32>
    %151 = math.tanh %150 : vector<2x64xf32>
    %152 = vector.extract_strided_slice %147 {offsets = [0, 192], sizes = [2, 64], strides = [1, 1]} : vector<2x256xf32> to vector<2x64xf32>
    %153 = arith.mulf %149, %134 : vector<2x64xf32>
    %154 = arith.mulf %148, %151 : vector<2x64xf32>
    %155 = arith.addf %153, %154 : vector<2x64xf32>
    %156 = math.tanh %155 : vector<2x64xf32>
    %157 = arith.mulf %152, %156 : vector<2x64xf32>
    %158 = vector.extract_strided_slice %28 {offsets = [12, 0], sizes = [2, 256], strides = [1, 1]} : vector<16x256xf32> to vector<2x256xf32>
    %159 = vector.extract_strided_slice %28 {offsets = [2, 0], sizes = [2, 256], strides = [1, 1]} : vector<16x256xf32> to vector<2x256xf32>
    %160 = arith.select %18, %158, %159 : vector<2x256xi1>, vector<2x256xf32>
    %161 = arith.truncf %157 : vector<2x64xf32> to vector<2x64xbf16>
    %cst_25 = arith.constant dense<0.000000e+00> : vector<2x256xf32>
    %162 = tpu.matmul %161, %29, %cst_25 {dimension_numbers = #tpu.dot_dimension_numbers<[1], [0], [0], [1], [0, 0, 1, 1], [], []>} : vector<2x64xbf16>, vector<64x256xbf16>, vector<2x256xf32> -> vector<2x256xf32>
    %163 = arith.addf %160, %162 : vector<2x256xf32>
    %164 = arith.negf %163 : vector<2x256xf32>
    %165 = math.exp %164 : vector<2x256xf32>
    %cst_26 = arith.constant 1.000000e+00 : f32
    %166 = vector.broadcast %cst_26 : f32 to vector<2x256xf32>
    %167 = arith.addf %166, %165 : vector<2x256xf32>
    %168 = arith.divf %166, %167 : vector<2x256xf32>
    %169 = vector.extract_strided_slice %168 {offsets = [0, 0], sizes = [2, 64], strides = [1, 1]} : vector<2x256xf32> to vector<2x64xf32>
    %170 = vector.extract_strided_slice %168 {offsets = [0, 64], sizes = [2, 64], strides = [1, 1]} : vector<2x256xf32> to vector<2x64xf32>
    %171 = vector.extract_strided_slice %163 {offsets = [0, 128], sizes = [2, 64], strides = [1, 1]} : vector<2x256xf32> to vector<2x64xf32>
    %172 = math.tanh %171 : vector<2x64xf32>
    %173 = vector.extract_strided_slice %168 {offsets = [0, 192], sizes = [2, 64], strides = [1, 1]} : vector<2x256xf32> to vector<2x64xf32>
    %174 = arith.mulf %170, %155 : vector<2x64xf32>
    %175 = arith.mulf %169, %172 : vector<2x64xf32>
    %176 = arith.addf %174, %175 : vector<2x64xf32>
    %177 = math.tanh %176 : vector<2x64xf32>
    %178 = arith.mulf %173, %177 : vector<2x64xf32>
    %179 = vector.extract_strided_slice %28 {offsets = [14, 0], sizes = [2, 256], strides = [1, 1]} : vector<16x256xf32> to vector<2x256xf32>
    %180 = vector.extract_strided_slice %28 {offsets = [0, 0], sizes = [2, 256], strides = [1, 1]} : vector<16x256xf32> to vector<2x256xf32>
    %181 = arith.select %18, %179, %180 : vector<2x256xi1>, vector<2x256xf32>
    %182 = arith.truncf %178 : vector<2x64xf32> to vector<2x64xbf16>
    %cst_27 = arith.constant dense<0.000000e+00> : vector<2x256xf32>
    %183 = tpu.matmul %182, %29, %cst_27 {dimension_numbers = #tpu.dot_dimension_numbers<[1], [0], [0], [1], [0, 0, 1, 1], [], []>} : vector<2x64xbf16>, vector<64x256xbf16>, vector<2x256xf32> -> vector<2x256xf32>
    %184 = arith.addf %181, %183 : vector<2x256xf32>
    %185 = arith.negf %184 : vector<2x256xf32>
    %186 = math.exp %185 : vector<2x256xf32>
    %cst_28 = arith.constant 1.000000e+00 : f32
    %187 = vector.broadcast %cst_28 : f32 to vector<2x256xf32>
    %188 = arith.addf %187, %186 : vector<2x256xf32>
    %189 = arith.divf %187, %188 : vector<2x256xf32>
    %190 = vector.extract_strided_slice %189 {offsets = [0, 0], sizes = [2, 64], strides = [1, 1]} : vector<2x256xf32> to vector<2x64xf32>
    %191 = vector.extract_strided_slice %189 {offsets = [0, 64], sizes = [2, 64], strides = [1, 1]} : vector<2x256xf32> to vector<2x64xf32>
    %192 = vector.extract_strided_slice %184 {offsets = [0, 128], sizes = [2, 64], strides = [1, 1]} : vector<2x256xf32> to vector<2x64xf32>
    %193 = math.tanh %192 : vector<2x64xf32>
    %194 = vector.extract_strided_slice %189 {offsets = [0, 192], sizes = [2, 64], strides = [1, 1]} : vector<2x256xf32> to vector<2x64xf32>
    %195 = arith.mulf %191, %176 : vector<2x64xf32>
    %196 = arith.mulf %190, %193 : vector<2x64xf32>
    %197 = arith.addf %195, %196 : vector<2x64xf32>
    %198 = math.tanh %197 : vector<2x64xf32>
    %199 = arith.mulf %194, %198 : vector<2x64xf32>
    %200 = arith.select %21, %52, %199 : vector<2x64xi1>, vector<2x64xf32>
    %c0_29 = arith.constant 0 : index
    %c0_30 = arith.constant 0 : index
    %201 = vector.load %arg10[%c0_29, %c0_30] : memref<16x64xf32, #tpu.memory_space<vmem>>, vector<2x64xf32>
    tpu.vector_store %arg10[%c0_29, %c0_30], %200 {strides = array<i32>} : memref<16x64xf32, #tpu.memory_space<vmem>>, vector<2x64xf32>,
    %202 = arith.select %21, %73, %178 : vector<2x64xi1>, vector<2x64xf32>
    %c2 = arith.constant 2 : index
    %c0_31 = arith.constant 0 : index
    %203 = vector.load %arg10[%c2, %c0_31] : memref<16x64xf32, #tpu.memory_space<vmem>>, vector<2x64xf32>
    tpu.vector_store %arg10[%c2, %c0_31], %202 {strides = array<i32>} : memref<16x64xf32, #tpu.memory_space<vmem>>, vector<2x64xf32>,
    %204 = arith.select %21, %94, %157 : vector<2x64xi1>, vector<2x64xf32>
    %c4 = arith.constant 4 : index
    %c0_32 = arith.constant 0 : index
    %205 = vector.load %arg10[%c4, %c0_32] : memref<16x64xf32, #tpu.memory_space<vmem>>, vector<2x64xf32>
    tpu.vector_store %arg10[%c4, %c0_32], %204 {strides = array<i32>} : memref<16x64xf32, #tpu.memory_space<vmem>>, vector<2x64xf32>,
    %206 = arith.select %21, %115, %136 : vector<2x64xi1>, vector<2x64xf32>
    %c6 = arith.constant 6 : index
    %c0_33 = arith.constant 0 : index
    %207 = vector.load %arg10[%c6, %c0_33] : memref<16x64xf32, #tpu.memory_space<vmem>>, vector<2x64xf32>
    tpu.vector_store %arg10[%c6, %c0_33], %206 {strides = array<i32>} : memref<16x64xf32, #tpu.memory_space<vmem>>, vector<2x64xf32>,
    %208 = arith.select %21, %136, %115 : vector<2x64xi1>, vector<2x64xf32>
    %c8 = arith.constant 8 : index
    %c0_34 = arith.constant 0 : index
    %209 = vector.load %arg10[%c8, %c0_34] : memref<16x64xf32, #tpu.memory_space<vmem>>, vector<2x64xf32>
    tpu.vector_store %arg10[%c8, %c0_34], %208 {strides = array<i32>} : memref<16x64xf32, #tpu.memory_space<vmem>>, vector<2x64xf32>,
    %210 = arith.select %21, %157, %94 : vector<2x64xi1>, vector<2x64xf32>
    %c10 = arith.constant 10 : index
    %c0_35 = arith.constant 0 : index
    %211 = vector.load %arg10[%c10, %c0_35] : memref<16x64xf32, #tpu.memory_space<vmem>>, vector<2x64xf32>
    tpu.vector_store %arg10[%c10, %c0_35], %210 {strides = array<i32>} : memref<16x64xf32, #tpu.memory_space<vmem>>, vector<2x64xf32>,
    %212 = arith.select %21, %178, %73 : vector<2x64xi1>, vector<2x64xf32>
    %c12 = arith.constant 12 : index
    %c0_36 = arith.constant 0 : index
    %213 = vector.load %arg10[%c12, %c0_36] : memref<16x64xf32, #tpu.memory_space<vmem>>, vector<2x64xf32>
    tpu.vector_store %arg10[%c12, %c0_36], %212 {strides = array<i32>} : memref<16x64xf32, #tpu.memory_space<vmem>>, vector<2x64xf32>,
    %214 = arith.select %21, %199, %52 : vector<2x64xi1>, vector<2x64xf32>
    %c14 = arith.constant 14 : index
    %c0_37 = arith.constant 0 : index
    %215 = vector.load %arg10[%c14, %c0_37] : memref<16x64xf32, #tpu.memory_space<vmem>>, vector<2x64xf32>
    tpu.vector_store %arg10[%c14, %c0_37], %214 {strides = array<i32>} : memref<16x64xf32, #tpu.memory_space<vmem>>, vector<2x64xf32>,
    %c0_38 = arith.constant 0 : index
    %c0_39 = arith.constant 0 : index
    %216 = vector.load %arg10[%c0_38, %c0_39] : memref<16x64xf32, #tpu.memory_space<vmem>>, vector<16x64xf32>
    %217 = arith.truncf %216 : vector<16x64xf32> to vector<16x64xbf16>
    %c0_40 = arith.constant 0 : index
    %c0_41 = arith.constant 0 : index
    %218 = vector.load %arg4[%c0_40, %c0_41] : memref<64x256xbf16, #tpu.memory_space<vmem>>, vector<64x256xbf16>
    %cst_42 = arith.constant dense<0.000000e+00> : vector<16x256xf32>
    %219 = tpu.matmul %217, %218, %cst_42 {dimension_numbers = #tpu.dot_dimension_numbers<[1], [0], [0], [1], [0, 0, 1, 1], [], []>} : vector<16x64xbf16>, vector<64x256xbf16>, vector<16x256xf32> -> vector<16x256xf32>
    %c0_43 = arith.constant 0 : index
    %c0_44 = arith.constant 0 : index
    %220 = vector.load %arg6[%c0_43, %c0_44] : memref<1x256xf32, #tpu.memory_space<vmem>>, vector<1x256xf32>
    %221 = vector.broadcast %220 : vector<1x256xf32> to vector<16x256xf32>
    %222 = arith.addf %219, %221 : vector<16x256xf32>
    %c0_45 = arith.constant 0 : index
    %c0_46 = arith.constant 0 : index
    %223 = vector.load %arg5[%c0_45, %c0_46] : memref<64x256xbf16, #tpu.memory_space<vmem>>, vector<64x256xbf16>
    %cst_47 = arith.constant 0.000000e+00 : f32
    %224 = vector.broadcast %cst_47 : f32 to vector<2x64xf32>
    %cst_48 = arith.constant 0.000000e+00 : f32
    %225 = vector.broadcast %cst_48 : f32 to vector<2x64xf32>
    %226 = vector.extract_strided_slice %222 {offsets = [0, 0], sizes = [2, 256], strides = [1, 1]} : vector<16x256xf32> to vector<2x256xf32>
    %227 = vector.extract_strided_slice %222 {offsets = [14, 0], sizes = [2, 256], strides = [1, 1]} : vector<16x256xf32> to vector<2x256xf32>
    %228 = arith.select %18, %226, %227 : vector<2x256xi1>, vector<2x256xf32>
    %229 = arith.truncf %224 : vector<2x64xf32> to vector<2x64xbf16>
    %cst_49 = arith.constant dense<0.000000e+00> : vector<2x256xf32>
    %230 = tpu.matmul %229, %223, %cst_49 {dimension_numbers = #tpu.dot_dimension_numbers<[1], [0], [0], [1], [0, 0, 1, 1], [], []>} : vector<2x64xbf16>, vector<64x256xbf16>, vector<2x256xf32> -> vector<2x256xf32>
    %231 = arith.addf %228, %230 : vector<2x256xf32>
    %232 = arith.negf %231 : vector<2x256xf32>
    %233 = math.exp %232 : vector<2x256xf32>
    %cst_50 = arith.constant 1.000000e+00 : f32
    %234 = vector.broadcast %cst_50 : f32 to vector<2x256xf32>
    %235 = arith.addf %234, %233 : vector<2x256xf32>
    %236 = arith.divf %234, %235 : vector<2x256xf32>
    %237 = vector.extract_strided_slice %236 {offsets = [0, 0], sizes = [2, 64], strides = [1, 1]} : vector<2x256xf32> to vector<2x64xf32>
    %238 = vector.extract_strided_slice %236 {offsets = [0, 64], sizes = [2, 64], strides = [1, 1]} : vector<2x256xf32> to vector<2x64xf32>
    %239 = vector.extract_strided_slice %231 {offsets = [0, 128], sizes = [2, 64], strides = [1, 1]} : vector<2x256xf32> to vector<2x64xf32>
    %240 = math.tanh %239 : vector<2x64xf32>
    %241 = vector.extract_strided_slice %236 {offsets = [0, 192], sizes = [2, 64], strides = [1, 1]} : vector<2x256xf32> to vector<2x64xf32>
    %242 = arith.mulf %238, %225 : vector<2x64xf32>
    %243 = arith.mulf %237, %240 : vector<2x64xf32>
    %244 = arith.addf %242, %243 : vector<2x64xf32>
    %245 = math.tanh %244 : vector<2x64xf32>
    %246 = arith.mulf %241, %245 : vector<2x64xf32>
    %247 = vector.extract_strided_slice %222 {offsets = [2, 0], sizes = [2, 256], strides = [1, 1]} : vector<16x256xf32> to vector<2x256xf32>
    %248 = vector.extract_strided_slice %222 {offsets = [12, 0], sizes = [2, 256], strides = [1, 1]} : vector<16x256xf32> to vector<2x256xf32>
    %249 = arith.select %18, %247, %248 : vector<2x256xi1>, vector<2x256xf32>
    %250 = arith.truncf %246 : vector<2x64xf32> to vector<2x64xbf16>
    %cst_51 = arith.constant dense<0.000000e+00> : vector<2x256xf32>
    %251 = tpu.matmul %250, %223, %cst_51 {dimension_numbers = #tpu.dot_dimension_numbers<[1], [0], [0], [1], [0, 0, 1, 1], [], []>} : vector<2x64xbf16>, vector<64x256xbf16>, vector<2x256xf32> -> vector<2x256xf32>
    %252 = arith.addf %249, %251 : vector<2x256xf32>
    %253 = arith.negf %252 : vector<2x256xf32>
    %254 = math.exp %253 : vector<2x256xf32>
    %cst_52 = arith.constant 1.000000e+00 : f32
    %255 = vector.broadcast %cst_52 : f32 to vector<2x256xf32>
    %256 = arith.addf %255, %254 : vector<2x256xf32>
    %257 = arith.divf %255, %256 : vector<2x256xf32>
    %258 = vector.extract_strided_slice %257 {offsets = [0, 0], sizes = [2, 64], strides = [1, 1]} : vector<2x256xf32> to vector<2x64xf32>
    %259 = vector.extract_strided_slice %257 {offsets = [0, 64], sizes = [2, 64], strides = [1, 1]} : vector<2x256xf32> to vector<2x64xf32>
    %260 = vector.extract_strided_slice %252 {offsets = [0, 128], sizes = [2, 64], strides = [1, 1]} : vector<2x256xf32> to vector<2x64xf32>
    %261 = math.tanh %260 : vector<2x64xf32>
    %262 = vector.extract_strided_slice %257 {offsets = [0, 192], sizes = [2, 64], strides = [1, 1]} : vector<2x256xf32> to vector<2x64xf32>
    %263 = arith.mulf %259, %244 : vector<2x64xf32>
    %264 = arith.mulf %258, %261 : vector<2x64xf32>
    %265 = arith.addf %263, %264 : vector<2x64xf32>
    %266 = math.tanh %265 : vector<2x64xf32>
    %267 = arith.mulf %262, %266 : vector<2x64xf32>
    %268 = vector.extract_strided_slice %222 {offsets = [4, 0], sizes = [2, 256], strides = [1, 1]} : vector<16x256xf32> to vector<2x256xf32>
    %269 = vector.extract_strided_slice %222 {offsets = [10, 0], sizes = [2, 256], strides = [1, 1]} : vector<16x256xf32> to vector<2x256xf32>
    %270 = arith.select %18, %268, %269 : vector<2x256xi1>, vector<2x256xf32>
    %271 = arith.truncf %267 : vector<2x64xf32> to vector<2x64xbf16>
    %cst_53 = arith.constant dense<0.000000e+00> : vector<2x256xf32>
    %272 = tpu.matmul %271, %223, %cst_53 {dimension_numbers = #tpu.dot_dimension_numbers<[1], [0], [0], [1], [0, 0, 1, 1], [], []>} : vector<2x64xbf16>, vector<64x256xbf16>, vector<2x256xf32> -> vector<2x256xf32>
    %273 = arith.addf %270, %272 : vector<2x256xf32>
    %274 = arith.negf %273 : vector<2x256xf32>
    %275 = math.exp %274 : vector<2x256xf32>
    %cst_54 = arith.constant 1.000000e+00 : f32
    %276 = vector.broadcast %cst_54 : f32 to vector<2x256xf32>
    %277 = arith.addf %276, %275 : vector<2x256xf32>
    %278 = arith.divf %276, %277 : vector<2x256xf32>
    %279 = vector.extract_strided_slice %278 {offsets = [0, 0], sizes = [2, 64], strides = [1, 1]} : vector<2x256xf32> to vector<2x64xf32>
    %280 = vector.extract_strided_slice %278 {offsets = [0, 64], sizes = [2, 64], strides = [1, 1]} : vector<2x256xf32> to vector<2x64xf32>
    %281 = vector.extract_strided_slice %273 {offsets = [0, 128], sizes = [2, 64], strides = [1, 1]} : vector<2x256xf32> to vector<2x64xf32>
    %282 = math.tanh %281 : vector<2x64xf32>
    %283 = vector.extract_strided_slice %278 {offsets = [0, 192], sizes = [2, 64], strides = [1, 1]} : vector<2x256xf32> to vector<2x64xf32>
    %284 = arith.mulf %280, %265 : vector<2x64xf32>
    %285 = arith.mulf %279, %282 : vector<2x64xf32>
    %286 = arith.addf %284, %285 : vector<2x64xf32>
    %287 = math.tanh %286 : vector<2x64xf32>
    %288 = arith.mulf %283, %287 : vector<2x64xf32>
    %289 = vector.extract_strided_slice %222 {offsets = [6, 0], sizes = [2, 256], strides = [1, 1]} : vector<16x256xf32> to vector<2x256xf32>
    %290 = vector.extract_strided_slice %222 {offsets = [8, 0], sizes = [2, 256], strides = [1, 1]} : vector<16x256xf32> to vector<2x256xf32>
    %291 = arith.select %18, %289, %290 : vector<2x256xi1>, vector<2x256xf32>
    %292 = arith.truncf %288 : vector<2x64xf32> to vector<2x64xbf16>
    %cst_55 = arith.constant dense<0.000000e+00> : vector<2x256xf32>
    %293 = tpu.matmul %292, %223, %cst_55 {dimension_numbers = #tpu.dot_dimension_numbers<[1], [0], [0], [1], [0, 0, 1, 1], [], []>} : vector<2x64xbf16>, vector<64x256xbf16>, vector<2x256xf32> -> vector<2x256xf32>
    %294 = arith.addf %291, %293 : vector<2x256xf32>
    %295 = arith.negf %294 : vector<2x256xf32>
    %296 = math.exp %295 : vector<2x256xf32>
    %cst_56 = arith.constant 1.000000e+00 : f32
    %297 = vector.broadcast %cst_56 : f32 to vector<2x256xf32>
    %298 = arith.addf %297, %296 : vector<2x256xf32>
    %299 = arith.divf %297, %298 : vector<2x256xf32>
    %300 = vector.extract_strided_slice %299 {offsets = [0, 0], sizes = [2, 64], strides = [1, 1]} : vector<2x256xf32> to vector<2x64xf32>
    %301 = vector.extract_strided_slice %299 {offsets = [0, 64], sizes = [2, 64], strides = [1, 1]} : vector<2x256xf32> to vector<2x64xf32>
    %302 = vector.extract_strided_slice %294 {offsets = [0, 128], sizes = [2, 64], strides = [1, 1]} : vector<2x256xf32> to vector<2x64xf32>
    %303 = math.tanh %302 : vector<2x64xf32>
    %304 = vector.extract_strided_slice %299 {offsets = [0, 192], sizes = [2, 64], strides = [1, 1]} : vector<2x256xf32> to vector<2x64xf32>
    %305 = arith.mulf %301, %286 : vector<2x64xf32>
    %306 = arith.mulf %300, %303 : vector<2x64xf32>
    %307 = arith.addf %305, %306 : vector<2x64xf32>
    %308 = math.tanh %307 : vector<2x64xf32>
    %309 = arith.mulf %304, %308 : vector<2x64xf32>
    %310 = vector.extract_strided_slice %222 {offsets = [8, 0], sizes = [2, 256], strides = [1, 1]} : vector<16x256xf32> to vector<2x256xf32>
    %311 = vector.extract_strided_slice %222 {offsets = [6, 0], sizes = [2, 256], strides = [1, 1]} : vector<16x256xf32> to vector<2x256xf32>
    %312 = arith.select %18, %310, %311 : vector<2x256xi1>, vector<2x256xf32>
    %313 = arith.truncf %309 : vector<2x64xf32> to vector<2x64xbf16>
    %cst_57 = arith.constant dense<0.000000e+00> : vector<2x256xf32>
    %314 = tpu.matmul %313, %223, %cst_57 {dimension_numbers = #tpu.dot_dimension_numbers<[1], [0], [0], [1], [0, 0, 1, 1], [], []>} : vector<2x64xbf16>, vector<64x256xbf16>, vector<2x256xf32> -> vector<2x256xf32>
    %315 = arith.addf %312, %314 : vector<2x256xf32>
    %316 = arith.negf %315 : vector<2x256xf32>
    %317 = math.exp %316 : vector<2x256xf32>
    %cst_58 = arith.constant 1.000000e+00 : f32
    %318 = vector.broadcast %cst_58 : f32 to vector<2x256xf32>
    %319 = arith.addf %318, %317 : vector<2x256xf32>
    %320 = arith.divf %318, %319 : vector<2x256xf32>
    %321 = vector.extract_strided_slice %320 {offsets = [0, 0], sizes = [2, 64], strides = [1, 1]} : vector<2x256xf32> to vector<2x64xf32>
    %322 = vector.extract_strided_slice %320 {offsets = [0, 64], sizes = [2, 64], strides = [1, 1]} : vector<2x256xf32> to vector<2x64xf32>
    %323 = vector.extract_strided_slice %315 {offsets = [0, 128], sizes = [2, 64], strides = [1, 1]} : vector<2x256xf32> to vector<2x64xf32>
    %324 = math.tanh %323 : vector<2x64xf32>
    %325 = vector.extract_strided_slice %320 {offsets = [0, 192], sizes = [2, 64], strides = [1, 1]} : vector<2x256xf32> to vector<2x64xf32>
    %326 = arith.mulf %322, %307 : vector<2x64xf32>
    %327 = arith.mulf %321, %324 : vector<2x64xf32>
    %328 = arith.addf %326, %327 : vector<2x64xf32>
    %329 = math.tanh %328 : vector<2x64xf32>
    %330 = arith.mulf %325, %329 : vector<2x64xf32>
    %331 = vector.extract_strided_slice %222 {offsets = [10, 0], sizes = [2, 256], strides = [1, 1]} : vector<16x256xf32> to vector<2x256xf32>
    %332 = vector.extract_strided_slice %222 {offsets = [4, 0], sizes = [2, 256], strides = [1, 1]} : vector<16x256xf32> to vector<2x256xf32>
    %333 = arith.select %18, %331, %332 : vector<2x256xi1>, vector<2x256xf32>
    %334 = arith.truncf %330 : vector<2x64xf32> to vector<2x64xbf16>
    %cst_59 = arith.constant dense<0.000000e+00> : vector<2x256xf32>
    %335 = tpu.matmul %334, %223, %cst_59 {dimension_numbers = #tpu.dot_dimension_numbers<[1], [0], [0], [1], [0, 0, 1, 1], [], []>} : vector<2x64xbf16>, vector<64x256xbf16>, vector<2x256xf32> -> vector<2x256xf32>
    %336 = arith.addf %333, %335 : vector<2x256xf32>
    %337 = arith.negf %336 : vector<2x256xf32>
    %338 = math.exp %337 : vector<2x256xf32>
    %cst_60 = arith.constant 1.000000e+00 : f32
    %339 = vector.broadcast %cst_60 : f32 to vector<2x256xf32>
    %340 = arith.addf %339, %338 : vector<2x256xf32>
    %341 = arith.divf %339, %340 : vector<2x256xf32>
    %342 = vector.extract_strided_slice %341 {offsets = [0, 0], sizes = [2, 64], strides = [1, 1]} : vector<2x256xf32> to vector<2x64xf32>
    %343 = vector.extract_strided_slice %341 {offsets = [0, 64], sizes = [2, 64], strides = [1, 1]} : vector<2x256xf32> to vector<2x64xf32>
    %344 = vector.extract_strided_slice %336 {offsets = [0, 128], sizes = [2, 64], strides = [1, 1]} : vector<2x256xf32> to vector<2x64xf32>
    %345 = math.tanh %344 : vector<2x64xf32>
    %346 = vector.extract_strided_slice %341 {offsets = [0, 192], sizes = [2, 64], strides = [1, 1]} : vector<2x256xf32> to vector<2x64xf32>
    %347 = arith.mulf %343, %328 : vector<2x64xf32>
    %348 = arith.mulf %342, %345 : vector<2x64xf32>
    %349 = arith.addf %347, %348 : vector<2x64xf32>
    %350 = math.tanh %349 : vector<2x64xf32>
    %351 = arith.mulf %346, %350 : vector<2x64xf32>
    %352 = vector.extract_strided_slice %222 {offsets = [12, 0], sizes = [2, 256], strides = [1, 1]} : vector<16x256xf32> to vector<2x256xf32>
    %353 = vector.extract_strided_slice %222 {offsets = [2, 0], sizes = [2, 256], strides = [1, 1]} : vector<16x256xf32> to vector<2x256xf32>
    %354 = arith.select %18, %352, %353 : vector<2x256xi1>, vector<2x256xf32>
    %355 = arith.truncf %351 : vector<2x64xf32> to vector<2x64xbf16>
    %cst_61 = arith.constant dense<0.000000e+00> : vector<2x256xf32>
    %356 = tpu.matmul %355, %223, %cst_61 {dimension_numbers = #tpu.dot_dimension_numbers<[1], [0], [0], [1], [0, 0, 1, 1], [], []>} : vector<2x64xbf16>, vector<64x256xbf16>, vector<2x256xf32> -> vector<2x256xf32>
    %357 = arith.addf %354, %356 : vector<2x256xf32>
    %358 = arith.negf %357 : vector<2x256xf32>
    %359 = math.exp %358 : vector<2x256xf32>
    %cst_62 = arith.constant 1.000000e+00 : f32
    %360 = vector.broadcast %cst_62 : f32 to vector<2x256xf32>
    %361 = arith.addf %360, %359 : vector<2x256xf32>
    %362 = arith.divf %360, %361 : vector<2x256xf32>
    %363 = vector.extract_strided_slice %362 {offsets = [0, 0], sizes = [2, 64], strides = [1, 1]} : vector<2x256xf32> to vector<2x64xf32>
    %364 = vector.extract_strided_slice %362 {offsets = [0, 64], sizes = [2, 64], strides = [1, 1]} : vector<2x256xf32> to vector<2x64xf32>
    %365 = vector.extract_strided_slice %357 {offsets = [0, 128], sizes = [2, 64], strides = [1, 1]} : vector<2x256xf32> to vector<2x64xf32>
    %366 = math.tanh %365 : vector<2x64xf32>
    %367 = vector.extract_strided_slice %362 {offsets = [0, 192], sizes = [2, 64], strides = [1, 1]} : vector<2x256xf32> to vector<2x64xf32>
    %368 = arith.mulf %364, %349 : vector<2x64xf32>
    %369 = arith.mulf %363, %366 : vector<2x64xf32>
    %370 = arith.addf %368, %369 : vector<2x64xf32>
    %371 = math.tanh %370 : vector<2x64xf32>
    %372 = arith.mulf %367, %371 : vector<2x64xf32>
    %373 = vector.extract_strided_slice %222 {offsets = [14, 0], sizes = [2, 256], strides = [1, 1]} : vector<16x256xf32> to vector<2x256xf32>
    %374 = vector.extract_strided_slice %222 {offsets = [0, 0], sizes = [2, 256], strides = [1, 1]} : vector<16x256xf32> to vector<2x256xf32>
    %375 = arith.select %18, %373, %374 : vector<2x256xi1>, vector<2x256xf32>
    %376 = arith.truncf %372 : vector<2x64xf32> to vector<2x64xbf16>
    %cst_63 = arith.constant dense<0.000000e+00> : vector<2x256xf32>
    %377 = tpu.matmul %376, %223, %cst_63 {dimension_numbers = #tpu.dot_dimension_numbers<[1], [0], [0], [1], [0, 0, 1, 1], [], []>} : vector<2x64xbf16>, vector<64x256xbf16>, vector<2x256xf32> -> vector<2x256xf32>
    %378 = arith.addf %375, %377 : vector<2x256xf32>
    %379 = arith.negf %378 : vector<2x256xf32>
    %380 = math.exp %379 : vector<2x256xf32>
    %cst_64 = arith.constant 1.000000e+00 : f32
    %381 = vector.broadcast %cst_64 : f32 to vector<2x256xf32>
    %382 = arith.addf %381, %380 : vector<2x256xf32>
    %383 = arith.divf %381, %382 : vector<2x256xf32>
    %384 = vector.extract_strided_slice %383 {offsets = [0, 0], sizes = [2, 64], strides = [1, 1]} : vector<2x256xf32> to vector<2x64xf32>
    %385 = vector.extract_strided_slice %383 {offsets = [0, 64], sizes = [2, 64], strides = [1, 1]} : vector<2x256xf32> to vector<2x64xf32>
    %386 = vector.extract_strided_slice %378 {offsets = [0, 128], sizes = [2, 64], strides = [1, 1]} : vector<2x256xf32> to vector<2x64xf32>
    %387 = math.tanh %386 : vector<2x64xf32>
    %388 = vector.extract_strided_slice %383 {offsets = [0, 192], sizes = [2, 64], strides = [1, 1]} : vector<2x256xf32> to vector<2x64xf32>
    %389 = arith.mulf %385, %370 : vector<2x64xf32>
    %390 = arith.mulf %384, %387 : vector<2x64xf32>
    %391 = arith.addf %389, %390 : vector<2x64xf32>
    %392 = math.tanh %391 : vector<2x64xf32>
    %393 = arith.mulf %388, %392 : vector<2x64xf32>
    %394 = arith.truncf %393 : vector<2x64xf32> to vector<2x64xbf16>
    %c0_65 = arith.constant 0 : index
    %c0_66 = arith.constant 0 : index
    %395 = vector.load %arg7[%c0_65, %c0_66] : memref<64x1xbf16, #tpu.memory_space<vmem>>, vector<64x1xbf16>
    %cst_67 = arith.constant dense<0.000000e+00> : vector<2x1xf32>
    %396 = tpu.matmul %394, %395, %cst_67 {dimension_numbers = #tpu.dot_dimension_numbers<[1], [0], [0], [1], [0, 0, 1, 1], [], []>} : vector<2x64xbf16>, vector<64x1xbf16>, vector<2x1xf32> -> vector<2x1xf32>
    %c0_68 = arith.constant 0 : index
    %c0_69 = arith.constant 0 : index
    %397 = vector.load %arg8[%c0_68, %c0_69] : memref<1x1xf32, #tpu.memory_space<vmem>>, vector<1x1xf32>
    %398 = vector.broadcast %397 : vector<1x1xf32> to vector<2x1xf32>
    %399 = arith.addf %396, %398 : vector<2x1xf32>
    %c0_70 = arith.constant 0 : index
    %c0_71 = arith.constant 0 : index
    %400 = vector.load %arg9[%c0_70, %c0_71] : memref<2x1xf32, #tpu.memory_space<vmem>>, vector<2x1xf32>
    tpu.vector_store %arg9[%c0_70, %c0_71], %399 {strides = array<i32>} : memref<2x1xf32, #tpu.memory_space<vmem>>, vector<2x1xf32>,
    return
  }
}

</mosaic_0001>

<llo_original>
// kernel: te_bilstm_forward.4
$region0: #{te_bilstm_forward.4}
  #allocation0 [shape = 'u32[]', space=smem, size = 0x4, offset = 0x4, fixed_abs, tag = 'smem constant byte address 0x4 - core index']
  #allocation1 [shape = 'u32[72,128]{1,0:T(1,128)}', space=vmem, size = 0x9000, scoped, tag = 'internal scratch']
  #allocation2 [shape = 'f32[16,64]{1,0:T(8,128)}', space=vmem, size = 0x2000, scoped, tag = 'scratch operand']
  %s0 = inlined_call_operand.vmem [shape: f32[16,64], index: 0, kind: input, shape index: {}]
  %s1 = inlined_call_operand.vmem [shape: bf16[64,192], index: 1, kind: input, shape index: {}]
  %s2 = inlined_call_operand.vmem [shape: f32[1,192], index: 2, kind: input, shape index: {}]
  %s3 = inlined_call_operand.vmem [shape: bf16[64,64], index: 3, kind: input, shape index: {}]
  %s4 = inlined_call_operand.hbm [shape: f32[1,64], index: 4, kind: input, shape index: {}]
  %s5 = inlined_call_operand.vmem [shape: f32[1,64], index: 5, kind: input, shape index: {}]
  %s6 = inlined_call_operand.vmem [shape: f32[1,64], index: 6, kind: input, shape index: {}]
  %s7 = inlined_call_operand.vmem [shape: bf16[64,64], index: 7, kind: input, shape index: {}]
  %s8 = inlined_call_operand.vmem [shape: f32[1,64], index: 8, kind: input, shape index: {}]
  %s9 = inlined_call_operand.hbm [shape: bf16[64,64], index: 9, kind: input, shape index: {}]
  %s10 = inlined_call_operand.vmem [shape: f32[1,64], index: 10, kind: input, shape index: {}]
  %s11 = inlined_call_operand.hbm [shape: f32[1,64], index: 11, kind: input, shape index: {}]
  %s12 = inlined_call_operand.hbm [shape: f32[1,64], index: 12, kind: input, shape index: {}]
  %s13 = inlined_call_operand.vmem [shape: f32[16,64], index: 13, kind: output, shape index: {}]
  %s14 = sld [smem:[#allocation0]]
  $region78: #{te_bilstm_forward.4} parent=0
    _
  %s16 = ssub.s32 1, %s14
  %s17 = scalar_select 0, %s16, %s14
  $region1: #{te_bilstm_forward.4} parent=0
    #allocation3 [shape = 'u8[512]{0}', space=vmem, size = 0x400, scoped, tag = 'input window, operand 4, single buffered']
    #allocation4 [shape = 's32[1]{0}', space=sflag, size = 0x4, scoped, tag = 'scoped memory for te_bilstm_forward.4']
    #allocation5 [shape = 'u8[16384]{0}', space=vmem, size = 0x4000, scoped, tag = 'input window, operand 9, single buffered']
    #allocation6 [shape = 's32[1]{0}', space=sflag, size = 0x4, scoped, tag = 'scoped memory for te_bilstm_forward.4']
    #allocation7 [shape = 'u8[512]{0}', space=vmem, size = 0x400, scoped, tag = 'input window, operand 11, single buffered']
    #allocation8 [shape = 'u8[512]{0}', space=vmem, size = 0x400, scoped, tag = 'input window, operand 12, single buffered']
    #allocation9 [shape = 's32[1]{0}', space=sflag, size = 0x4, scoped, tag = 'scoped memory for te_bilstm_forward.4']
    %18 = vsyncpa [#allocation4], 0
    %19 = vsyncpa [#allocation6], 0
    %20 = vsyncpa [#allocation9], 0
    // Predicated region
    $region2: #{te_bilstm_forward.4} parent=1 // pred_check
      _
    $region3: #{te_bilstm_forward.4} parent=1 // pred_check_branch
      %22 = sbr.rel (0) target = $region5
    $region4: #{te_bilstm_forward.4} parent=1 // pred_region
      _
    $region5: #{te_bilstm_forward.4} parent=1 // pred_fallthru
      _
    // Predicated region
    $region6: #{te_bilstm_forward.4} parent=1 // pred_check
      _
    $region7: #{te_bilstm_forward.4} parent=1 // pred_check_branch
      %24 = sbr.rel (0) target = $region9
    $region8: #{te_bilstm_forward.4} parent=1 // pred_region
      _
    $region9: #{te_bilstm_forward.4} parent=1 // pred_fallthru
      _
    // Predicated region
    $region10: #{te_bilstm_forward.4} parent=1 // pred_check
      _
    $region11: #{te_bilstm_forward.4} parent=1 // pred_check_branch
      %26 = sbr.rel (0) target = $region13
    $region12: #{te_bilstm_forward.4} parent=1 // pred_region
      _
    $region13: #{te_bilstm_forward.4} parent=1 // pred_fallthru
      _
    // Predicated region
    $region14: #{te_bilstm_forward.4} parent=1 // pred_check
      _
    $region15: #{te_bilstm_forward.4} parent=1 // pred_check_branch
      %28 = sbr.rel (0) target = $region17
    $region16: #{te_bilstm_forward.4} parent=1 // pred_region
      _
    $region17: #{te_bilstm_forward.4} parent=1 // pred_fallthru
      _
    // Predicated region
    $region18: #{te_bilstm_forward.4} parent=1 // pred_check
      _
    $region19: #{te_bilstm_forward.4} parent=1 // pred_check_branch
      %30 = sbr.rel (0) target = $region21
    $region20: #{te_bilstm_forward.4} parent=1 // pred_region
      %32 = vsyncadd [#allocation4], 0
      %s34 = sshll.u32 %s4, 4
      %s35 = int_to_ptr.hbm [resolvable:$true] %s34
      %s36 = sshll.u32 [#allocation3], 4
      %s37 = int_to_ptr.vmem [resolvable:$true] %s36
      %39 = dma.hbm_to_vmem [thread:$0]  %s35, 16, %s37, [#allocation4]
    $region21: #{te_bilstm_forward.4} parent=1 // pred_fallthru
      _
    // Predicated region
    $region22: #{te_bilstm_forward.4} parent=1 // pred_check
      _
    $region23: #{te_bilstm_forward.4} parent=1 // pred_check_branch
      %41 = sbr.rel (0) target = $region25
    $region24: #{te_bilstm_forward.4} parent=1 // pred_region
      _
    $region25: #{te_bilstm_forward.4} parent=1 // pred_fallthru
      _
    // Predicated region
    $region26: #{te_bilstm_forward.4} parent=1 // pred_check
      _
    $region27: #{te_bilstm_forward.4} parent=1 // pred_check_branch
      %43 = sbr.rel (0) target = $region29
    $region28: #{te_bilstm_forward.4} parent=1 // pred_region
      _
    $region29: #{te_bilstm_forward.4} parent=1 // pred_fallthru
      _
    // Predicated region
    $region30: #{te_bilstm_forward.4} parent=1 // pred_check
      _
    $region31: #{te_bilstm_forward.4} parent=1 // pred_check_branch
      %45 = sbr.rel (0) target = $region33
    $region32: #{te_bilstm_forward.4} parent=1 // pred_region
      _
    $region33: #{te_bilstm_forward.4} parent=1 // pred_fallthru
      _
    // Predicated region
    $region34: #{te_bilstm_forward.4} parent=1 // pred_check
      _
    $region35: #{te_bilstm_forward.4} parent=1 // pred_check_branch
      %47 = sbr.rel (0) target = $region37
    $region36: #{te_bilstm_forward.4} parent=1 // pred_region
      _
    $region37: #{te_bilstm_forward.4} parent=1 // pred_fallthru
      _
    // Predicated region
    $region38: #{te_bilstm_forward.4} parent=1 // pred_check
      _
    $region39: #{te_bilstm_forward.4} parent=1 // pred_check_branch
      %49 = sbr.rel (0) target = $region41
    $region40: #{te_bilstm_forward.4} parent=1 // pred_region
      %51 = vsyncadd [#allocation6], 0
      %s52 = sshll.u32 %s9, 4
      %s53 = int_to_ptr.hbm [resolvable:$true] %s52
      %s54 = sshll.u32 [#allocation5], 4
      %s55 = int_to_ptr.vmem [resolvable:$true] %s54
      %60 = dma.hbm_to_vmem [thread:$0]  %s53, 512, %s55, [#allocation6], 64, 64, 4
    $region41: #{te_bilstm_forward.4} parent=1 // pred_fallthru
      _
    // Predicated region
    $region42: #{te_bilstm_forward.4} parent=1 // pred_check
      _
    $region43: #{te_bilstm_forward.4} parent=1 // pred_check_branch
      %62 = sbr.rel (0) target = $region45
    $region44: #{te_bilstm_forward.4} parent=1 // pred_region
      _
    $region45: #{te_bilstm_forward.4} parent=1 // pred_fallthru
      _
    // Predicated region
    $region46: #{te_bilstm_forward.4} parent=1 // pred_check
      _
    $region47: #{te_bilstm_forward.4} parent=1 // pred_check_branch
      %64 = sbr.rel (0) target = $region49
    $region48: #{te_bilstm_forward.4} parent=1 // pred_region
      %66 = vsyncadd [#allocation6], 0
      %s68 = sshll.u32 %s11, 4
      %s69 = int_to_ptr.hbm [resolvable:$true] %s68
      %s70 = sshll.u32 [#allocation7], 4
      %s71 = int_to_ptr.vmem [resolvable:$true] %s70
      %73 = dma.hbm_to_vmem [thread:$0]  %s69, 16, %s71, [#allocation6]
    $region49: #{te_bilstm_forward.4} parent=1 // pred_fallthru
      _
    // Predicated region
    $region50: #{te_bilstm_forward.4} parent=1 // pred_check
      _
    $region51: #{te_bilstm_forward.4} parent=1 // pred_check_branch
      %75 = sbr.rel (0) target = $region53
    $region52: #{te_bilstm_forward.4} parent=1 // pred_region
      %77 = vsyncadd [#allocation9], 0
      %s79 = sshll.u32 %s12, 4
      %s80 = int_to_ptr.hbm [resolvable:$true] %s79
      %s81 = sshll.u32 [#allocation8], 4
      %s82 = int_to_ptr.vmem [resolvable:$true] %s81
      %84 = dma.hbm_to_vmem [thread:$0]  %s80, 16, %s82, [#allocation9]
    $region53: #{te_bilstm_forward.4} parent=1 // pred_fallthru
      _
    // Predicated region
    $region54: #{te_bilstm_forward.4} parent=1 // pred_check
      _
    $region55: #{te_bilstm_forward.4} parent=1 // pred_check_branch
      %86 = sbr.rel (0) target = $region57
    $region56: #{te_bilstm_forward.4} parent=1 // pred_region
      %88 = dma.done [#allocation4], 16
    $region57: #{te_bilstm_forward.4} parent=1 // pred_fallthru
      _
    // Predicated region
    $region58: #{te_bilstm_forward.4} parent=1 // pred_check
      _
    $region59: #{te_bilstm_forward.4} parent=1 // pred_check_branch
      %90 = sbr.rel (0) target = $region61
    $region60: #{te_bilstm_forward.4} parent=1 // pred_region
      %92 = dma.done [#allocation6], 512
    $region61: #{te_bilstm_forward.4} parent=1 // pred_fallthru
      _
    // Predicated region
    $region62: #{te_bilstm_forward.4} parent=1 // pred_check
      _
    $region63: #{te_bilstm_forward.4} parent=1 // pred_check_branch
      %94 = sbr.rel (0) target = $region65
    $region64: #{te_bilstm_forward.4} parent=1 // pred_region
      %96 = dma.done [#allocation6], 16
    $region65: #{te_bilstm_forward.4} parent=1 // pred_fallthru
      _
    // Predicated region
    $region66: #{te_bilstm_forward.4} parent=1 // pred_check
      _
    $region67: #{te_bilstm_forward.4} parent=1 // pred_check_branch
      %98 = sbr.rel (0) target = $region69
    $region68: #{te_bilstm_forward.4} parent=1 // pred_region
      %100 = dma.done [#allocation9], 16
    $region69: #{te_bilstm_forward.4} parent=1 // pred_fallthru
      _
    %v102 = vld [vmem:[%s0] sm:$0xff]
    %v103 = vld [vmem:[%s0 + $0x8] sm:$0xff]
    %v104 = vpack.c.bf16 %v103, %v102
    %v105 = vld [vmem:[%s1] sm:$0xff]
    %v106 = vld [vmem:[%s1 + $0x8] sm:$0xff]
    %v107 = vld [vmem:[%s1 + $0x10] sm:$0xff]
    %v108 = vld [vmem:[%s1 + $0x18] sm:$0xff]
    %v109 = vld [vmem:[%s1 + $0x20] sm:$0xff]
    %v110 = vld [vmem:[%s1 + $0x28] sm:$0xff]
    %v111 = vld [vmem:[%s1 + $0x30] sm:$0xff]
    %v112 = vld [vmem:[%s1 + $0x38] sm:$0xff]
    %v113 = vld [vmem:[%s2] sm:$0x3]
    %v115 = vperm.slane %v113, 0
    %v116 = vperm.slane %v113, 1
    %v127 = vunpack.c.l.b16 %v105
    %v128 = vunpack.c.h.b16 %v105
    %v129 = vunpack.c.l.b16 %v106
    %v130 = vunpack.c.h.b16 %v106
    %v131 = vunpack.c.l.b16 %v107
    %v132 = vunpack.c.h.b16 %v107
    %v133 = vunpack.c.l.b16 %v108
    %v134 = vunpack.c.h.b16 %v108
    %v135 = vunpack.c.l.b16 %v109
    %v136 = vunpack.c.h.b16 %v109
    %v137 = vunpack.c.l.b16 %v110
    %v138 = vunpack.c.h.b16 %v110
    %v139 = vunpack.c.l.b16 %v111
    %v140 = vunpack.c.h.b16 %v111
    %v141 = vunpack.c.l.b16 %v112
    %v142 = vunpack.c.h.b16 %v112
    %v143 = vpack.c.b16 %v129, %v127
    %v144 = vpack.c.b16 %v130, %v128
    %v145 = vpack.c.b16 %v133, %v131
    %v146 = vpack.c.b16 %v134, %v132
    %v147 = vpack.c.b16 %v137, %v135
    %v148 = vpack.c.b16 %v138, %v136
    %v149 = vpack.c.b16 %v141, %v139
    %v150 = vpack.c.b16 %v142, %v140
    %vm159 = vcmask 523264
    %v161 = vsel %vm159, %v104, 0
    %163 = vmatpush.bf16.msra.mxu0 0
    %164 = vmatpush.bf16.msra.mxu0 0
    %165 = vmatpush.bf16.msra.mxu0 0
    %166 = vmatpush.bf16.msra.mxu0 0
    %167 = vmatpush.bf16.msra.mxu0 %v149
    %168 = vmatpush.bf16.msra.mxu0 %v147
    %169 = vmatpush.bf16.msra.mxu0 %v145
    %170 = vmatpush.bf16.msra.mxu0 %v143
    %171 = vmatmul.bf16.gmra.mxu0 %v161
    %v172 = vpop.f32.mrf.mxu0
    %v173 = vadd.f32 %v115, %v172
    %v174 = vpop.f32.mrf.mxu0
    %v175 = vadd.f32 %v115, %v174
    %176 = vdwg.mxu0
    %177 = vmatpush.bf16.msra.mxu0 0
    %178 = vmatpush.bf16.msra.mxu0 0
    %179 = vmatpush.bf16.msra.mxu0 0
    %180 = vmatpush.bf16.msra.mxu0 0
    %181 = vmatpush.bf16.msra.mxu0 %v150
    %182 = vmatpush.bf16.msra.mxu0 %v148
    %183 = vmatpush.bf16.msra.mxu0 %v146
    %184 = vmatpush.bf16.msra.mxu0 %v144
    %185 = vmatmul.bf16.gmra.mxu0 %v161
    %v186 = vpop.f32.mrf.mxu0
    %v187 = vadd.f32 %v116, %v186
    %v188 = vpop.f32.mrf.mxu0
    %v189 = vadd.f32 %v116, %v188
    %190 = vdwg.mxu0
    %v191 = vpack.c.bf16 %v173, %v173
    %v192 = vpack.c.bf16 %v175, %v175
    %v193 = vpack.c.bf16 %v187, %v187
    %v194 = vpack.c.bf16 %v189, %v189
    %v196 = vunpack.c.l.b16 %v191
    %v197 = vpack.c.b16 %v196, %v196
    %198 = vrot.lane.b32.xlu0 %v197, 64
    %v199 = vpop.permute.xlu0 %198
    %vm200 = vcmask 130048
    %v202 = vsel %vm200, %v191, 0
    %v205 = vsel %vm200, %v199, 0
    %207 = vmatpush.bf16.xpose.msra.mxu0 0
    %208 = vmatpush.bf16.xpose.msra.mxu0 0
    %209 = vmatpush.bf16.xpose.msra.mxu0 0
    %210 = vmatpush.bf16.xpose.msra.mxu0 0
    %211 = vmatpush.bf16.xpose.msra.mxu0 0
    %212 = vmatpush.bf16.xpose.msra.mxu0 0
    %213 = vmatpush.bf16.xpose.msra.mxu0 0
    %214 = vmatpush.bf16.xpose.msra.mxu0 %v205
    %215 = vmatmul.bf16.gmra.mxu0 %v202
    %v216 = vpop.f32.mrf.mxu0
    %v217 = vadd.f32 0.0, %v216
    %v218 = vpop.f32.mrf.mxu0
    %219 = vdwg.mxu0
    %v221 = vunpack.c.l.b16 %v192
    %v222 = vpack.c.b16 %v221, %v221
    %223 = vrot.lane.b32.xlu0 %v222, 64
    %v224 = vpop.permute.xlu0 %223
    %v226 = vsel %vm200, %v192, 0
    %v229 = vsel %vm200, %v224, 0
    %231 = vmatpush.bf16.xpose.msra.mxu0 0
    %232 = vmatpush.bf16.xpose.msra.mxu0 0
    %233 = vmatpush.bf16.xpose.msra.mxu0 0
    %234 = vmatpush.bf16.xpose.msra.mxu0 0
    %235 = vmatpush.bf16.xpose.msra.mxu0 0
    %236 = vmatpush.bf16.xpose.msra.mxu0 0
    %237 = vmatpush.bf16.xpose.msra.mxu0 0
    %238 = vmatpush.bf16.xpose.msra.mxu0 %v229
    %239 = vmatmul.bf16.gmra.mxu0 %v226
    %v240 = vpop.f32.mrf.mxu0
    %v241 = vadd.f32 0.0, %v240
    %v242 = vpop.f32.mrf.mxu0
    %243 = vdwg.mxu0
    %vm244 = vcmask 64512
    %v245 = vsel %vm244, %v217, -inf
    %246 = vmax.xlane.f32.xlu0 %v245
    %v247 = vpop.xlane.xlu0 %246
    %v248 = vsel %vm244, %v241, -inf
    %249 = vmax.xlane.f32.xlu0 %v248
    %v250 = vpop.xlane.xlu0 %249
    %v251 = vsub.f32 %v217, %v247
    %v252 = vsub.f32 %v241, %v250
    %v253 = vmul.f32 %v251, 1.442695
    %v254 = vpow.pop %v253
    %v255 = vmul.f32 %v252, 1.442695
    %v256 = vpow.pop %v255
    %v257 = vsel %vm244, %v254, 0.0
    %258 = vadd.xlane.f32.xlu0 %v257
    %v259 = vpop.xlane.xlu0 %258
    %v260 = vsel %vm244, %v256, 0.0
    %261 = vadd.xlane.f32.xlu0 %v260
    %v262 = vpop.xlane.xlu0 %261
    %v263 = vpack.c.bf16 %v254, %v254
    %v264 = vpack.c.bf16 %v256, %v256
    %v266 = vsel %vm244, %v263, 0
    %vm268 = vcmask 1043456
    %v270 = vsel %vm268, %v193, 0
    %272 = vmatpush.bf16.msra.mxu0 0
    %273 = vmatpush.bf16.msra.mxu0 0
    %274 = vmatpush.bf16.msra.mxu0 0
    %275 = vmatpush.bf16.msra.mxu0 0
    %276 = vmatpush.bf16.msra.mxu0 0
    %277 = vmatpush.bf16.msra.mxu0 0
    %278 = vmatpush.bf16.msra.mxu0 0
    %279 = vmatpush.bf16.msra.mxu0 %v270
    %280 = vmatmul.bf16.gmra.mxu0 %v266
    %v281 = vpop.f32.mrf.mxu0
    %v282 = vadd.f32 0.0, %v281
    %v283 = vpop.f32.mrf.mxu0
    %284 = vdwg.mxu0
    %v286 = vsel %vm244, %v264, 0
    %v289 = vsel %vm268, %v194, 0
    %291 = vmatpush.bf16.msra.mxu0 0
    %292 = vmatpush.bf16.msra.mxu0 0
    %293 = vmatpush.bf16.msra.mxu0 0
    %294 = vmatpush.bf16.msra.mxu0 0
    %295 = vmatpush.bf16.msra.mxu0 0
    %296 = vmatpush.bf16.msra.mxu0 0
    %297 = vmatpush.bf16.msra.mxu0 0
    %298 = vmatpush.bf16.msra.mxu0 %v289
    %299 = vmatmul.bf16.gmra.mxu0 %v286
    %v300 = vpop.f32.mrf.mxu0
    %v301 = vadd.f32 0.0, %v300
    %v302 = vpop.f32.mrf.mxu0
    %303 = vdwg.mxu0
    %v304 = vrcp.pop %v259
    %v305 = vrcp.pop %v262
    %v306 = vmul.f32 %v282, %v304
    %v307 = vmul.f32 %v301, %v305
    %308 = vst.msk [vmem:[#allocation2] sm:$0xff] %vm200, %v306
    %309 = vst.msk [vmem:[#allocation2 + $0x8] sm:$0xff] %vm200, %v307
    %310 = vrot.lane.b32.xlu0 %v197, 112
    %v311 = vpop.permute.xlu0 %310
    %312 = vrot.lane.b32.xlu0 %v197, 48
    %v313 = vpop.permute.xlu0 %312
    %v315 = vsel %vm200, %v311, 0
    %v318 = vsel %vm200, %v313, 0
    %320 = vmatpush.bf16.xpose.msra.mxu0 0
    %321 = vmatpush.bf16.xpose.msra.mxu0 0
    %322 = vmatpush.bf16.xpose.msra.mxu0 0
    %323 = vmatpush.bf16.xpose.msra.mxu0 0
    %324 = vmatpush.bf16.xpose.msra.mxu0 0
    %325 = vmatpush.bf16.xpose.msra.mxu0 0
    %326 = vmatpush.bf16.xpose.msra.mxu0 0
    %327 = vmatpush.bf16.xpose.msra.mxu0 %v318
    %328 = vmatmul.bf16.gmra.mxu0 %v315
    %v329 = vpop.f32.mrf.mxu0
    %v330 = vadd.f32 0.0, %v329
    %v331 = vpop.f32.mrf.mxu0
    %332 = vdwg.mxu0
    %333 = vrot.lane.b32.xlu0 %v222, 112
    %v334 = vpop.permute.xlu0 %333
    %335 = vrot.lane.b32.xlu0 %v222, 48
    %v336 = vpop.permute.xlu0 %335
    %v338 = vsel %vm200, %v334, 0
    %v341 = vsel %vm200, %v336, 0
    %343 = vmatpush.bf16.xpose.msra.mxu0 0
    %344 = vmatpush.bf16.xpose.msra.mxu0 0
    %345 = vmatpush.bf16.xpose.msra.mxu0 0
    %346 = vmatpush.bf16.xpose.msra.mxu0 0
    %347 = vmatpush.bf16.xpose.msra.mxu0 0
    %348 = vmatpush.bf16.xpose.msra.mxu0 0
    %349 = vmatpush.bf16.xpose.msra.mxu0 0
    %350 = vmatpush.bf16.xpose.msra.mxu0 %v341
    %351 = vmatmul.bf16.gmra.mxu0 %v338
    %v352 = vpop.f32.mrf.mxu0
    %v353 = vadd.f32 0.0, %v352
    %v354 = vpop.f32.mrf.mxu0
    %355 = vdwg.mxu0
    %v356 = vsel %vm244, %v330, -inf
    %357 = vmax.xlane.f32.xlu0 %v356
    %v358 = vpop.xlane.xlu0 %357
    %v359 = vsel %vm244, %v353, -inf
    %360 = vmax.xlane.f32.xlu0 %v359
    %v361 = vpop.xlane.xlu0 %360
    %v362 = vsub.f32 %v330, %v358
    %v363 = vsub.f32 %v353, %v361
    %v364 = vmul.f32 %v362, 1.442695
    %v365 = vpow.pop %v364
    %v366 = vmul.f32 %v363, 1.442695
    %v367 = vpow.pop %v366
    %v368 = vsel %vm244, %v365, 0.0
    %369 = vadd.xlane.f32.xlu0 %v368
    %v370 = vpop.xlane.xlu0 %369
    %v371 = vsel %vm244, %v367, 0.0
    %372 = vadd.xlane.f32.xlu0 %v371
    %v373 = vpop.xlane.xlu0 %372
    %v374 = vpack.c.bf16 %v365, %v365
    %v375 = vpack.c.bf16 %v367, %v367
    %v377 = vunpack.c.l.b16 %v193
    %v378 = vpack.c.b16 %v377, %v377
    %379 = vrot.lane.b32.xlu0 %v378, 112
    %v380 = vpop.permute.xlu0 %379
    %v382 = vsel %vm244, %v374, 0
    %v385 = vsel %vm268, %v380, 0
    %387 = vmatpush.bf16.msra.mxu0 0
    %388 = vmatpush.bf16.msra.mxu0 0
    %389 = vmatpush.bf16.msra.mxu0 0
    %390 = vmatpush.bf16.msra.mxu0 0
    %391 = vmatpush.bf16.msra.mxu0 0
    %392 = vmatpush.bf16.msra.mxu0 0
    %393 = vmatpush.bf16.msra.mxu0 0
    %394 = vmatpush.bf16.msra.mxu0 %v385
    %395 = vmatmul.bf16.gmra.mxu0 %v382
    %v396 = vpop.f32.mrf.mxu0
    %v397 = vadd.f32 0.0, %v396
    %v398 = vpop.f32.mrf.mxu0
    %399 = vdwg.mxu0
    %v401 = vunpack.c.l.b16 %v194
    %v402 = vpack.c.b16 %v401, %v401
    %403 = vrot.lane.b32.xlu0 %v402, 112
    %v404 = vpop.permute.xlu0 %403
    %v406 = vsel %vm244, %v375, 0
    %v409 = vsel %vm268, %v404, 0
    %411 = vmatpush.bf16.msra.mxu0 0
    %412 = vmatpush.bf16.msra.mxu0 0
    %413 = vmatpush.bf16.msra.mxu0 0
    %414 = vmatpush.bf16.msra.mxu0 0
    %415 = vmatpush.bf16.msra.mxu0 0
    %416 = vmatpush.bf16.msra.mxu0 0
    %417 = vmatpush.bf16.msra.mxu0 0
    %418 = vmatpush.bf16.msra.mxu0 %v409
    %419 = vmatmul.bf16.gmra.mxu0 %v406
    %v420 = vpop.f32.mrf.mxu0
    %v421 = vadd.f32 0.0, %v420
    %v422 = vpop.f32.mrf.mxu0
    %423 = vdwg.mxu0
    %v424 = vrcp.pop %v370
    %v425 = vrcp.pop %v373
    %v426 = vmul.f32 %v397, %v424
    %v427 = vmul.f32 %v421, %v425
    %430 = vrot.lane.b32.xlu0 %v426, 16
    %v431 = vpop.permute.xlu0 %430
    %432 = vrot.lane.b32.xlu0 %v427, 16
    %v433 = vpop.permute.xlu0 %432
    %vm436 = vcmask 261248
    %437 = vst.msk [vmem:[#allocation2] sm:$0xff] %vm436, %v431
    %438 = vst.msk [vmem:[#allocation2 + $0x8] sm:$0xff] %vm436, %v433
    %439 = vrot.lane.b32.xlu0 %v197, 96
    %v440 = vpop.permute.xlu0 %439
    %441 = vrot.lane.b32.xlu0 %v197, 32
    %v442 = vpop.permute.xlu0 %441
    %v444 = vsel %vm200, %v440, 0
    %v447 = vsel %vm200, %v442, 0
    %449 = vmatpush.bf16.xpose.msra.mxu0 0
    %450 = vmatpush.bf16.xpose.msra.mxu0 0
    %451 = vmatpush.bf16.xpose.msra.mxu0 0
    %452 = vmatpush.bf16.xpose.msra.mxu0 0
    %453 = vmatpush.bf16.xpose.msra.mxu0 0
    %454 = vmatpush.bf16.xpose.msra.mxu0 0
    %455 = vmatpush.bf16.xpose.msra.mxu0 0
    %456 = vmatpush.bf16.xpose.msra.mxu0 %v447
    %457 = vmatmul.bf16.gmra.mxu0 %v444
    %v458 = vpop.f32.mrf.mxu0
    %v459 = vadd.f32 0.0, %v458
    %v460 = vpop.f32.mrf.mxu0
    %461 = vdwg.mxu0
    %462 = vrot.lane.b32.xlu0 %v222, 96
    %v463 = vpop.permute.xlu0 %462
    %464 = vrot.lane.b32.xlu0 %v222, 32
    %v465 = vpop.permute.xlu0 %464
    %v467 = vsel %vm200, %v463, 0
    %v470 = vsel %vm200, %v465, 0
    %472 = vmatpush.bf16.xpose.msra.mxu0 0
    %473 = vmatpush.bf16.xpose.msra.mxu0 0
    %474 = vmatpush.bf16.xpose.msra.mxu0 0
    %475 = vmatpush.bf16.xpose.msra.mxu0 0
    %476 = vmatpush.bf16.xpose.msra.mxu0 0
    %477 = vmatpush.bf16.xpose.msra.mxu0 0
    %478 = vmatpush.bf16.xpose.msra.mxu0 0
    %479 = vmatpush.bf16.xpose.msra.mxu0 %v470
    %480 = vmatmul.bf16.gmra.mxu0 %v467
    %v481 = vpop.f32.mrf.mxu0
    %v482 = vadd.f32 0.0, %v481
    %v483 = vpop.f32.mrf.mxu0
    %484 = vdwg.mxu0
    %v485 = vsel %vm244, %v459, -inf
    %486 = vmax.xlane.f32.xlu0 %v485
    %v487 = vpop.xlane.xlu0 %486
    %v488 = vsel %vm244, %v482, -inf
    %489 = vmax.xlane.f32.xlu0 %v488
    %v490 = vpop.xlane.xlu0 %489
    %v491 = vsub.f32 %v459, %v487
    %v492 = vsub.f32 %v482, %v490
    %v493 = vmul.f32 %v491, 1.442695
    %v494 = vpow.pop %v493
    %v495 = vmul.f32 %v492, 1.442695
    %v496 = vpow.pop %v495
    %v497 = vsel %vm244, %v494, 0.0
    %498 = vadd.xlane.f32.xlu0 %v497
    %v499 = vpop.xlane.xlu0 %498
    %v500 = vsel %vm244, %v496, 0.0
    %501 = vadd.xlane.f32.xlu0 %v500
    %v502 = vpop.xlane.xlu0 %501
    %v503 = vpack.c.bf16 %v494, %v494
    %v504 = vpack.c.bf16 %v496, %v496
    %505 = vrot.lane.b32.xlu0 %v378, 96
    %v506 = vpop.permute.xlu0 %505
    %v508 = vsel %vm244, %v503, 0
    %v511 = vsel %vm268, %v506, 0
    %513 = vmatpush.bf16.msra.mxu0 0
    %514 = vmatpush.bf16.msra.mxu0 0
    %515 = vmatpush.bf16.msra.mxu0 0
    %516 = vmatpush.bf16.msra.mxu0 0
    %517 = vmatpush.bf16.msra.mxu0 0
    %518 = vmatpush.bf16.msra.mxu0 0
    %519 = vmatpush.bf16.msra.mxu0 0
    %520 = vmatpush.bf16.msra.mxu0 %v511
    %521 = vmatmul.bf16.gmra.mxu0 %v508
    %v522 = vpop.f32.mrf.mxu0
    %v523 = vadd.f32 0.0, %v522
    %v524 = vpop.f32.mrf.mxu0
    %525 = vdwg.mxu0
    %526 = vrot.lane.b32.xlu0 %v402, 96
    %v527 = vpop.permute.xlu0 %526
    %v529 = vsel %vm244, %v504, 0
    %v532 = vsel %vm268, %v527, 0
    %534 = vmatpush.bf16.msra.mxu0 0
    %535 = vmatpush.bf16.msra.mxu0 0
    %536 = vmatpush.bf16.msra.mxu0 0
    %537 = vmatpush.bf16.msra.mxu0 0
    %538 = vmatpush.bf16.msra.mxu0 0
    %539 = vmatpush.bf16.msra.mxu0 0
    %540 = vmatpush.bf16.msra.mxu0 0
    %541 = vmatpush.bf16.msra.mxu0 %v532
    %542 = vmatmul.bf16.gmra.mxu0 %v529
    %v543 = vpop.f32.mrf.mxu0
    %v544 = vadd.f32 0.0, %v543
    %v545 = vpop.f32.mrf.mxu0
    %546 = vdwg.mxu0
    %v547 = vrcp.pop %v499
    %v548 = vrcp.pop %v502
    %v549 = vmul.f32 %v523, %v547
    %v550 = vmul.f32 %v544, %v548
    %553 = vrot.lane.b32.xlu0 %v549, 32
    %v554 = vpop.permute.xlu0 %553
    %555 = vrot.lane.b32.xlu0 %v550, 32
    %v556 = vpop.permute.xlu0 %555
    %vm559 = vcmask 392448
    %560 = vst.msk [vmem:[#allocation2] sm:$0xff] %vm559, %v554
    %561 = vst.msk [vmem:[#allocation2 + $0x8] sm:$0xff] %vm559, %v556
    %562 = vrot.lane.b32.xlu0 %v197, 80
    %v563 = vpop.permute.xlu0 %562
    %564 = vrot.lane.b32.xlu0 %v197, 16
    %v565 = vpop.permute.xlu0 %564
    %v567 = vsel %vm200, %v563, 0
    %v570 = vsel %vm200, %v565, 0
    %572 = vmatpush.bf16.xpose.msra.mxu0 0
    %573 = vmatpush.bf16.xpose.msra.mxu0 0
    %574 = vmatpush.bf16.xpose.msra.mxu0 0
    %575 = vmatpush.bf16.xpose.msra.mxu0 0
    %576 = vmatpush.bf16.xpose.msra.mxu0 0
    %577 = vmatpush.bf16.xpose.msra.mxu0 0
    %578 = vmatpush.bf16.xpose.msra.mxu0 0
    %579 = vmatpush.bf16.xpose.msra.mxu0 %v570
    %580 = vmatmul.bf16.gmra.mxu0 %v567
    %v581 = vpop.f32.mrf.mxu0
    %v582 = vadd.f32 0.0, %v581
    %v583 = vpop.f32.mrf.mxu0
    %584 = vdwg.mxu0
    %585 = vrot.lane.b32.xlu0 %v222, 80
    %v586 = vpop.permute.xlu0 %585
    %587 = vrot.lane.b32.xlu0 %v222, 16
    %v588 = vpop.permute.xlu0 %587
    %v590 = vsel %vm200, %v586, 0
    %v593 = vsel %vm200, %v588, 0
    %595 = vmatpush.bf16.xpose.msra.mxu0 0
    %596 = vmatpush.bf16.xpose.msra.mxu0 0
    %597 = vmatpush.bf16.xpose.msra.mxu0 0
    %598 = vmatpush.bf16.xpose.msra.mxu0 0
    %599 = vmatpush.bf16.xpose.msra.mxu0 0
    %600 = vmatpush.bf16.xpose.msra.mxu0 0
    %601 = vmatpush.bf16.xpose.msra.mxu0 0
    %602 = vmatpush.bf16.xpose.msra.mxu0 %v593
    %603 = vmatmul.bf16.gmra.mxu0 %v590
    %v604 = vpop.f32.mrf.mxu0
    %v605 = vadd.f32 0.0, %v604
    %v606 = vpop.f32.mrf.mxu0
    %607 = vdwg.mxu0
    %v608 = vsel %vm244, %v582, -inf
    %609 = vmax.xlane.f32.xlu0 %v608
    %v610 = vpop.xlane.xlu0 %609
    %v611 = vsel %vm244, %v605, -inf
    %612 = vmax.xlane.f32.xlu0 %v611
    %v613 = vpop.xlane.xlu0 %612
    %v614 = vsub.f32 %v582, %v610
    %v615 = vsub.f32 %v605, %v613
    %v616 = vmul.f32 %v614, 1.442695
    %v617 = vpow.pop %v616
    %v618 = vmul.f32 %v615, 1.442695
    %v619 = vpow.pop %v618
    %v620 = vsel %vm244, %v617, 0.0
    %621 = vadd.xlane.f32.xlu0 %v620
    %v622 = vpop.xlane.xlu0 %621
    %v623 = vsel %vm244, %v619, 0.0
    %624 = vadd.xlane.f32.xlu0 %v623
    %v625 = vpop.xlane.xlu0 %624
    %v626 = vpack.c.bf16 %v617, %v617
    %v627 = vpack.c.bf16 %v619, %v619
    %628 = vrot.lane.b32.xlu0 %v378, 80
    %v629 = vpop.permute.xlu0 %628
    %v631 = vsel %vm244, %v626, 0
    %v634 = vsel %vm268, %v629, 0
    %636 = vmatpush.bf16.msra.mxu0 0
    %637 = vmatpush.bf16.msra.mxu0 0
    %638 = vmatpush.bf16.msra.mxu0 0
    %639 = vmatpush.bf16.msra.mxu0 0
    %640 = vmatpush.bf16.msra.mxu0 0
    %641 = vmatpush.bf16.msra.mxu0 0
    %642 = vmatpush.bf16.msra.mxu0 0
    %643 = vmatpush.bf16.msra.mxu0 %v634
    %644 = vmatmul.bf16.gmra.mxu0 %v631
    %v645 = vpop.f32.mrf.mxu0
    %v646 = vadd.f32 0.0, %v645
    %v647 = vpop.f32.mrf.mxu0
    %648 = vdwg.mxu0
    %649 = vrot.lane.b32.xlu0 %v402, 80
    %v650 = vpop.permute.xlu0 %649
    %v652 = vsel %vm244, %v627, 0
    %v655 = vsel %vm268, %v650, 0
    %657 = vmatpush.bf16.msra.mxu0 0
    %658 = vmatpush.bf16.msra.mxu0 0
    %659 = vmatpush.bf16.msra.mxu0 0
    %660 = vmatpush.bf16.msra.mxu0 0
    %661 = vmatpush.bf16.msra.mxu0 0
    %662 = vmatpush.bf16.msra.mxu0 0
    %663 = vmatpush.bf16.msra.mxu0 0
    %664 = vmatpush.bf16.msra.mxu0 %v655
    %665 = vmatmul.bf16.gmra.mxu0 %v652
    %v666 = vpop.f32.mrf.mxu0
    %v667 = vadd.f32 0.0, %v666
    %v668 = vpop.f32.mrf.mxu0
    %669 = vdwg.mxu0
    %v670 = vrcp.pop %v622
    %v671 = vrcp.pop %v625
    %v672 = vmul.f32 %v646, %v670
    %v673 = vmul.f32 %v667, %v671
    %676 = vrot.lane.b32.xlu0 %v672, 48
    %v677 = vpop.permute.xlu0 %676
    %678 = vrot.lane.b32.xlu0 %v673, 48
    %v679 = vpop.permute.xlu0 %678
    %vm682 = vcmask 523648
    %683 = vst.msk [vmem:[#allocation2] sm:$0xff] %vm682, %v677
    %684 = vst.msk [vmem:[#allocation2 + $0x8] sm:$0xff] %vm682, %v679
    %v685 = vld [vmem:[#allocation2] sm:$0xff]
    %v686 = vld [vmem:[#allocation2 + $0x8] sm:$0xff]
    %v687 = vpack.c.bf16 %v686, %v685
    %v688 = vld [vmem:[%s3] sm:$0xf]
    %v689 = vld [vmem:[%s3 + $0x4] sm:$0xf]
    %v690 = vld [vmem:[%s3 + $0x8] sm:$0xf]
    %v691 = vld [vmem:[%s3 + $0xc] sm:$0xf]
    %v692 = vld [vmem:[%s3 + $0x10] sm:$0xf]
    %v693 = vld [vmem:[%s3 + $0x14] sm:$0xf]
    %v694 = vld [vmem:[%s3 + $0x18] sm:$0xf]
    %v695 = vld [vmem:[%s3 + $0x1c] sm:$0xf]
    %v696 = vld [vmem:[#allocation3] sm:$0x1]
    %v698 = vperm.slane %v696, 0
    %v708 = vunpack.c.l.b16 %v688
    %v709 = vunpack.c.l.b16 %v689
    %v710 = vunpack.c.l.b16 %v690
    %v711 = vunpack.c.l.b16 %v691
    %v712 = vunpack.c.l.b16 %v692
    %v713 = vunpack.c.l.b16 %v693
    %v714 = vunpack.c.l.b16 %v694
    %v715 = vunpack.c.l.b16 %v695
    %v716 = vpack.c.b16 %v709, %v708
    %v717 = vpack.c.b16 %v711, %v710
    %v718 = vpack.c.b16 %v713, %v712
    %v719 = vpack.c.b16 %v715, %v714
    %v725 = vsel %vm159, %v687, 0
    %727 = vmatpush.bf16.msra.mxu0 0
    %728 = vmatpush.bf16.msra.mxu0 0
    %729 = vmatpush.bf16.msra.mxu0 0
    %730 = vmatpush.bf16.msra.mxu0 0
    %731 = vmatpush.bf16.msra.mxu0 %v719
    %732 = vmatpush.bf16.msra.mxu0 %v718
    %733 = vmatpush.bf16.msra.mxu0 %v717
    %734 = vmatpush.bf16.msra.mxu0 %v716
    %735 = vmatmul.bf16.gmra.mxu0 %v725
    %v736 = vpop.f32.mrf.mxu0
    %v737 = vadd.f32 %v698, %v736
    %v738 = vpop.f32.mrf.mxu0
    %v739 = vadd.f32 %v698, %v738
    %740 = vdwg.mxu0
    %v741 = vadd.f32 %v737, %v102
    %v742 = vadd.f32 %v739, %v103
    %v743 = vsel %vm159, %v741, 0.0
    %744 = vadd.xlane.f32.xlu0 %v743
    %v745 = vpop.xlane.xlu0 %744
    %v746 = vsel %vm159, %v742, 0.0
    %747 = vadd.xlane.f32.xlu0 %v746
    %v748 = vpop.xlane.xlu0 %747
    %v749 = vrcp.pop 64.0
    %v750 = vmul.f32 64.0, %v749
    %v751 = vsub.f32 1.0, %v750
    %v752 = vmul.f32 %v749, %v751
    %v753 = vadd.f32 %v749, %v752
    %vm754 = vweird.f32 %v749
    %v755 = vsel %vm754, %v749, %v753
    %v756 = vmul.f32 %v745, %v755
    %v757 = vmul.f32 %v748, %v755
    %v758 = vsub.f32 %v741, %v756
    %v759 = vsub.f32 %v742, %v757
    %v760 = vmul.f32 %v758, %v758
    %v761 = vmul.f32 %v759, %v759
    %v762 = vsel %vm159, %v760, 0.0
    %763 = vadd.xlane.f32.xlu0 %v762
    %v764 = vpop.xlane.xlu0 %763
    %v765 = vsel %vm159, %v761, 0.0
    %766 = vadd.xlane.f32.xlu0 %v765
    %v767 = vpop.xlane.xlu0 %766
    %v768 = vmul.f32 %v764, %v755
    %v769 = vmul.f32 %v767, %v755
    %v770 = vadd.f32 %v768, 1e-05
    %v771 = vadd.f32 %v769, 1e-05
    %v772 = vrsqrt.pop %v770
    %v773 = vmul.f32 %v772, %v770
    %v774 = vmul.f32 %v773, %v772
    %v775 = vmul.f32 0.5, %v774
    %v776 = vsub.f32 1.5, %v775
    %v777 = vmul.f32 %v772, %v776
    %vm778 = vweird.f32 %v770
    %vm779 = vweird.f32 %v772
    %vm780 = vmor %vm778, %vm779
    %v781 = vsel %vm780, %v772, %v777
    %v782 = vrsqrt.pop %v771
    %v783 = vmul.f32 %v782, %v771
    %v784 = vmul.f32 %v783, %v782
    %v785 = vmul.f32 0.5, %v784
    %v786 = vsub.f32 1.5, %v785
    %v787 = vmul.f32 %v782, %v786
    %vm788 = vweird.f32 %v771
    %vm789 = vweird.f32 %v782
    %vm790 = vmor %vm788, %vm789
    %v791 = vsel %vm790, %v782, %v787
    %v792 = vmul.f32 %v758, %v781
    %v793 = vmul.f32 %v759, %v791
    %v794 = vld [vmem:[%s5] sm:$0x1]
    %v796 = vperm.slane %v794, 0
    %v798 = vmul.f32 %v792, %v796
    %v799 = vmul.f32 %v793, %v796
    %v800 = vld [vmem:[%s6] sm:$0x1]
    %v802 = vperm.slane %v800, 0
    %v804 = vadd.f32 %v798, %v802
    %v805 = vadd.f32 %v799, %v802
    %v806 = vpack.c.bf16 %v805, %v804
    %v807 = vld [vmem:[%s7] sm:$0xf]
    %v808 = vld [vmem:[%s7 + $0x4] sm:$0xf]
    %v809 = vld [vmem:[%s7 + $0x8] sm:$0xf]
    %v810 = vld [vmem:[%s7 + $0xc] sm:$0xf]
    %v811 = vld [vmem:[%s7 + $0x10] sm:$0xf]
    %v812 = vld [vmem:[%s7 + $0x14] sm:$0xf]
    %v813 = vld [vmem:[%s7 + $0x18] sm:$0xf]
    %v814 = vld [vmem:[%s7 + $0x1c] sm:$0xf]
    %v815 = vld [vmem:[%s8] sm:$0x1]
    %v817 = vperm.slane %v815, 0
    %v827 = vunpack.c.l.b16 %v807
    %v828 = vunpack.c.l.b16 %v808
    %v829 = vunpack.c.l.b16 %v809
    %v830 = vunpack.c.l.b16 %v810
    %v831 = vunpack.c.l.b16 %v811
    %v832 = vunpack.c.l.b16 %v812
    %v833 = vunpack.c.l.b16 %v813
    %v834 = vunpack.c.l.b16 %v814
    %v835 = vpack.c.b16 %v828, %v827
    %v836 = vpack.c.b16 %v830, %v829
    %v837 = vpack.c.b16 %v832, %v831
    %v838 = vpack.c.b16 %v834, %v833
    %v844 = vsel %vm159, %v806, 0
    %846 = vmatpush.bf16.msra.mxu0 0
    %847 = vmatpush.bf16.msra.mxu0 0
    %848 = vmatpush.bf16.msra.mxu0 0
    %849 = vmatpush.bf16.msra.mxu0 0
    %850 = vmatpush.bf16.msra.mxu0 %v838
    %851 = vmatpush.bf16.msra.mxu0 %v837
    %852 = vmatpush.bf16.msra.mxu0 %v836
    %853 = vmatpush.bf16.msra.mxu0 %v835
    %854 = vmatmul.bf16.gmra.mxu0 %v844
    %v855 = vpop.f32.mrf.mxu0
    %v856 = vadd.f32 %v817, %v855
    %v857 = vpop.f32.mrf.mxu0
    %v858 = vadd.f32 %v817, %v857
    %859 = vdwg.mxu0
    %v860 = vmax.f32 %v856, 0.0
    %v861 = vmax.f32 %v858, 0.0
    %v862 = vpack.c.bf16 %v861, %v860
    %v863 = vld [vmem:[#allocation5] sm:$0xf]
    %v864 = vld [vmem:[#allocation5 + $0x4] sm:$0xf]
    %v865 = vld [vmem:[#allocation5 + $0x8] sm:$0xf]
    %v866 = vld [vmem:[#allocation5 + $0xc] sm:$0xf]
    %v867 = vld [vmem:[#allocation5 + $0x10] sm:$0xf]
    %v868 = vld [vmem:[#allocation5 + $0x14] sm:$0xf]
    %v869 = vld [vmem:[#allocation5 + $0x18] sm:$0xf]
    %v870 = vld [vmem:[#allocation5 + $0x1c] sm:$0xf]
    %v871 = vld [vmem:[%s10] sm:$0x1]
    %v873 = vperm.slane %v871, 0
    %v883 = vunpack.c.l.b16 %v863
    %v884 = vunpack.c.l.b16 %v864
    %v885 = vunpack.c.l.b16 %v865
    %v886 = vunpack.c.l.b16 %v866
    %v887 = vunpack.c.l.b16 %v867
    %v888 = vunpack.c.l.b16 %v868
    %v889 = vunpack.c.l.b16 %v869
    %v890 = vunpack.c.l.b16 %v870
    %v891 = vpack.c.b16 %v884, %v883
    %v892 = vpack.c.b16 %v886, %v885
    %v893 = vpack.c.b16 %v888, %v887
    %v894 = vpack.c.b16 %v890, %v889
    %v900 = vsel %vm159, %v862, 0
    %902 = vmatpush.bf16.msra.mxu0 0
    %903 = vmatpush.bf16.msra.mxu0 0
    %904 = vmatpush.bf16.msra.mxu0 0
    %905 = vmatpush.bf16.msra.mxu0 0
    %906 = vmatpush.bf16.msra.mxu0 %v894
    %907 = vmatpush.bf16.msra.mxu0 %v893
    %908 = vmatpush.bf16.msra.mxu0 %v892
    %909 = vmatpush.bf16.msra.mxu0 %v891
    %910 = vmatmul.bf16.gmra.mxu0 %v900
    %v911 = vpop.f32.mrf.mxu0
    %v912 = vadd.f32 %v873, %v911
    %v913 = vpop.f32.mrf.mxu0
    %v914 = vadd.f32 %v873, %v913
    %915 = vdwg.mxu0
    %v916 = vadd.f32 %v912, %v804
    %v917 = vadd.f32 %v914, %v805
    %v918 = vsel %vm159, %v916, 0.0
    %919 = vadd.xlane.f32.xlu0 %v918
    %v920 = vpop.xlane.xlu0 %919
    %v921 = vsel %vm159, %v917, 0.0
    %922 = vadd.xlane.f32.xlu0 %v921
    %v923 = vpop.xlane.xlu0 %922
    %v924 = vmul.f32 %v920, %v755
    %v925 = vmul.f32 %v923, %v755
    %v926 = vsub.f32 %v916, %v924
    %v927 = vsub.f32 %v917, %v925
    %v928 = vmul.f32 %v926, %v926
    %v929 = vmul.f32 %v927, %v927
    %v930 = vsel %vm159, %v928, 0.0
    %931 = vadd.xlane.f32.xlu0 %v930
    %v932 = vpop.xlane.xlu0 %931
    %v933 = vsel %vm159, %v929, 0.0
    %934 = vadd.xlane.f32.xlu0 %v933
    %v935 = vpop.xlane.xlu0 %934
    %v936 = vmul.f32 %v932, %v755
    %v937 = vmul.f32 %v935, %v755
    %v938 = vadd.f32 %v936, 1e-05
    %v939 = vadd.f32 %v937, 1e-05
    %v940 = vrsqrt.pop %v938
    %v941 = vmul.f32 %v940, %v938
    %v942 = vmul.f32 %v941, %v940
    %v943 = vmul.f32 0.5, %v942
    %v944 = vsub.f32 1.5, %v943
    %v945 = vmul.f32 %v940, %v944
    %vm946 = vweird.f32 %v938
    %vm947 = vweird.f32 %v940
    %vm948 = vmor %vm946, %vm947
    %v949 = vsel %vm948, %v940, %v945
    %v950 = vrsqrt.pop %v939
    %v951 = vmul.f32 %v950, %v939
    %v952 = vmul.f32 %v951, %v950
    %v953 = vmul.f32 0.5, %v952
    %v954 = vsub.f32 1.5, %v953
    %v955 = vmul.f32 %v950, %v954
    %vm956 = vweird.f32 %v939
    %vm957 = vweird.f32 %v950
    %vm958 = vmor %vm956, %vm957
    %v959 = vsel %vm958, %v950, %v955
    %v960 = vmul.f32 %v926, %v949
    %v961 = vmul.f32 %v927, %v959
    %v962 = vld [vmem:[#allocation7] sm:$0x1]
    %v964 = vperm.slane %v962, 0
    %v966 = vmul.f32 %v960, %v964
    %v967 = vmul.f32 %v961, %v964
    %v968 = vld [vmem:[#allocation8] sm:$0x1]
    %v970 = vperm.slane %v968, 0
    %v972 = vadd.f32 %v966, %v970
    %v973 = vadd.f32 %v967, %v970
    %974 = vst.msk [vmem:[%s13] sm:$0xff] %vm159, %v972
    %975 = vst.msk [vmem:[%s13 + $0x8] sm:$0xff] %vm159, %v973
    // Predicated region
    $region70: #{te_bilstm_forward.4} parent=1 // pred_check
      _
    $region71: #{te_bilstm_forward.4} parent=1 // pred_check_branch
      %977 = sbr.rel (0) target = $region73
    $region72: #{te_bilstm_forward.4} parent=1 // pred_region
      _
    $region73: #{te_bilstm_forward.4} parent=1 // pred_fallthru
      _
    // Predicated region
    $region74: #{te_bilstm_forward.4} parent=1 // pred_check
      _
    $region75: #{te_bilstm_forward.4} parent=1 // pred_check_branch
      %979 = sbr.rel (0) target = $region77
    $region76: #{te_bilstm_forward.4} parent=1 // pred_region
      _
    $region77: #{te_bilstm_forward.4} parent=1 // pred_fallthru
      _
    %980 = vsyncpa [#allocation4], 1
    %981 = vsyncpa [#allocation6], 1
    %982 = vsyncpa [#allocation9], 1

// kernel: te_bilstm_forward.3
$region0: #{te_bilstm_forward.3}
  #allocation0 [shape = 'u32[]', space=smem, size = 0x4, offset = 0x4, fixed_abs, tag = 'smem constant byte address 0x4 - core index']
  #allocation1 [shape = 'u32[72,128]{1,0:T(1,128)}', space=vmem, size = 0x9000, scoped, tag = 'internal scratch']
  #allocation2 [shape = 'f32[16,64]{1,0:T(8,128)}', space=vmem, size = 0x2000, scoped, tag = 'scratch operand']
  %s0 = inlined_call_operand.vmem [shape: f32[16,64], index: 0, kind: input, shape index: {}]
  %s1 = inlined_call_operand.vmem [shape: bf16[64,192], index: 1, kind: input, shape index: {}]
  %s2 = inlined_call_operand.vmem [shape: f32[1,192], index: 2, kind: input, shape index: {}]
  %s3 = inlined_call_operand.vmem [shape: bf16[64,64], index: 3, kind: input, shape index: {}]
  %s4 = inlined_call_operand.vmem [shape: f32[1,64], index: 4, kind: input, shape index: {}]
  %s5 = inlined_call_operand.vmem [shape: f32[1,64], index: 5, kind: input, shape index: {}]
  %s6 = inlined_call_operand.vmem [shape: f32[1,64], index: 6, kind: input, shape index: {}]
  %s7 = inlined_call_operand.vmem [shape: bf16[64,64], index: 7, kind: input, shape index: {}]
  %s8 = inlined_call_operand.vmem [shape: f32[1,64], index: 8, kind: input, shape index: {}]
  %s9 = inlined_call_operand.vmem [shape: bf16[64,64], index: 9, kind: input, shape index: {}]
  %s10 = inlined_call_operand.vmem [shape: f32[1,64], index: 10, kind: input, shape index: {}]
  %s11 = inlined_call_operand.vmem [shape: f32[1,64], index: 11, kind: input, shape index: {}]
  %s12 = inlined_call_operand.vmem [shape: f32[1,64], index: 12, kind: input, shape index: {}]
  %s13 = inlined_call_operand.vmem [shape: f32[16,64], index: 13, kind: output, shape index: {}]
  %s14 = sld [smem:[#allocation0]]
  $region62: #{te_bilstm_forward.3} parent=0
    _
  %s16 = ssub.s32 1, %s14
  %s17 = scalar_select 0, %s16, %s14
  // Predicated region
  $region2: #{te_bilstm_forward.3} parent=0 // pred_check
    _
  $region3: #{te_bilstm_forward.3} parent=0 // pred_check_branch
    %19 = sbr.rel (0) target = $region5
  $region4: #{te_bilstm_forward.3} parent=0 // pred_region
    _
  $region5: #{te_bilstm_forward.3} parent=0 // pred_fallthru
    _
  // Predicated region
  $region6: #{te_bilstm_forward.3} parent=0 // pred_check
    _
  $region7: #{te_bilstm_forward.3} parent=0 // pred_check_branch
    %21 = sbr.rel (0) target = $region9
  $region8: #{te_bilstm_forward.3} parent=0 // pred_region
    _
  $region9: #{te_bilstm_forward.3} parent=0 // pred_fallthru
    _
  // Predicated region
  $region10: #{te_bilstm_forward.3} parent=0 // pred_check
    _
  $region11: #{te_bilstm_forward.3} parent=0 // pred_check_branch
    %23 = sbr.rel (0) target = $region13
  $region12: #{te_bilstm_forward.3} parent=0 // pred_region
    _
  $region13: #{te_bilstm_forward.3} parent=0 // pred_fallthru
    _
  // Predicated region
  $region14: #{te_bilstm_forward.3} parent=0 // pred_check
    _
  $region15: #{te_bilstm_forward.3} parent=0 // pred_check_branch
    %25 = sbr.rel (0) target = $region17
  $region16: #{te_bilstm_forward.3} parent=0 // pred_region
    _
  $region17: #{te_bilstm_forward.3} parent=0 // pred_fallthru
    _
  // Predicated region
  $region18: #{te_bilstm_forward.3} parent=0 // pred_check
    _
  $region19: #{te_bilstm_forward.3} parent=0 // pred_check_branch
    %27 = sbr.rel (0) target = $region21
  $region20: #{te_bilstm_forward.3} parent=0 // pred_region
    _
  $region21: #{te_bilstm_forward.3} parent=0 // pred_fallthru
    _
  // Predicated region
  $region22: #{te_bilstm_forward.3} parent=0 // pred_check
    _
  $region23: #{te_bilstm_forward.3} parent=0 // pred_check_branch
    %29 = sbr.rel (0) target = $region25
  $region24: #{te_bilstm_forward.3} parent=0 // pred_region
    _
  $region25: #{te_bilstm_forward.3} parent=0 // pred_fallthru
    _
  // Predicated region
  $region26: #{te_bilstm_forward.3} parent=0 // pred_check
    _
  $region27: #{te_bilstm_forward.3} parent=0 // pred_check_branch
    %31 = sbr.rel (0) target = $region29
  $region28: #{te_bilstm_forward.3} parent=0 // pred_region
    _
  $region29: #{te_bilstm_forward.3} parent=0 // pred_fallthru
    _
  // Predicated region
  $region30: #{te_bilstm_forward.3} parent=0 // pred_check
    _
  $region31: #{te_bilstm_forward.3} parent=0 // pred_check_branch
    %33 = sbr.rel (0) target = $region33
  $region32: #{te_bilstm_forward.3} parent=0 // pred_region
    _
  $region33: #{te_bilstm_forward.3} parent=0 // pred_fallthru
    _
  // Predicated region
  $region34: #{te_bilstm_forward.3} parent=0 // pred_check
    _
  $region35: #{te_bilstm_forward.3} parent=0 // pred_check_branch
    %35 = sbr.rel (0) target = $region37
  $region36: #{te_bilstm_forward.3} parent=0 // pred_region
    _
  $region37: #{te_bilstm_forward.3} parent=0 // pred_fallthru
    _
  // Predicated region
  $region38: #{te_bilstm_forward.3} parent=0 // pred_check
    _
  $region39: #{te_bilstm_forward.3} parent=0 // pred_check_branch
    %37 = sbr.rel (0) target = $region41
  $region40: #{te_bilstm_forward.3} parent=0 // pred_region
    _
  $region41: #{te_bilstm_forward.3} parent=0 // pred_fallthru
    _
  // Predicated region
  $region42: #{te_bilstm_forward.3} parent=0 // pred_check
    _
  $region43: #{te_bilstm_forward.3} parent=0 // pred_check_branch
    %39 = sbr.rel (0) target = $region45
  $region44: #{te_bilstm_forward.3} parent=0 // pred_region
    _
  $region45: #{te_bilstm_forward.3} parent=0 // pred_fallthru
    _
  // Predicated region
  $region46: #{te_bilstm_forward.3} parent=0 // pred_check
    _
  $region47: #{te_bilstm_forward.3} parent=0 // pred_check_branch
    %41 = sbr.rel (0) target = $region49
  $region48: #{te_bilstm_forward.3} parent=0 // pred_region
    _
  $region49: #{te_bilstm_forward.3} parent=0 // pred_fallthru
    _
  // Predicated region
  $region50: #{te_bilstm_forward.3} parent=0 // pred_check
    _
  $region51: #{te_bilstm_forward.3} parent=0 // pred_check_branch
    %43 = sbr.rel (0) target = $region53
  $region52: #{te_bilstm_forward.3} parent=0 // pred_region
    _
  $region53: #{te_bilstm_forward.3} parent=0 // pred_fallthru
    _
  %v45 = vld [vmem:[%s0] sm:$0xff]
  %v46 = vld [vmem:[%s0 + $0x8] sm:$0xff]
  %v47 = vpack.c.bf16 %v46, %v45
  %v48 = vld [vmem:[%s1] sm:$0xff]
  %v49 = vld [vmem:[%s1 + $0x8] sm:$0xff]
  %v50 = vld [vmem:[%s1 + $0x10] sm:$0xff]
  %v51 = vld [vmem:[%s1 + $0x18] sm:$0xff]
  %v52 = vld [vmem:[%s1 + $0x20] sm:$0xff]
  %v53 = vld [vmem:[%s1 + $0x28] sm:$0xff]
  %v54 = vld [vmem:[%s1 + $0x30] sm:$0xff]
  %v55 = vld [vmem:[%s1 + $0x38] sm:$0xff]
  %v56 = vld [vmem:[%s2] sm:$0x3]
  %v58 = vperm.slane %v56, 0
  %v59 = vperm.slane %v56, 1
  %v70 = vunpack.c.l.b16 %v48
  %v71 = vunpack.c.h.b16 %v48
  %v72 = vunpack.c.l.b16 %v49
  %v73 = vunpack.c.h.b16 %v49
  %v74 = vunpack.c.l.b16 %v50
  %v75 = vunpack.c.h.b16 %v50
  %v76 = vunpack.c.l.b16 %v51
  %v77 = vunpack.c.h.b16 %v51
  %v78 = vunpack.c.l.b16 %v52
  %v79 = vunpack.c.h.b16 %v52
  %v80 = vunpack.c.l.b16 %v53
  %v81 = vunpack.c.h.b16 %v53
  %v82 = vunpack.c.l.b16 %v54
  %v83 = vunpack.c.h.b16 %v54
  %v84 = vunpack.c.l.b16 %v55
  %v85 = vunpack.c.h.b16 %v55
  %v86 = vpack.c.b16 %v72, %v70
  %v87 = vpack.c.b16 %v73, %v71
  %v88 = vpack.c.b16 %v76, %v74
  %v89 = vpack.c.b16 %v77, %v75
  %v90 = vpack.c.b16 %v80, %v78
  %v91 = vpack.c.b16 %v81, %v79
  %v92 = vpack.c.b16 %v84, %v82
  %v93 = vpack.c.b16 %v85, %v83
  %vm102 = vcmask 523264
  %v104 = vsel %vm102, %v47, 0
  %106 = vmatpush.bf16.msra.mxu0 0
  %107 = vmatpush.bf16.msra.mxu0 0
  %108 = vmatpush.bf16.msra.mxu0 0
  %109 = vmatpush.bf16.msra.mxu0 0
  %110 = vmatpush.bf16.msra.mxu0 %v92
  %111 = vmatpush.bf16.msra.mxu0 %v90
  %112 = vmatpush.bf16.msra.mxu0 %v88
  %113 = vmatpush.bf16.msra.mxu0 %v86
  %114 = vmatmul.bf16.gmra.mxu0 %v104
  %v115 = vpop.f32.mrf.mxu0
  %v116 = vadd.f32 %v58, %v115
  %v117 = vpop.f32.mrf.mxu0
  %v118 = vadd.f32 %v58, %v117
  %119 = vdwg.mxu0
  %120 = vmatpush.bf16.msra.mxu0 0
  %121 = vmatpush.bf16.msra.mxu0 0
  %122 = vmatpush.bf16.msra.mxu0 0
  %123 = vmatpush.bf16.msra.mxu0 0
  %124 = vmatpush.bf16.msra.mxu0 %v93
  %125 = vmatpush.bf16.msra.mxu0 %v91
  %126 = vmatpush.bf16.msra.mxu0 %v89
  %127 = vmatpush.bf16.msra.mxu0 %v87
  %128 = vmatmul.bf16.gmra.mxu0 %v104
  %v129 = vpop.f32.mrf.mxu0
  %v130 = vadd.f32 %v59, %v129
  %v131 = vpop.f32.mrf.mxu0
  %v132 = vadd.f32 %v59, %v131
  %133 = vdwg.mxu0
  %v134 = vpack.c.bf16 %v116, %v116
  %v135 = vpack.c.bf16 %v118, %v118
  %v136 = vpack.c.bf16 %v130, %v130
  %v137 = vpack.c.bf16 %v132, %v132
  %v139 = vunpack.c.l.b16 %v134
  %v140 = vpack.c.b16 %v139, %v139
  %141 = vrot.lane.b32.xlu0 %v140, 64
  %v142 = vpop.permute.xlu0 %141
  %vm143 = vcmask 130048
  %v145 = vsel %vm143, %v134, 0
  %v148 = vsel %vm143, %v142, 0
  %150 = vmatpush.bf16.xpose.msra.mxu0 0
  %151 = vmatpush.bf16.xpose.msra.mxu0 0
  %152 = vmatpush.bf16.xpose.msra.mxu0 0
  %153 = vmatpush.bf16.xpose.msra.mxu0 0
  %154 = vmatpush.bf16.xpose.msra.mxu0 0
  %155 = vmatpush.bf16.xpose.msra.mxu0 0
  %156 = vmatpush.bf16.xpose.msra.mxu0 0
  %157 = vmatpush.bf16.xpose.msra.mxu0 %v148
  %158 = vmatmul.bf16.gmra.mxu0 %v145
  %v159 = vpop.f32.mrf.mxu0
  %v160 = vadd.f32 0.0, %v159
  %v161 = vpop.f32.mrf.mxu0
  %162 = vdwg.mxu0
  %v164 = vunpack.c.l.b16 %v135
  %v165 = vpack.c.b16 %v164, %v164
  %166 = vrot.lane.b32.xlu0 %v165, 64
  %v167 = vpop.permute.xlu0 %166
  %v169 = vsel %vm143, %v135, 0
  %v172 = vsel %vm143, %v167, 0
  %174 = vmatpush.bf16.xpose.msra.mxu0 0
  %175 = vmatpush.bf16.xpose.msra.mxu0 0
  %176 = vmatpush.bf16.xpose.msra.mxu0 0
  %177 = vmatpush.bf16.xpose.msra.mxu0 0
  %178 = vmatpush.bf16.xpose.msra.mxu0 0
  %179 = vmatpush.bf16.xpose.msra.mxu0 0
  %180 = vmatpush.bf16.xpose.msra.mxu0 0
  %181 = vmatpush.bf16.xpose.msra.mxu0 %v172
  %182 = vmatmul.bf16.gmra.mxu0 %v169
  %v183 = vpop.f32.mrf.mxu0
  %v184 = vadd.f32 0.0, %v183
  %v185 = vpop.f32.mrf.mxu0
  %186 = vdwg.mxu0
  %vm187 = vcmask 64512
  %v188 = vsel %vm187, %v160, -inf
  %189 = vmax.xlane.f32.xlu0 %v188
  %v190 = vpop.xlane.xlu0 %189
  %v191 = vsel %vm187, %v184, -inf
  %192 = vmax.xlane.f32.xlu0 %v191
  %v193 = vpop.xlane.xlu0 %192
  %v194 = vsub.f32 %v160, %v190
  %v195 = vsub.f32 %v184, %v193
  %v196 = vmul.f32 %v194, 1.442695
  %v197 = vpow.pop %v196
  %v198 = vmul.f32 %v195, 1.442695
  %v199 = vpow.pop %v198
  %v200 = vsel %vm187, %v197, 0.0
  %201 = vadd.xlane.f32.xlu0 %v200
  %v202 = vpop.xlane.xlu0 %201
  %v203 = vsel %vm187, %v199, 0.0
  %204 = vadd.xlane.f32.xlu0 %v203
  %v205 = vpop.xlane.xlu0 %204
  %v206 = vpack.c.bf16 %v197, %v197
  %v207 = vpack.c.bf16 %v199, %v199
  %v209 = vsel %vm187, %v206, 0
  %vm211 = vcmask 1043456
  %v213 = vsel %vm211, %v136, 0
  %215 = vmatpush.bf16.msra.mxu0 0
  %216 = vmatpush.bf16.msra.mxu0 0
  %217 = vmatpush.bf16.msra.mxu0 0
  %218 = vmatpush.bf16.msra.mxu0 0
  %219 = vmatpush.bf16.msra.mxu0 0
  %220 = vmatpush.bf16.msra.mxu0 0
  %221 = vmatpush.bf16.msra.mxu0 0
  %222 = vmatpush.bf16.msra.mxu0 %v213
  %223 = vmatmul.bf16.gmra.mxu0 %v209
  %v224 = vpop.f32.mrf.mxu0
  %v225 = vadd.f32 0.0, %v224
  %v226 = vpop.f32.mrf.mxu0
  %227 = vdwg.mxu0
  %v229 = vsel %vm187, %v207, 0
  %v232 = vsel %vm211, %v137, 0
  %234 = vmatpush.bf16.msra.mxu0 0
  %235 = vmatpush.bf16.msra.mxu0 0
  %236 = vmatpush.bf16.msra.mxu0 0
  %237 = vmatpush.bf16.msra.mxu0 0
  %238 = vmatpush.bf16.msra.mxu0 0
  %239 = vmatpush.bf16.msra.mxu0 0
  %240 = vmatpush.bf16.msra.mxu0 0
  %241 = vmatpush.bf16.msra.mxu0 %v232
  %242 = vmatmul.bf16.gmra.mxu0 %v229
  %v243 = vpop.f32.mrf.mxu0
  %v244 = vadd.f32 0.0, %v243
  %v245 = vpop.f32.mrf.mxu0
  %246 = vdwg.mxu0
  %v247 = vrcp.pop %v202
  %v248 = vrcp.pop %v205
  %v249 = vmul.f32 %v225, %v247
  %v250 = vmul.f32 %v244, %v248
  %251 = vst.msk [vmem:[#allocation2] sm:$0xff] %vm143, %v249
  %252 = vst.msk [vmem:[#allocation2 + $0x8] sm:$0xff] %vm143, %v250
  %253 = vrot.lane.b32.xlu0 %v140, 112
  %v254 = vpop.permute.xlu0 %253
  %255 = vrot.lane.b32.xlu0 %v140, 48
  %v256 = vpop.permute.xlu0 %255
  %v258 = vsel %vm143, %v254, 0
  %v261 = vsel %vm143, %v256, 0
  %263 = vmatpush.bf16.xpose.msra.mxu0 0
  %264 = vmatpush.bf16.xpose.msra.mxu0 0
  %265 = vmatpush.bf16.xpose.msra.mxu0 0
  %266 = vmatpush.bf16.xpose.msra.mxu0 0
  %267 = vmatpush.bf16.xpose.msra.mxu0 0
  %268 = vmatpush.bf16.xpose.msra.mxu0 0
  %269 = vmatpush.bf16.xpose.msra.mxu0 0
  %270 = vmatpush.bf16.xpose.msra.mxu0 %v261
  %271 = vmatmul.bf16.gmra.mxu0 %v258
  %v272 = vpop.f32.mrf.mxu0
  %v273 = vadd.f32 0.0, %v272
  %v274 = vpop.f32.mrf.mxu0
  %275 = vdwg.mxu0
  %276 = vrot.lane.b32.xlu0 %v165, 112
  %v277 = vpop.permute.xlu0 %276
  %278 = vrot.lane.b32.xlu0 %v165, 48
  %v279 = vpop.permute.xlu0 %278
  %v281 = vsel %vm143, %v277, 0
  %v284 = vsel %vm143, %v279, 0
  %286 = vmatpush.bf16.xpose.msra.mxu0 0
  %287 = vmatpush.bf16.xpose.msra.mxu0 0
  %288 = vmatpush.bf16.xpose.msra.mxu0 0
  %289 = vmatpush.bf16.xpose.msra.mxu0 0
  %290 = vmatpush.bf16.xpose.msra.mxu0 0
  %291 = vmatpush.bf16.xpose.msra.mxu0 0
  %292 = vmatpush.bf16.xpose.msra.mxu0 0
  %293 = vmatpush.bf16.xpose.msra.mxu0 %v284
  %294 = vmatmul.bf16.gmra.mxu0 %v281
  %v295 = vpop.f32.mrf.mxu0
  %v296 = vadd.f32 0.0, %v295
  %v297 = vpop.f32.mrf.mxu0
  %298 = vdwg.mxu0
  %v299 = vsel %vm187, %v273, -inf
  %300 = vmax.xlane.f32.xlu0 %v299
  %v301 = vpop.xlane.xlu0 %300
  %v302 = vsel %vm187, %v296, -inf
  %303 = vmax.xlane.f32.xlu0 %v302
  %v304 = vpop.xlane.xlu0 %303
  %v305 = vsub.f32 %v273, %v301
  %v306 = vsub.f32 %v296, %v304
  %v307 = vmul.f32 %v305, 1.442695
  %v308 = vpow.pop %v307
  %v309 = vmul.f32 %v306, 1.442695
  %v310 = vpow.pop %v309
  %v311 = vsel %vm187, %v308, 0.0
  %312 = vadd.xlane.f32.xlu0 %v311
  %v313 = vpop.xlane.xlu0 %312
  %v314 = vsel %vm187, %v310, 0.0
  %315 = vadd.xlane.f32.xlu0 %v314
  %v316 = vpop.xlane.xlu0 %315
  %v317 = vpack.c.bf16 %v308, %v308
  %v318 = vpack.c.bf16 %v310, %v310
  %v320 = vunpack.c.l.b16 %v136
  %v321 = vpack.c.b16 %v320, %v320
  %322 = vrot.lane.b32.xlu0 %v321, 112
  %v323 = vpop.permute.xlu0 %322
  %v325 = vsel %vm187, %v317, 0
  %v328 = vsel %vm211, %v323, 0
  %330 = vmatpush.bf16.msra.mxu0 0
  %331 = vmatpush.bf16.msra.mxu0 0
  %332 = vmatpush.bf16.msra.mxu0 0
  %333 = vmatpush.bf16.msra.mxu0 0
  %334 = vmatpush.bf16.msra.mxu0 0
  %335 = vmatpush.bf16.msra.mxu0 0
  %336 = vmatpush.bf16.msra.mxu0 0
  %337 = vmatpush.bf16.msra.mxu0 %v328
  %338 = vmatmul.bf16.gmra.mxu0 %v325
  %v339 = vpop.f32.mrf.mxu0
  %v340 = vadd.f32 0.0, %v339
  %v341 = vpop.f32.mrf.mxu0
  %342 = vdwg.mxu0
  %v344 = vunpack.c.l.b16 %v137
  %v345 = vpack.c.b16 %v344, %v344
  %346 = vrot.lane.b32.xlu0 %v345, 112
  %v347 = vpop.permute.xlu0 %346
  %v349 = vsel %vm187, %v318, 0
  %v352 = vsel %vm211, %v347, 0
  %354 = vmatpush.bf16.msra.mxu0 0
  %355 = vmatpush.bf16.msra.mxu0 0
  %356 = vmatpush.bf16.msra.mxu0 0
  %357 = vmatpush.bf16.msra.mxu0 0
  %358 = vmatpush.bf16.msra.mxu0 0
  %359 = vmatpush.bf16.msra.mxu0 0
  %360 = vmatpush.bf16.msra.mxu0 0
  %361 = vmatpush.bf16.msra.mxu0 %v352
  %362 = vmatmul.bf16.gmra.mxu0 %v349
  %v363 = vpop.f32.mrf.mxu0
  %v364 = vadd.f32 0.0, %v363
  %v365 = vpop.f32.mrf.mxu0
  %366 = vdwg.mxu0
  %v367 = vrcp.pop %v313
  %v368 = vrcp.pop %v316
  %v369 = vmul.f32 %v340, %v367
  %v370 = vmul.f32 %v364, %v368
  %373 = vrot.lane.b32.xlu0 %v369, 16
  %v374 = vpop.permute.xlu0 %373
  %375 = vrot.lane.b32.xlu0 %v370, 16
  %v376 = vpop.permute.xlu0 %375
  %vm379 = vcmask 261248
  %380 = vst.msk [vmem:[#allocation2] sm:$0xff] %vm379, %v374
  %381 = vst.msk [vmem:[#allocation2 + $0x8] sm:$0xff] %vm379, %v376
  %382 = vrot.lane.b32.xlu0 %v140, 96
  %v383 = vpop.permute.xlu0 %382
  %384 = vrot.lane.b32.xlu0 %v140, 32
  %v385 = vpop.permute.xlu0 %384
  %v387 = vsel %vm143, %v383, 0
  %v390 = vsel %vm143, %v385, 0
  %392 = vmatpush.bf16.xpose.msra.mxu0 0
  %393 = vmatpush.bf16.xpose.msra.mxu0 0
  %394 = vmatpush.bf16.xpose.msra.mxu0 0
  %395 = vmatpush.bf16.xpose.msra.mxu0 0
  %396 = vmatpush.bf16.xpose.msra.mxu0 0
  %397 = vmatpush.bf16.xpose.msra.mxu0 0
  %398 = vmatpush.bf16.xpose.msra.mxu0 0
  %399 = vmatpush.bf16.xpose.msra.mxu0 %v390
  %400 = vmatmul.bf16.gmra.mxu0 %v387
  %v401 = vpop.f32.mrf.mxu0
  %v402 = vadd.f32 0.0, %v401
  %v403 = vpop.f32.mrf.mxu0
  %404 = vdwg.mxu0
  %405 = vrot.lane.b32.xlu0 %v165, 96
  %v406 = vpop.permute.xlu0 %405
  %407 = vrot.lane.b32.xlu0 %v165, 32
  %v408 = vpop.permute.xlu0 %407
  %v410 = vsel %vm143, %v406, 0
  %v413 = vsel %vm143, %v408, 0
  %415 = vmatpush.bf16.xpose.msra.mxu0 0
  %416 = vmatpush.bf16.xpose.msra.mxu0 0
  %417 = vmatpush.bf16.xpose.msra.mxu0 0
  %418 = vmatpush.bf16.xpose.msra.mxu0 0
  %419 = vmatpush.bf16.xpose.msra.mxu0 0
  %420 = vmatpush.bf16.xpose.msra.mxu0 0
  %421 = vmatpush.bf16.xpose.msra.mxu0 0
  %422 = vmatpush.bf16.xpose.msra.mxu0 %v413
  %423 = vmatmul.bf16.gmra.mxu0 %v410
  %v424 = vpop.f32.mrf.mxu0
  %v425 = vadd.f32 0.0, %v424
  %v426 = vpop.f32.mrf.mxu0
  %427 = vdwg.mxu0
  %v428 = vsel %vm187, %v402, -inf
  %429 = vmax.xlane.f32.xlu0 %v428
  %v430 = vpop.xlane.xlu0 %429
  %v431 = vsel %vm187, %v425, -inf
  %432 = vmax.xlane.f32.xlu0 %v431
  %v433 = vpop.xlane.xlu0 %432
  %v434 = vsub.f32 %v402, %v430
  %v435 = vsub.f32 %v425, %v433
  %v436 = vmul.f32 %v434, 1.442695
  %v437 = vpow.pop %v436
  %v438 = vmul.f32 %v435, 1.442695
  %v439 = vpow.pop %v438
  %v440 = vsel %vm187, %v437, 0.0
  %441 = vadd.xlane.f32.xlu0 %v440
  %v442 = vpop.xlane.xlu0 %441
  %v443 = vsel %vm187, %v439, 0.0
  %444 = vadd.xlane.f32.xlu0 %v443
  %v445 = vpop.xlane.xlu0 %444
  %v446 = vpack.c.bf16 %v437, %v437
  %v447 = vpack.c.bf16 %v439, %v439
  %448 = vrot.lane.b32.xlu0 %v321, 96
  %v449 = vpop.permute.xlu0 %448
  %v451 = vsel %vm187, %v446, 0
  %v454 = vsel %vm211, %v449, 0
  %456 = vmatpush.bf16.msra.mxu0 0
  %457 = vmatpush.bf16.msra.mxu0 0
  %458 = vmatpush.bf16.msra.mxu0 0
  %459 = vmatpush.bf16.msra.mxu0 0
  %460 = vmatpush.bf16.msra.mxu0 0
  %461 = vmatpush.bf16.msra.mxu0 0
  %462 = vmatpush.bf16.msra.mxu0 0
  %463 = vmatpush.bf16.msra.mxu0 %v454
  %464 = vmatmul.bf16.gmra.mxu0 %v451
  %v465 = vpop.f32.mrf.mxu0
  %v466 = vadd.f32 0.0, %v465
  %v467 = vpop.f32.mrf.mxu0
  %468 = vdwg.mxu0
  %469 = vrot.lane.b32.xlu0 %v345, 96
  %v470 = vpop.permute.xlu0 %469
  %v472 = vsel %vm187, %v447, 0
  %v475 = vsel %vm211, %v470, 0
  %477 = vmatpush.bf16.msra.mxu0 0
  %478 = vmatpush.bf16.msra.mxu0 0
  %479 = vmatpush.bf16.msra.mxu0 0
  %480 = vmatpush.bf16.msra.mxu0 0
  %481 = vmatpush.bf16.msra.mxu0 0
  %482 = vmatpush.bf16.msra.mxu0 0
  %483 = vmatpush.bf16.msra.mxu0 0
  %484 = vmatpush.bf16.msra.mxu0 %v475
  %485 = vmatmul.bf16.gmra.mxu0 %v472
  %v486 = vpop.f32.mrf.mxu0
  %v487 = vadd.f32 0.0, %v486
  %v488 = vpop.f32.mrf.mxu0
  %489 = vdwg.mxu0
  %v490 = vrcp.pop %v442
  %v491 = vrcp.pop %v445
  %v492 = vmul.f32 %v466, %v490
  %v493 = vmul.f32 %v487, %v491
  %496 = vrot.lane.b32.xlu0 %v492, 32
  %v497 = vpop.permute.xlu0 %496
  %498 = vrot.lane.b32.xlu0 %v493, 32
  %v499 = vpop.permute.xlu0 %498
  %vm502 = vcmask 392448
  %503 = vst.msk [vmem:[#allocation2] sm:$0xff] %vm502, %v497
  %504 = vst.msk [vmem:[#allocation2 + $0x8] sm:$0xff] %vm502, %v499
  %505 = vrot.lane.b32.xlu0 %v140, 80
  %v506 = vpop.permute.xlu0 %505
  %507 = vrot.lane.b32.xlu0 %v140, 16
  %v508 = vpop.permute.xlu0 %507
  %v510 = vsel %vm143, %v506, 0
  %v513 = vsel %vm143, %v508, 0
  %515 = vmatpush.bf16.xpose.msra.mxu0 0
  %516 = vmatpush.bf16.xpose.msra.mxu0 0
  %517 = vmatpush.bf16.xpose.msra.mxu0 0
  %518 = vmatpush.bf16.xpose.msra.mxu0 0
  %519 = vmatpush.bf16.xpose.msra.mxu0 0
  %520 = vmatpush.bf16.xpose.msra.mxu0 0
  %521 = vmatpush.bf16.xpose.msra.mxu0 0
  %522 = vmatpush.bf16.xpose.msra.mxu0 %v513
  %523 = vmatmul.bf16.gmra.mxu0 %v510
  %v524 = vpop.f32.mrf.mxu0
  %v525 = vadd.f32 0.0, %v524
  %v526 = vpop.f32.mrf.mxu0
  %527 = vdwg.mxu0
  %528 = vrot.lane.b32.xlu0 %v165, 80
  %v529 = vpop.permute.xlu0 %528
  %530 = vrot.lane.b32.xlu0 %v165, 16
  %v531 = vpop.permute.xlu0 %530
  %v533 = vsel %vm143, %v529, 0
  %v536 = vsel %vm143, %v531, 0
  %538 = vmatpush.bf16.xpose.msra.mxu0 0
  %539 = vmatpush.bf16.xpose.msra.mxu0 0
  %540 = vmatpush.bf16.xpose.msra.mxu0 0
  %541 = vmatpush.bf16.xpose.msra.mxu0 0
  %542 = vmatpush.bf16.xpose.msra.mxu0 0
  %543 = vmatpush.bf16.xpose.msra.mxu0 0
  %544 = vmatpush.bf16.xpose.msra.mxu0 0
  %545 = vmatpush.bf16.xpose.msra.mxu0 %v536
  %546 = vmatmul.bf16.gmra.mxu0 %v533
  %v547 = vpop.f32.mrf.mxu0
  %v548 = vadd.f32 0.0, %v547
  %v549 = vpop.f32.mrf.mxu0
  %550 = vdwg.mxu0
  %v551 = vsel %vm187, %v525, -inf
  %552 = vmax.xlane.f32.xlu0 %v551
  %v553 = vpop.xlane.xlu0 %552
  %v554 = vsel %vm187, %v548, -inf
  %555 = vmax.xlane.f32.xlu0 %v554
  %v556 = vpop.xlane.xlu0 %555
  %v557 = vsub.f32 %v525, %v553
  %v558 = vsub.f32 %v548, %v556
  %v559 = vmul.f32 %v557, 1.442695
  %v560 = vpow.pop %v559
  %v561 = vmul.f32 %v558, 1.442695
  %v562 = vpow.pop %v561
  %v563 = vsel %vm187, %v560, 0.0
  %564 = vadd.xlane.f32.xlu0 %v563
  %v565 = vpop.xlane.xlu0 %564
  %v566 = vsel %vm187, %v562, 0.0
  %567 = vadd.xlane.f32.xlu0 %v566
  %v568 = vpop.xlane.xlu0 %567
  %v569 = vpack.c.bf16 %v560, %v560
  %v570 = vpack.c.bf16 %v562, %v562
  %571 = vrot.lane.b32.xlu0 %v321, 80
  %v572 = vpop.permute.xlu0 %571
  %v574 = vsel %vm187, %v569, 0
  %v577 = vsel %vm211, %v572, 0
  %579 = vmatpush.bf16.msra.mxu0 0
  %580 = vmatpush.bf16.msra.mxu0 0
  %581 = vmatpush.bf16.msra.mxu0 0
  %582 = vmatpush.bf16.msra.mxu0 0
  %583 = vmatpush.bf16.msra.mxu0 0
  %584 = vmatpush.bf16.msra.mxu0 0
  %585 = vmatpush.bf16.msra.mxu0 0
  %586 = vmatpush.bf16.msra.mxu0 %v577
  %587 = vmatmul.bf16.gmra.mxu0 %v574
  %v588 = vpop.f32.mrf.mxu0
  %v589 = vadd.f32 0.0, %v588
  %v590 = vpop.f32.mrf.mxu0
  %591 = vdwg.mxu0
  %592 = vrot.lane.b32.xlu0 %v345, 80
  %v593 = vpop.permute.xlu0 %592
  %v595 = vsel %vm187, %v570, 0
  %v598 = vsel %vm211, %v593, 0
  %600 = vmatpush.bf16.msra.mxu0 0
  %601 = vmatpush.bf16.msra.mxu0 0
  %602 = vmatpush.bf16.msra.mxu0 0
  %603 = vmatpush.bf16.msra.mxu0 0
  %604 = vmatpush.bf16.msra.mxu0 0
  %605 = vmatpush.bf16.msra.mxu0 0
  %606 = vmatpush.bf16.msra.mxu0 0
  %607 = vmatpush.bf16.msra.mxu0 %v598
  %608 = vmatmul.bf16.gmra.mxu0 %v595
  %v609 = vpop.f32.mrf.mxu0
  %v610 = vadd.f32 0.0, %v609
  %v611 = vpop.f32.mrf.mxu0
  %612 = vdwg.mxu0
  %v613 = vrcp.pop %v565
  %v614 = vrcp.pop %v568
  %v615 = vmul.f32 %v589, %v613
  %v616 = vmul.f32 %v610, %v614
  %619 = vrot.lane.b32.xlu0 %v615, 48
  %v620 = vpop.permute.xlu0 %619
  %621 = vrot.lane.b32.xlu0 %v616, 48
  %v622 = vpop.permute.xlu0 %621
  %vm625 = vcmask 523648
  %626 = vst.msk [vmem:[#allocation2] sm:$0xff] %vm625, %v620
  %627 = vst.msk [vmem:[#allocation2 + $0x8] sm:$0xff] %vm625, %v622
  %v628 = vld [vmem:[#allocation2] sm:$0xff]
  %v629 = vld [vmem:[#allocation2 + $0x8] sm:$0xff]
  %v630 = vpack.c.bf16 %v629, %v628
  %v631 = vld [vmem:[%s3] sm:$0xf]
  %v632 = vld [vmem:[%s3 + $0x4] sm:$0xf]
  %v633 = vld [vmem:[%s3 + $0x8] sm:$0xf]
  %v634 = vld [vmem:[%s3 + $0xc] sm:$0xf]
  %v635 = vld [vmem:[%s3 + $0x10] sm:$0xf]
  %v636 = vld [vmem:[%s3 + $0x14] sm:$0xf]
  %v637 = vld [vmem:[%s3 + $0x18] sm:$0xf]
  %v638 = vld [vmem:[%s3 + $0x1c] sm:$0xf]
  %v639 = vld [vmem:[%s4] sm:$0x1]
  %v641 = vperm.slane %v639, 0
  %v651 = vunpack.c.l.b16 %v631
  %v652 = vunpack.c.l.b16 %v632
  %v653 = vunpack.c.l.b16 %v633
  %v654 = vunpack.c.l.b16 %v634
  %v655 = vunpack.c.l.b16 %v635
  %v656 = vunpack.c.l.b16 %v636
  %v657 = vunpack.c.l.b16 %v637
  %v658 = vunpack.c.l.b16 %v638
  %v659 = vpack.c.b16 %v652, %v651
  %v660 = vpack.c.b16 %v654, %v653
  %v661 = vpack.c.b16 %v656, %v655
  %v662 = vpack.c.b16 %v658, %v657
  %v668 = vsel %vm102, %v630, 0
  %670 = vmatpush.bf16.msra.mxu0 0
  %671 = vmatpush.bf16.msra.mxu0 0
  %672 = vmatpush.bf16.msra.mxu0 0
  %673 = vmatpush.bf16.msra.mxu0 0
  %674 = vmatpush.bf16.msra.mxu0 %v662
  %675 = vmatpush.bf16.msra.mxu0 %v661
  %676 = vmatpush.bf16.msra.mxu0 %v660
  %677 = vmatpush.bf16.msra.mxu0 %v659
  %678 = vmatmul.bf16.gmra.mxu0 %v668
  %v679 = vpop.f32.mrf.mxu0
  %v680 = vadd.f32 %v641, %v679
  %v681 = vpop.f32.mrf.mxu0
  %v682 = vadd.f32 %v641, %v681
  %683 = vdwg.mxu0
  %v684 = vadd.f32 %v680, %v45
  %v685 = vadd.f32 %v682, %v46
  %v686 = vsel %vm102, %v684, 0.0
  %687 = vadd.xlane.f32.xlu0 %v686
  %v688 = vpop.xlane.xlu0 %687
  %v689 = vsel %vm102, %v685, 0.0
  %690 = vadd.xlane.f32.xlu0 %v689
  %v691 = vpop.xlane.xlu0 %690
  %v692 = vrcp.pop 64.0
  %v693 = vmul.f32 64.0, %v692
  %v694 = vsub.f32 1.0, %v693
  %v695 = vmul.f32 %v692, %v694
  %v696 = vadd.f32 %v692, %v695
  %vm697 = vweird.f32 %v692
  %v698 = vsel %vm697, %v692, %v696
  %v699 = vmul.f32 %v688, %v698
  %v700 = vmul.f32 %v691, %v698
  %v701 = vsub.f32 %v684, %v699
  %v702 = vsub.f32 %v685, %v700
  %v703 = vmul.f32 %v701, %v701
  %v704 = vmul.f32 %v702, %v702
  %v705 = vsel %vm102, %v703, 0.0
  %706 = vadd.xlane.f32.xlu0 %v705
  %v707 = vpop.xlane.xlu0 %706
  %v708 = vsel %vm102, %v704, 0.0
  %709 = vadd.xlane.f32.xlu0 %v708
  %v710 = vpop.xlane.xlu0 %709
  %v711 = vmul.f32 %v707, %v698
  %v712 = vmul.f32 %v710, %v698
  %v713 = vadd.f32 %v711, 1e-05
  %v714 = vadd.f32 %v712, 1e-05
  %v715 = vrsqrt.pop %v713
  %v716 = vmul.f32 %v715, %v713
  %v717 = vmul.f32 %v716, %v715
  %v718 = vmul.f32 0.5, %v717
  %v719 = vsub.f32 1.5, %v718
  %v720 = vmul.f32 %v715, %v719
  %vm721 = vweird.f32 %v713
  %vm722 = vweird.f32 %v715
  %vm723 = vmor %vm721, %vm722
  %v724 = vsel %vm723, %v715, %v720
  %v725 = vrsqrt.pop %v714
  %v726 = vmul.f32 %v725, %v714
  %v727 = vmul.f32 %v726, %v725
  %v728 = vmul.f32 0.5, %v727
  %v729 = vsub.f32 1.5, %v728
  %v730 = vmul.f32 %v725, %v729
  %vm731 = vweird.f32 %v714
  %vm732 = vweird.f32 %v725
  %vm733 = vmor %vm731, %vm732
  %v734 = vsel %vm733, %v725, %v730
  %v735 = vmul.f32 %v701, %v724
  %v736 = vmul.f32 %v702, %v734
  %v737 = vld [vmem:[%s5] sm:$0x1]
  %v739 = vperm.slane %v737, 0
  %v741 = vmul.f32 %v735, %v739
  %v742 = vmul.f32 %v736, %v739
  %v743 = vld [vmem:[%s6] sm:$0x1]
  %v745 = vperm.slane %v743, 0
  %v747 = vadd.f32 %v741, %v745
  %v748 = vadd.f32 %v742, %v745
  %v749 = vpack.c.bf16 %v748, %v747
  %v750 = vld [vmem:[%s7] sm:$0xf]
  %v751 = vld [vmem:[%s7 + $0x4] sm:$0xf]
  %v752 = vld [vmem:[%s7 + $0x8] sm:$0xf]
  %v753 = vld [vmem:[%s7 + $0xc] sm:$0xf]
  %v754 = vld [vmem:[%s7 + $0x10] sm:$0xf]
  %v755 = vld [vmem:[%s7 + $0x14] sm:$0xf]
  %v756 = vld [vmem:[%s7 + $0x18] sm:$0xf]
  %v757 = vld [vmem:[%s7 + $0x1c] sm:$0xf]
  %v758 = vld [vmem:[%s8] sm:$0x1]
  %v760 = vperm.slane %v758, 0
  %v770 = vunpack.c.l.b16 %v750
  %v771 = vunpack.c.l.b16 %v751
  %v772 = vunpack.c.l.b16 %v752
  %v773 = vunpack.c.l.b16 %v753
  %v774 = vunpack.c.l.b16 %v754
  %v775 = vunpack.c.l.b16 %v755
  %v776 = vunpack.c.l.b16 %v756
  %v777 = vunpack.c.l.b16 %v757
  %v778 = vpack.c.b16 %v771, %v770
  %v779 = vpack.c.b16 %v773, %v772
  %v780 = vpack.c.b16 %v775, %v774
  %v781 = vpack.c.b16 %v777, %v776
  %v787 = vsel %vm102, %v749, 0
  %789 = vmatpush.bf16.msra.mxu0 0
  %790 = vmatpush.bf16.msra.mxu0 0
  %791 = vmatpush.bf16.msra.mxu0 0
  %792 = vmatpush.bf16.msra.mxu0 0
  %793 = vmatpush.bf16.msra.mxu0 %v781
  %794 = vmatpush.bf16.msra.mxu0 %v780
  %795 = vmatpush.bf16.msra.mxu0 %v779
  %796 = vmatpush.bf16.msra.mxu0 %v778
  %797 = vmatmul.bf16.gmra.mxu0 %v787
  %v798 = vpop.f32.mrf.mxu0
  %v799 = vadd.f32 %v760, %v798
  %v800 = vpop.f32.mrf.mxu0
  %v801 = vadd.f32 %v760, %v800
  %802 = vdwg.mxu0
  %v803 = vmax.f32 %v799, 0.0
  %v804 = vmax.f32 %v801, 0.0
  %v805 = vpack.c.bf16 %v804, %v803
  %v806 = vld [vmem:[%s9] sm:$0xf]
  %v807 = vld [vmem:[%s9 + $0x4] sm:$0xf]
  %v808 = vld [vmem:[%s9 + $0x8] sm:$0xf]
  %v809 = vld [vmem:[%s9 + $0xc] sm:$0xf]
  %v810 = vld [vmem:[%s9 + $0x10] sm:$0xf]
  %v811 = vld [vmem:[%s9 + $0x14] sm:$0xf]
  %v812 = vld [vmem:[%s9 + $0x18] sm:$0xf]
  %v813 = vld [vmem:[%s9 + $0x1c] sm:$0xf]
  %v814 = vld [vmem:[%s10] sm:$0x1]
  %v816 = vperm.slane %v814, 0
  %v826 = vunpack.c.l.b16 %v806
  %v827 = vunpack.c.l.b16 %v807
  %v828 = vunpack.c.l.b16 %v808
  %v829 = vunpack.c.l.b16 %v809
  %v830 = vunpack.c.l.b16 %v810
  %v831 = vunpack.c.l.b16 %v811
  %v832 = vunpack.c.l.b16 %v812
  %v833 = vunpack.c.l.b16 %v813
  %v834 = vpack.c.b16 %v827, %v826
  %v835 = vpack.c.b16 %v829, %v828
  %v836 = vpack.c.b16 %v831, %v830
  %v837 = vpack.c.b16 %v833, %v832
  %v843 = vsel %vm102, %v805, 0
  %845 = vmatpush.bf16.msra.mxu0 0
  %846 = vmatpush.bf16.msra.mxu0 0
  %847 = vmatpush.bf16.msra.mxu0 0
  %848 = vmatpush.bf16.msra.mxu0 0
  %849 = vmatpush.bf16.msra.mxu0 %v837
  %850 = vmatpush.bf16.msra.mxu0 %v836
  %851 = vmatpush.bf16.msra.mxu0 %v835
  %852 = vmatpush.bf16.msra.mxu0 %v834
  %853 = vmatmul.bf16.gmra.mxu0 %v843
  %v854 = vpop.f32.mrf.mxu0
  %v855 = vadd.f32 %v816, %v854
  %v856 = vpop.f32.mrf.mxu0
  %v857 = vadd.f32 %v816, %v856
  %858 = vdwg.mxu0
  %v859 = vadd.f32 %v855, %v747
  %v860 = vadd.f32 %v857, %v748
  %v861 = vsel %vm102, %v859, 0.0
  %862 = vadd.xlane.f32.xlu0 %v861
  %v863 = vpop.xlane.xlu0 %862
  %v864 = vsel %vm102, %v860, 0.0
  %865 = vadd.xlane.f32.xlu0 %v864
  %v866 = vpop.xlane.xlu0 %865
  %v867 = vmul.f32 %v863, %v698
  %v868 = vmul.f32 %v866, %v698
  %v869 = vsub.f32 %v859, %v867
  %v870 = vsub.f32 %v860, %v868
  %v871 = vmul.f32 %v869, %v869
  %v872 = vmul.f32 %v870, %v870
  %v873 = vsel %vm102, %v871, 0.0
  %874 = vadd.xlane.f32.xlu0 %v873
  %v875 = vpop.xlane.xlu0 %874
  %v876 = vsel %vm102, %v872, 0.0
  %877 = vadd.xlane.f32.xlu0 %v876
  %v878 = vpop.xlane.xlu0 %877
  %v879 = vmul.f32 %v875, %v698
  %v880 = vmul.f32 %v878, %v698
  %v881 = vadd.f32 %v879, 1e-05
  %v882 = vadd.f32 %v880, 1e-05
  %v883 = vrsqrt.pop %v881
  %v884 = vmul.f32 %v883, %v881
  %v885 = vmul.f32 %v884, %v883
  %v886 = vmul.f32 0.5, %v885
  %v887 = vsub.f32 1.5, %v886
  %v888 = vmul.f32 %v883, %v887
  %vm889 = vweird.f32 %v881
  %vm890 = vweird.f32 %v883
  %vm891 = vmor %vm889, %vm890
  %v892 = vsel %vm891, %v883, %v888
  %v893 = vrsqrt.pop %v882
  %v894 = vmul.f32 %v893, %v882
  %v895 = vmul.f32 %v894, %v893
  %v896 = vmul.f32 0.5, %v895
  %v897 = vsub.f32 1.5, %v896
  %v898 = vmul.f32 %v893, %v897
  %vm899 = vweird.f32 %v882
  %vm900 = vweird.f32 %v893
  %vm901 = vmor %vm899, %vm900
  %v902 = vsel %vm901, %v893, %v898
  %v903 = vmul.f32 %v869, %v892
  %v904 = vmul.f32 %v870, %v902
  %v905 = vld [vmem:[%s11] sm:$0x1]
  %v907 = vperm.slane %v905, 0
  %v909 = vmul.f32 %v903, %v907
  %v910 = vmul.f32 %v904, %v907
  %v911 = vld [vmem:[%s12] sm:$0x1]
  %v913 = vperm.slane %v911, 0
  %v915 = vadd.f32 %v909, %v913
  %v916 = vadd.f32 %v910, %v913
  %917 = vst.msk [vmem:[%s13] sm:$0xff] %vm102, %v915
  %918 = vst.msk [vmem:[%s13 + $0x8] sm:$0xff] %vm102, %v916
  // Predicated region
  $region54: #{te_bilstm_forward.3} parent=0 // pred_check
    _
  $region55: #{te_bilstm_forward.3} parent=0 // pred_check_branch
    %920 = sbr.rel (0) target = $region57
  $region56: #{te_bilstm_forward.3} parent=0 // pred_region
    _
  $region57: #{te_bilstm_forward.3} parent=0 // pred_fallthru
    _
  // Predicated region
  $region58: #{te_bilstm_forward.3} parent=0 // pred_check
    _
  $region59: #{te_bilstm_forward.3} parent=0 // pred_check_branch
    %922 = sbr.rel (0) target = $region61
  $region60: #{te_bilstm_forward.3} parent=0 // pred_region
    _
  $region61: #{te_bilstm_forward.3} parent=0 // pred_fallthru
    _

// kernel: te_bilstm_forward.5
$region0: #{te_bilstm_forward.5}
  #allocation0 [shape = 'u32[]', space=smem, size = 0x4, offset = 0x4, fixed_abs, tag = 'smem constant byte address 0x4 - core index']
  #allocation1 [shape = 'u32[72,128]{1,0:T(1,128)}', space=vmem, size = 0x9000, scoped, tag = 'internal scratch']
  #allocation2 [shape = 'f32[16,64]{1,0:T(8,128)}', space=vmem, size = 0x2000, scoped, tag = 'scratch operand']
  #allocation3 [shape = 'f32[1,1]{1,0:T(1,128)S(1)}', space=vmem, size = 0x200, scoped, tag = 'scoped memory for te_bilstm_forward.5']
  %s0 = inlined_call_operand.vmem [shape: f32[16,64], index: 0, kind: input, shape index: {}]
  %s1 = inlined_call_operand.vmem [shape: bf16[64,256], index: 1, kind: input, shape index: {}]
  %s2 = inlined_call_operand.vmem [shape: bf16[64,256], index: 2, kind: input, shape index: {}]
  %s3 = inlined_call_operand.vmem [shape: f32[1,256], index: 3, kind: input, shape index: {}]
  %s4 = inlined_call_operand.vmem [shape: bf16[64,256], index: 4, kind: input, shape index: {}]
  %s5 = inlined_call_operand.vmem [shape: bf16[64,256], index: 5, kind: input, shape index: {}]
  %s6 = inlined_call_operand.vmem [shape: f32[1,256], index: 6, kind: input, shape index: {}]
  %s7 = inlined_call_operand.vmem [shape: bf16[64,1], index: 7, kind: input, shape index: {}]
  %s8 = inlined_call_operand.<no memory space> [shape: f32[1,1], index: 8, kind: input, shape index: {}]
  %s9 = inlined_call_operand.vmem [shape: f32[2,1], index: 9, kind: output, shape index: {}]
  %s10 = sld [smem:[#allocation0]]
  $region46: #{te_bilstm_forward.5} parent=0
    _
  %s12 = ssub.s32 1, %s10
  %s13 = scalar_select 0, %s12, %s10
  %v14 = vstv %s8
  %15 = vst [vmem:[#allocation3] sm:$0x1] %v14
  // Predicated region
  $region2: #{te_bilstm_forward.5} parent=0 // pred_check
    _
  $region3: #{te_bilstm_forward.5} parent=0 // pred_check_branch
    %17 = sbr.rel (0) target = $region5
  $region4: #{te_bilstm_forward.5} parent=0 // pred_region
    _
  $region5: #{te_bilstm_forward.5} parent=0 // pred_fallthru
    _
  // Predicated region
  $region6: #{te_bilstm_forward.5} parent=0 // pred_check
    _
  $region7: #{te_bilstm_forward.5} parent=0 // pred_check_branch
    %19 = sbr.rel (0) target = $region9
  $region8: #{te_bilstm_forward.5} parent=0 // pred_region
    _
  $region9: #{te_bilstm_forward.5} parent=0 // pred_fallthru
    _
  // Predicated region
  $region10: #{te_bilstm_forward.5} parent=0 // pred_check
    _
  $region11: #{te_bilstm_forward.5} parent=0 // pred_check_branch
    %21 = sbr.rel (0) target = $region13
  $region12: #{te_bilstm_forward.5} parent=0 // pred_region
    _
  $region13: #{te_bilstm_forward.5} parent=0 // pred_fallthru
    _
  // Predicated region
  $region14: #{te_bilstm_forward.5} parent=0 // pred_check
    _
  $region15: #{te_bilstm_forward.5} parent=0 // pred_check_branch
    %23 = sbr.rel (0) target = $region17
  $region16: #{te_bilstm_forward.5} parent=0 // pred_region
    _
  $region17: #{te_bilstm_forward.5} parent=0 // pred_fallthru
    _
  // Predicated region
  $region18: #{te_bilstm_forward.5} parent=0 // pred_check
    _
  $region19: #{te_bilstm_forward.5} parent=0 // pred_check_branch
    %25 = sbr.rel (0) target = $region21
  $region20: #{te_bilstm_forward.5} parent=0 // pred_region
    _
  $region21: #{te_bilstm_forward.5} parent=0 // pred_fallthru
    _
  // Predicated region
  $region22: #{te_bilstm_forward.5} parent=0 // pred_check
    _
  $region23: #{te_bilstm_forward.5} parent=0 // pred_check_branch
    %27 = sbr.rel (0) target = $region25
  $region24: #{te_bilstm_forward.5} parent=0 // pred_region
    _
  $region25: #{te_bilstm_forward.5} parent=0 // pred_fallthru
    _
  // Predicated region
  $region26: #{te_bilstm_forward.5} parent=0 // pred_check
    _
  $region27: #{te_bilstm_forward.5} parent=0 // pred_check_branch
    %29 = sbr.rel (0) target = $region29
  $region28: #{te_bilstm_forward.5} parent=0 // pred_region
    _
  $region29: #{te_bilstm_forward.5} parent=0 // pred_fallthru
    _
  // Predicated region
  $region30: #{te_bilstm_forward.5} parent=0 // pred_check
    _
  $region31: #{te_bilstm_forward.5} parent=0 // pred_check_branch
    %31 = sbr.rel (0) target = $region33
  $region32: #{te_bilstm_forward.5} parent=0 // pred_region
    _
  $region33: #{te_bilstm_forward.5} parent=0 // pred_fallthru
    _
  // Predicated region
  $region34: #{te_bilstm_forward.5} parent=0 // pred_check
    _
  $region35: #{te_bilstm_forward.5} parent=0 // pred_check_branch
    %33 = sbr.rel (0) target = $region37
  $region36: #{te_bilstm_forward.5} parent=0 // pred_region
    _
  $region37: #{te_bilstm_forward.5} parent=0 // pred_fallthru
    _
  %v35 = vlaneseq
  %v36 = vand.u32 %v35, 127
  %v37 = vadd.s32 %v36, 128
  %vm38 = vcmp.lt.s32.totalorder %v36, 0
  %v39 = vsub.s32 0, %v36
  %v40 = vsel %vm38, %v39, %v36
  %v41 = vshrl.u32 %v40, 6
  %v42 = vand.u32 %v40, 63
  %v43 = vsub.s32 0, %v42
  %v44 = vsel %vm38, %v43, %v42
  %vm45 = vcmp.lt.s32.totalorder %v37, 0
  %v46 = vsub.s32 0, %v37
  %v47 = vsel %vm45, %v46, %v37
  %v48 = vshrl.u32 %v47, 6
  %v49 = vand.u32 %v47, 63
  %v50 = vsub.s32 0, %v49
  %v51 = vsel %vm45, %v50, %v49
  %vm52 = vcmp.ne.s32.totalorder %v44, 0
  %vm53 = vcmp.ne.s32.totalorder %v51, 0
  %vm54 = vcmp.lt.s32.totalorder %v44, 0
  %vm55 = vcmp.lt.s32.totalorder %v51, 0
  %vm56 = vmand %vm54, %vm52
  %vm57 = vmand %vm55, %vm53
  %v58 = vadd.s32 %v44, 64
  %v59 = vadd.s32 %v51, 64
  %v60 = vsel %vm56, %v58, %v44
  %v61 = vsel %vm57, %v59, %v51
  %vm62 = vcmp.lt.s32.totalorder %v60, 32
  %vm63 = vcmp.lt.s32.totalorder %v61, 32
  %vm64 = vcmp.lt.s32.totalorder %v36, 32
  %v65 = vld [vmem:[%s0] sm:$0xff]
  %v66 = vld [vmem:[%s0 + $0x8] sm:$0xff]
  %v67 = vpack.c.bf16 %v66, %v65
  %v68 = vld [vmem:[%s1] sm:$0xff]
  %v69 = vld [vmem:[%s1 + $0x8] sm:$0xff]
  %v70 = vld [vmem:[%s1 + $0x10] sm:$0xff]
  %v71 = vld [vmem:[%s1 + $0x18] sm:$0xff]
  %v72 = vld [vmem:[%s1 + $0x20] sm:$0xff]
  %v73 = vld [vmem:[%s1 + $0x28] sm:$0xff]
  %v74 = vld [vmem:[%s1 + $0x30] sm:$0xff]
  %v75 = vld [vmem:[%s1 + $0x38] sm:$0xff]
  %v76 = vld [vmem:[%s3] sm:$0x3]
  %v78 = vperm.slane %v76, 0
  %v79 = vperm.slane %v76, 1
  %v90 = vunpack.c.l.b16 %v68
  %v91 = vunpack.c.h.b16 %v68
  %v92 = vunpack.c.l.b16 %v69
  %v93 = vunpack.c.h.b16 %v69
  %v94 = vunpack.c.l.b16 %v70
  %v95 = vunpack.c.h.b16 %v70
  %v96 = vunpack.c.l.b16 %v71
  %v97 = vunpack.c.h.b16 %v71
  %v98 = vunpack.c.l.b16 %v72
  %v99 = vunpack.c.h.b16 %v72
  %v100 = vunpack.c.l.b16 %v73
  %v101 = vunpack.c.h.b16 %v73
  %v102 = vunpack.c.l.b16 %v74
  %v103 = vunpack.c.h.b16 %v74
  %v104 = vunpack.c.l.b16 %v75
  %v105 = vunpack.c.h.b16 %v75
  %v106 = vpack.c.b16 %v92, %v90
  %v107 = vpack.c.b16 %v93, %v91
  %v108 = vpack.c.b16 %v96, %v94
  %v109 = vpack.c.b16 %v97, %v95
  %v110 = vpack.c.b16 %v100, %v98
  %v111 = vpack.c.b16 %v101, %v99
  %v112 = vpack.c.b16 %v104, %v102
  %v113 = vpack.c.b16 %v105, %v103
  %vm122 = vcmask 523264
  %v124 = vsel %vm122, %v67, 0
  %126 = vmatpush.bf16.msra.mxu0 0
  %127 = vmatpush.bf16.msra.mxu0 0
  %128 = vmatpush.bf16.msra.mxu0 0
  %129 = vmatpush.bf16.msra.mxu0 0
  %130 = vmatpush.bf16.msra.mxu0 %v112
  %131 = vmatpush.bf16.msra.mxu0 %v110
  %132 = vmatpush.bf16.msra.mxu0 %v108
  %133 = vmatpush.bf16.msra.mxu0 %v106
  %134 = vmatmul.bf16.gmra.mxu0 %v124
  %v135 = vpop.f32.mrf.mxu0
  %v136 = vadd.f32 %v78, %v135
  %v137 = vpop.f32.mrf.mxu0
  %v138 = vadd.f32 %v78, %v137
  %139 = vdwg.mxu0
  %140 = vmatpush.bf16.msra.mxu0 0
  %141 = vmatpush.bf16.msra.mxu0 0
  %142 = vmatpush.bf16.msra.mxu0 0
  %143 = vmatpush.bf16.msra.mxu0 0
  %144 = vmatpush.bf16.msra.mxu0 %v113
  %145 = vmatpush.bf16.msra.mxu0 %v111
  %146 = vmatpush.bf16.msra.mxu0 %v109
  %147 = vmatpush.bf16.msra.mxu0 %v107
  %148 = vmatmul.bf16.gmra.mxu0 %v124
  %v149 = vpop.f32.mrf.mxu0
  %v150 = vadd.f32 %v79, %v149
  %v151 = vpop.f32.mrf.mxu0
  %v152 = vadd.f32 %v79, %v151
  %153 = vdwg.mxu0
  %v154 = vld [vmem:[%s2] sm:$0xff]
  %v155 = vld [vmem:[%s2 + $0x8] sm:$0xff]
  %v156 = vld [vmem:[%s2 + $0x10] sm:$0xff]
  %v157 = vld [vmem:[%s2 + $0x18] sm:$0xff]
  %v158 = vld [vmem:[%s2 + $0x20] sm:$0xff]
  %v159 = vld [vmem:[%s2 + $0x28] sm:$0xff]
  %v160 = vld [vmem:[%s2 + $0x30] sm:$0xff]
  %v161 = vld [vmem:[%s2 + $0x38] sm:$0xff]
  %v164 = vrot.slane %v138, 6
  %v165 = vrot.slane %v152, 6
  %v168 = vsel %vm62, %v136, %v164
  %v169 = vsel %vm63, %v150, %v165
  %v178 = vunpack.c.l.b16 %v154
  %v179 = vunpack.c.h.b16 %v154
  %v180 = vunpack.c.l.b16 %v155
  %v181 = vunpack.c.h.b16 %v155
  %v182 = vunpack.c.l.b16 %v156
  %v183 = vunpack.c.h.b16 %v156
  %v184 = vunpack.c.l.b16 %v157
  %v185 = vunpack.c.h.b16 %v157
  %v186 = vunpack.c.l.b16 %v158
  %v187 = vunpack.c.h.b16 %v158
  %v188 = vunpack.c.l.b16 %v159
  %v189 = vunpack.c.h.b16 %v159
  %v190 = vunpack.c.l.b16 %v160
  %v191 = vunpack.c.h.b16 %v160
  %v192 = vunpack.c.l.b16 %v161
  %v193 = vunpack.c.h.b16 %v161
  %v194 = vpack.c.b16 %v180, %v178
  %v195 = vpack.c.b16 %v181, %v179
  %v196 = vpack.c.b16 %v184, %v182
  %v197 = vpack.c.b16 %v185, %v183
  %v198 = vpack.c.b16 %v188, %v186
  %v199 = vpack.c.b16 %v189, %v187
  %v200 = vpack.c.b16 %v192, %v190
  %v201 = vpack.c.b16 %v193, %v191
  %v211 = vsel %vm122, 0, 0
  %213 = vmatpush.bf16.msra.mxu0 0
  %214 = vmatpush.bf16.msra.mxu0 0
  %215 = vmatpush.bf16.msra.mxu0 0
  %216 = vmatpush.bf16.msra.mxu0 0
  %217 = vmatpush.bf16.msra.mxu0 %v200
  %218 = vmatpush.bf16.msra.mxu0 %v198
  %219 = vmatpush.bf16.msra.mxu0 %v196
  %220 = vmatpush.bf16.msra.mxu0 %v194
  %221 = vmatmul.bf16.gmra.mxu0 %v211
  %v222 = vpop.f32.mrf.mxu0
  %v223 = vadd.f32 0.0, %v222
  %v224 = vpop.f32.mrf.mxu0
  %225 = vdwg.mxu0
  %226 = vmatpush.bf16.msra.mxu0 0
  %227 = vmatpush.bf16.msra.mxu0 0
  %228 = vmatpush.bf16.msra.mxu0 0
  %229 = vmatpush.bf16.msra.mxu0 0
  %230 = vmatpush.bf16.msra.mxu0 %v201
  %231 = vmatpush.bf16.msra.mxu0 %v199
  %232 = vmatpush.bf16.msra.mxu0 %v197
  %233 = vmatpush.bf16.msra.mxu0 %v195
  %234 = vmatmul.bf16.gmra.mxu0 %v211
  %v235 = vpop.f32.mrf.mxu0
  %v236 = vadd.f32 0.0, %v235
  %v237 = vpop.f32.mrf.mxu0
  %238 = vdwg.mxu0
  %v239 = vadd.f32 %v168, %v223
  %v240 = vadd.f32 %v169, %v236
  %v241 = vxor.u32 %v239, 2147483648
  %v242 = vxor.u32 %v240, 2147483648
  %v243 = vmul.f32 %v241, 1.442695
  %v244 = vpow.pop %v243
  %v245 = vmul.f32 %v242, 1.442695
  %v246 = vpow.pop %v245
  %v247 = vadd.f32 %v244, 1.0
  %v248 = vadd.f32 %v246, 1.0
  %v249 = vrcp.pop %v247
  %v250 = vmul.f32 %v247, %v249
  %v251 = vsub.f32 1.0, %v250
  %v252 = vmul.f32 %v249, %v251
  %v253 = vadd.f32 %v249, %v252
  %vm254 = vweird.f32 %v247
  %vm255 = vweird.f32 %v249
  %vm256 = vmor %vm254, %vm255
  %v257 = vsel %vm256, %v249, %v253
  %v258 = vand.u32 2147483647, %v247
  %vm259 = vcmp.eq.f32.partialorder %v258, 8.507059e+37
  %v260 = vand.u32 %v247, 2147483648
  %v261 = vor.u32 1.1754944e-38, %v260
  %v262 = vsel %vm259, %v261, %v257
  %v263 = vmul.f32 1.0, %v262
  %v264 = vrcp.pop %v248
  %v265 = vmul.f32 %v248, %v264
  %v266 = vsub.f32 1.0, %v265
  %v267 = vmul.f32 %v264, %v266
  %v268 = vadd.f32 %v264, %v267
  %vm269 = vweird.f32 %v248
  %vm270 = vweird.f32 %v264
  %vm271 = vmor %vm269, %vm270
  %v272 = vsel %vm271, %v264, %v268
  %v273 = vand.u32 2147483647, %v248
  %vm274 = vcmp.eq.f32.partialorder %v273, 8.507059e+37
  %v275 = vand.u32 %v248, 2147483648
  %v276 = vor.u32 1.1754944e-38, %v275
  %v277 = vsel %vm274, %v276, %v272
  %v278 = vmul.f32 1.0, %v277
  %v279 = vtanh.pop %v240
  %v280 = vmul.f32 %v263, 0.0
  %v281 = vmul.f32 %v263, %v279
  %283 = vrot.lane.b32.xlu0 %v281, 64
  %v284 = vpop.permute.xlu0 %283
  %v286 = vadd.f32 %v280, %v284
  %v287 = vtanh.pop %v286
  %v288 = vmul.f32 %v278, %v287
  %v289 = vrot.slane %v138, 2
  %v290 = vrot.slane %v152, 2
  %v293 = vsel %vm62, %v136, %v289
  %v294 = vsel %vm63, %v150, %v290
  %v295 = vpack.c.bf16 %v288, %v288
  %297 = vrot.lane.b32.xlu0 %v295, 64
  %v298 = vpop.permute.xlu0 %297
  %v300 = vsel %vm122, %v298, 0
  %302 = vmatpush.bf16.msra.mxu0 0
  %303 = vmatpush.bf16.msra.mxu0 0
  %304 = vmatpush.bf16.msra.mxu0 0
  %305 = vmatpush.bf16.msra.mxu0 0
  %306 = vmatpush.bf16.msra.mxu0 %v200
  %307 = vmatpush.bf16.msra.mxu0 %v198
  %308 = vmatpush.bf16.msra.mxu0 %v196
  %309 = vmatpush.bf16.msra.mxu0 %v194
  %310 = vmatmul.bf16.gmra.mxu0 %v300
  %v311 = vpop.f32.mrf.mxu0
  %v312 = vadd.f32 0.0, %v311
  %v313 = vpop.f32.mrf.mxu0
  %314 = vdwg.mxu0
  %315 = vmatpush.bf16.msra.mxu0 0
  %316 = vmatpush.bf16.msra.mxu0 0
  %317 = vmatpush.bf16.msra.mxu0 0
  %318 = vmatpush.bf16.msra.mxu0 0
  %319 = vmatpush.bf16.msra.mxu0 %v201
  %320 = vmatpush.bf16.msra.mxu0 %v199
  %321 = vmatpush.bf16.msra.mxu0 %v197
  %322 = vmatpush.bf16.msra.mxu0 %v195
  %323 = vmatmul.bf16.gmra.mxu0 %v300
  %v324 = vpop.f32.mrf.mxu0
  %v325 = vadd.f32 0.0, %v324
  %v326 = vpop.f32.mrf.mxu0
  %327 = vdwg.mxu0
  %v330 = vrot.slane %v312, 6
  %v331 = vrot.slane %v325, 6
  %v334 = vadd.f32 %v293, %v330
  %v335 = vadd.f32 %v294, %v331
  %v336 = vxor.u32 %v334, 2147483648
  %v337 = vxor.u32 %v335, 2147483648
  %v338 = vmul.f32 %v336, 1.442695
  %v339 = vpow.pop %v338
  %v340 = vmul.f32 %v337, 1.442695
  %v341 = vpow.pop %v340
  %v342 = vadd.f32 %v339, 1.0
  %v343 = vadd.f32 %v341, 1.0
  %v344 = vrcp.pop %v342
  %v345 = vmul.f32 %v342, %v344
  %v346 = vsub.f32 1.0, %v345
  %v347 = vmul.f32 %v344, %v346
  %v348 = vadd.f32 %v344, %v347
  %vm349 = vweird.f32 %v342
  %vm350 = vweird.f32 %v344
  %vm351 = vmor %vm349, %vm350
  %v352 = vsel %vm351, %v344, %v348
  %v353 = vand.u32 2147483647, %v342
  %vm354 = vcmp.eq.f32.partialorder %v353, 8.507059e+37
  %v355 = vand.u32 %v342, 2147483648
  %v356 = vor.u32 1.1754944e-38, %v355
  %v357 = vsel %vm354, %v356, %v352
  %v358 = vmul.f32 1.0, %v357
  %v359 = vrcp.pop %v343
  %v360 = vmul.f32 %v343, %v359
  %v361 = vsub.f32 1.0, %v360
  %v362 = vmul.f32 %v359, %v361
  %v363 = vadd.f32 %v359, %v362
  %vm364 = vweird.f32 %v343
  %vm365 = vweird.f32 %v359
  %vm366 = vmor %vm364, %vm365
  %v367 = vsel %vm366, %v359, %v363
  %v368 = vand.u32 2147483647, %v343
  %vm369 = vcmp.eq.f32.partialorder %v368, 8.507059e+37
  %v370 = vand.u32 %v343, 2147483648
  %v371 = vor.u32 1.1754944e-38, %v370
  %v372 = vsel %vm369, %v371, %v367
  %v373 = vmul.f32 1.0, %v372
  %v374 = vtanh.pop %v335
  %v376 = vrot.slane %v286, 6
  %v378 = vmul.f32 %v358, %v376
  %v379 = vmul.f32 %v358, %v374
  %381 = vrot.lane.b32.xlu0 %v379, 64
  %v382 = vpop.permute.xlu0 %381
  %v384 = vadd.f32 %v378, %v382
  %v385 = vtanh.pop %v384
  %v386 = vmul.f32 %v373, %v385
  %v387 = vpack.c.bf16 %v386, %v386
  %v389 = vrot.slane %v387, 1
  %390 = vrot.lane.b32.xlu0 %v389, 64
  %v391 = vpop.permute.xlu0 %390
  %v393 = vsel %vm122, %v391, 0
  %395 = vmatpush.bf16.msra.mxu0 0
  %396 = vmatpush.bf16.msra.mxu0 0
  %397 = vmatpush.bf16.msra.mxu0 0
  %398 = vmatpush.bf16.msra.mxu0 0
  %399 = vmatpush.bf16.msra.mxu0 %v200
  %400 = vmatpush.bf16.msra.mxu0 %v198
  %401 = vmatpush.bf16.msra.mxu0 %v196
  %402 = vmatpush.bf16.msra.mxu0 %v194
  %403 = vmatmul.bf16.gmra.mxu0 %v393
  %v404 = vpop.f32.mrf.mxu0
  %v405 = vadd.f32 0.0, %v404
  %v406 = vpop.f32.mrf.mxu0
  %407 = vdwg.mxu0
  %408 = vmatpush.bf16.msra.mxu0 0
  %409 = vmatpush.bf16.msra.mxu0 0
  %410 = vmatpush.bf16.msra.mxu0 0
  %411 = vmatpush.bf16.msra.mxu0 0
  %412 = vmatpush.bf16.msra.mxu0 %v201
  %413 = vmatpush.bf16.msra.mxu0 %v199
  %414 = vmatpush.bf16.msra.mxu0 %v197
  %415 = vmatpush.bf16.msra.mxu0 %v195
  %416 = vmatmul.bf16.gmra.mxu0 %v393
  %v417 = vpop.f32.mrf.mxu0
  %v418 = vadd.f32 0.0, %v417
  %v419 = vpop.f32.mrf.mxu0
  %420 = vdwg.mxu0
  %v423 = vrot.slane %v405, 4
  %v424 = vrot.slane %v418, 4
  %v427 = vadd.f32 %v168, %v423
  %v428 = vadd.f32 %v169, %v424
  %v429 = vxor.u32 %v427, 2147483648
  %v430 = vxor.u32 %v428, 2147483648
  %v431 = vmul.f32 %v429, 1.442695
  %v432 = vpow.pop %v431
  %v433 = vmul.f32 %v430, 1.442695
  %v434 = vpow.pop %v433
  %v435 = vadd.f32 %v432, 1.0
  %v436 = vadd.f32 %v434, 1.0
  %v437 = vrcp.pop %v435
  %v438 = vmul.f32 %v435, %v437
  %v439 = vsub.f32 1.0, %v438
  %v440 = vmul.f32 %v437, %v439
  %v441 = vadd.f32 %v437, %v440
  %vm442 = vweird.f32 %v435
  %vm443 = vweird.f32 %v437
  %vm444 = vmor %vm442, %vm443
  %v445 = vsel %vm444, %v437, %v441
  %v446 = vand.u32 2147483647, %v435
  %vm447 = vcmp.eq.f32.partialorder %v446, 8.507059e+37
  %v448 = vand.u32 %v435, 2147483648
  %v449 = vor.u32 1.1754944e-38, %v448
  %v450 = vsel %vm447, %v449, %v445
  %v451 = vmul.f32 1.0, %v450
  %v452 = vrcp.pop %v436
  %v453 = vmul.f32 %v436, %v452
  %v454 = vsub.f32 1.0, %v453
  %v455 = vmul.f32 %v452, %v454
  %v456 = vadd.f32 %v452, %v455
  %vm457 = vweird.f32 %v436
  %vm458 = vweird.f32 %v452
  %vm459 = vmor %vm457, %vm458
  %v460 = vsel %vm459, %v452, %v456
  %v461 = vand.u32 2147483647, %v436
  %vm462 = vcmp.eq.f32.partialorder %v461, 8.507059e+37
  %v463 = vand.u32 %v436, 2147483648
  %v464 = vor.u32 1.1754944e-38, %v463
  %v465 = vsel %vm462, %v464, %v460
  %v466 = vmul.f32 1.0, %v465
  %v467 = vtanh.pop %v428
  %v469 = vrot.slane %v384, 6
  %v471 = vmul.f32 %v451, %v469
  %v472 = vmul.f32 %v451, %v467
  %474 = vrot.lane.b32.xlu0 %v472, 64
  %v475 = vpop.permute.xlu0 %474
  %v477 = vadd.f32 %v471, %v475
  %v478 = vtanh.pop %v477
  %v479 = vmul.f32 %v466, %v478
  %v480 = vpack.c.bf16 %v479, %v479
  %v482 = vrot.slane %v480, 2
  %483 = vrot.lane.b32.xlu0 %v482, 64
  %v484 = vpop.permute.xlu0 %483
  %v486 = vsel %vm122, %v484, 0
  %488 = vmatpush.bf16.msra.mxu0 0
  %489 = vmatpush.bf16.msra.mxu0 0
  %490 = vmatpush.bf16.msra.mxu0 0
  %491 = vmatpush.bf16.msra.mxu0 0
  %492 = vmatpush.bf16.msra.mxu0 %v200
  %493 = vmatpush.bf16.msra.mxu0 %v198
  %494 = vmatpush.bf16.msra.mxu0 %v196
  %495 = vmatpush.bf16.msra.mxu0 %v194
  %496 = vmatmul.bf16.gmra.mxu0 %v486
  %v497 = vpop.f32.mrf.mxu0
  %v498 = vadd.f32 0.0, %v497
  %v499 = vpop.f32.mrf.mxu0
  %500 = vdwg.mxu0
  %501 = vmatpush.bf16.msra.mxu0 0
  %502 = vmatpush.bf16.msra.mxu0 0
  %503 = vmatpush.bf16.msra.mxu0 0
  %504 = vmatpush.bf16.msra.mxu0 0
  %505 = vmatpush.bf16.msra.mxu0 %v201
  %506 = vmatpush.bf16.msra.mxu0 %v199
  %507 = vmatpush.bf16.msra.mxu0 %v197
  %508 = vmatpush.bf16.msra.mxu0 %v195
  %509 = vmatmul.bf16.gmra.mxu0 %v486
  %v510 = vpop.f32.mrf.mxu0
  %v511 = vadd.f32 0.0, %v510
  %v512 = vpop.f32.mrf.mxu0
  %513 = vdwg.mxu0
  %v516 = vrot.slane %v498, 2
  %v517 = vrot.slane %v511, 2
  %v520 = vadd.f32 %v293, %v516
  %v521 = vadd.f32 %v294, %v517
  %v522 = vxor.u32 %v520, 2147483648
  %v523 = vxor.u32 %v521, 2147483648
  %v524 = vmul.f32 %v522, 1.442695
  %v525 = vpow.pop %v524
  %v526 = vmul.f32 %v523, 1.442695
  %v527 = vpow.pop %v526
  %v528 = vadd.f32 %v525, 1.0
  %v529 = vadd.f32 %v527, 1.0
  %v530 = vrcp.pop %v528
  %v531 = vmul.f32 %v528, %v530
  %v532 = vsub.f32 1.0, %v531
  %v533 = vmul.f32 %v530, %v532
  %v534 = vadd.f32 %v530, %v533
  %vm535 = vweird.f32 %v528
  %vm536 = vweird.f32 %v530
  %vm537 = vmor %vm535, %vm536
  %v538 = vsel %vm537, %v530, %v534
  %v539 = vand.u32 2147483647, %v528
  %vm540 = vcmp.eq.f32.partialorder %v539, 8.507059e+37
  %v541 = vand.u32 %v528, 2147483648
  %v542 = vor.u32 1.1754944e-38, %v541
  %v543 = vsel %vm540, %v542, %v538
  %v544 = vmul.f32 1.0, %v543
  %v545 = vrcp.pop %v529
  %v546 = vmul.f32 %v529, %v545
  %v547 = vsub.f32 1.0, %v546
  %v548 = vmul.f32 %v545, %v547
  %v549 = vadd.f32 %v545, %v548
  %vm550 = vweird.f32 %v529
  %vm551 = vweird.f32 %v545
  %vm552 = vmor %vm550, %vm551
  %v553 = vsel %vm552, %v545, %v549
  %v554 = vand.u32 2147483647, %v529
  %vm555 = vcmp.eq.f32.partialorder %v554, 8.507059e+37
  %v556 = vand.u32 %v529, 2147483648
  %v557 = vor.u32 1.1754944e-38, %v556
  %v558 = vsel %vm555, %v557, %v553
  %v559 = vmul.f32 1.0, %v558
  %v560 = vtanh.pop %v521
  %v562 = vrot.slane %v477, 6
  %v564 = vmul.f32 %v544, %v562
  %v565 = vmul.f32 %v544, %v560
  %567 = vrot.lane.b32.xlu0 %v565, 64
  %v568 = vpop.permute.xlu0 %567
  %v570 = vadd.f32 %v564, %v568
  %v571 = vtanh.pop %v570
  %v572 = vmul.f32 %v559, %v571
  %v575 = vrot.slane %v136, 6
  %v576 = vrot.slane %v150, 6
  %v579 = vsel %vm62, %v138, %v575
  %v580 = vsel %vm63, %v152, %v576
  %v581 = vpack.c.bf16 %v572, %v572
  %v583 = vrot.slane %v581, 3
  %584 = vrot.lane.b32.xlu0 %v583, 64
  %v585 = vpop.permute.xlu0 %584
  %v587 = vsel %vm122, %v585, 0
  %589 = vmatpush.bf16.msra.mxu0 0
  %590 = vmatpush.bf16.msra.mxu0 0
  %591 = vmatpush.bf16.msra.mxu0 0
  %592 = vmatpush.bf16.msra.mxu0 0
  %593 = vmatpush.bf16.msra.mxu0 %v200
  %594 = vmatpush.bf16.msra.mxu0 %v198
  %595 = vmatpush.bf16.msra.mxu0 %v196
  %596 = vmatpush.bf16.msra.mxu0 %v194
  %597 = vmatmul.bf16.gmra.mxu0 %v587
  %v598 = vpop.f32.mrf.mxu0
  %v599 = vadd.f32 0.0, %v598
  %v600 = vpop.f32.mrf.mxu0
  %601 = vdwg.mxu0
  %602 = vmatpush.bf16.msra.mxu0 0
  %603 = vmatpush.bf16.msra.mxu0 0
  %604 = vmatpush.bf16.msra.mxu0 0
  %605 = vmatpush.bf16.msra.mxu0 0
  %606 = vmatpush.bf16.msra.mxu0 %v201
  %607 = vmatpush.bf16.msra.mxu0 %v199
  %608 = vmatpush.bf16.msra.mxu0 %v197
  %609 = vmatpush.bf16.msra.mxu0 %v195
  %610 = vmatmul.bf16.gmra.mxu0 %v587
  %v611 = vpop.f32.mrf.mxu0
  %v612 = vadd.f32 0.0, %v611
  %v613 = vpop.f32.mrf.mxu0
  %614 = vdwg.mxu0
  %v615 = vadd.f32 %v579, %v599
  %v616 = vadd.f32 %v580, %v612
  %v617 = vxor.u32 %v615, 2147483648
  %v618 = vxor.u32 %v616, 2147483648
  %v619 = vmul.f32 %v617, 1.442695
  %v620 = vpow.pop %v619
  %v621 = vmul.f32 %v618, 1.442695
  %v622 = vpow.pop %v621
  %v623 = vadd.f32 %v620, 1.0
  %v624 = vadd.f32 %v622, 1.0
  %v625 = vrcp.pop %v623
  %v626 = vmul.f32 %v623, %v625
  %v627 = vsub.f32 1.0, %v626
  %v628 = vmul.f32 %v625, %v627
  %v629 = vadd.f32 %v625, %v628
  %vm630 = vweird.f32 %v623
  %vm631 = vweird.f32 %v625
  %vm632 = vmor %vm630, %vm631
  %v633 = vsel %vm632, %v625, %v629
  %v634 = vand.u32 2147483647, %v623
  %vm635 = vcmp.eq.f32.partialorder %v634, 8.507059e+37
  %v636 = vand.u32 %v623, 2147483648
  %v637 = vor.u32 1.1754944e-38, %v636
  %v638 = vsel %vm635, %v637, %v633
  %v639 = vmul.f32 1.0, %v638
  %v640 = vrcp.pop %v624
  %v641 = vmul.f32 %v624, %v640
  %v642 = vsub.f32 1.0, %v641
  %v643 = vmul.f32 %v640, %v642
  %v644 = vadd.f32 %v640, %v643
  %vm645 = vweird.f32 %v624
  %vm646 = vweird.f32 %v640
  %vm647 = vmor %vm645, %vm646
  %v648 = vsel %vm647, %v640, %v644
  %v649 = vand.u32 2147483647, %v624
  %vm650 = vcmp.eq.f32.partialorder %v649, 8.507059e+37
  %v651 = vand.u32 %v624, 2147483648
  %v652 = vor.u32 1.1754944e-38, %v651
  %v653 = vsel %vm650, %v652, %v648
  %v654 = vmul.f32 1.0, %v653
  %v655 = vtanh.pop %v616
  %v657 = vrot.slane %v570, 6
  %v659 = vmul.f32 %v639, %v657
  %v660 = vmul.f32 %v639, %v655
  %662 = vrot.lane.b32.xlu0 %v660, 64
  %v663 = vpop.permute.xlu0 %662
  %v665 = vadd.f32 %v659, %v663
  %v666 = vtanh.pop %v665
  %v667 = vmul.f32 %v654, %v666
  %v668 = vrot.slane %v136, 2
  %v669 = vrot.slane %v150, 2
  %v672 = vsel %vm62, %v138, %v668
  %v673 = vsel %vm63, %v152, %v669
  %v674 = vpack.c.bf16 %v667, %v667
  %676 = vrot.lane.b32.xlu0 %v674, 64
  %v677 = vpop.permute.xlu0 %676
  %v679 = vsel %vm122, %v677, 0
  %681 = vmatpush.bf16.msra.mxu0 0
  %682 = vmatpush.bf16.msra.mxu0 0
  %683 = vmatpush.bf16.msra.mxu0 0
  %684 = vmatpush.bf16.msra.mxu0 0
  %685 = vmatpush.bf16.msra.mxu0 %v200
  %686 = vmatpush.bf16.msra.mxu0 %v198
  %687 = vmatpush.bf16.msra.mxu0 %v196
  %688 = vmatpush.bf16.msra.mxu0 %v194
  %689 = vmatmul.bf16.gmra.mxu0 %v679
  %v690 = vpop.f32.mrf.mxu0
  %v691 = vadd.f32 0.0, %v690
  %v692 = vpop.f32.mrf.mxu0
  %693 = vdwg.mxu0
  %694 = vmatpush.bf16.msra.mxu0 0
  %695 = vmatpush.bf16.msra.mxu0 0
  %696 = vmatpush.bf16.msra.mxu0 0
  %697 = vmatpush.bf16.msra.mxu0 0
  %698 = vmatpush.bf16.msra.mxu0 %v201
  %699 = vmatpush.bf16.msra.mxu0 %v199
  %700 = vmatpush.bf16.msra.mxu0 %v197
  %701 = vmatpush.bf16.msra.mxu0 %v195
  %702 = vmatmul.bf16.gmra.mxu0 %v679
  %v703 = vpop.f32.mrf.mxu0
  %v704 = vadd.f32 0.0, %v703
  %v705 = vpop.f32.mrf.mxu0
  %706 = vdwg.mxu0
  %v709 = vrot.slane %v691, 6
  %v710 = vrot.slane %v704, 6
  %v713 = vadd.f32 %v672, %v709
  %v714 = vadd.f32 %v673, %v710
  %v715 = vxor.u32 %v713, 2147483648
  %v716 = vxor.u32 %v714, 2147483648
  %v717 = vmul.f32 %v715, 1.442695
  %v718 = vpow.pop %v717
  %v719 = vmul.f32 %v716, 1.442695
  %v720 = vpow.pop %v719
  %v721 = vadd.f32 %v718, 1.0
  %v722 = vadd.f32 %v720, 1.0
  %v723 = vrcp.pop %v721
  %v724 = vmul.f32 %v721, %v723
  %v725 = vsub.f32 1.0, %v724
  %v726 = vmul.f32 %v723, %v725
  %v727 = vadd.f32 %v723, %v726
  %vm728 = vweird.f32 %v721
  %vm729 = vweird.f32 %v723
  %vm730 = vmor %vm728, %vm729
  %v731 = vsel %vm730, %v723, %v727
  %v732 = vand.u32 2147483647, %v721
  %vm733 = vcmp.eq.f32.partialorder %v732, 8.507059e+37
  %v734 = vand.u32 %v721, 2147483648
  %v735 = vor.u32 1.1754944e-38, %v734
  %v736 = vsel %vm733, %v735, %v731
  %v737 = vmul.f32 1.0, %v736
  %v738 = vrcp.pop %v722
  %v739 = vmul.f32 %v722, %v738
  %v740 = vsub.f32 1.0, %v739
  %v741 = vmul.f32 %v738, %v740
  %v742 = vadd.f32 %v738, %v741
  %vm743 = vweird.f32 %v722
  %vm744 = vweird.f32 %v738
  %vm745 = vmor %vm743, %vm744
  %v746 = vsel %vm745, %v738, %v742
  %v747 = vand.u32 2147483647, %v722
  %vm748 = vcmp.eq.f32.partialorder %v747, 8.507059e+37
  %v749 = vand.u32 %v722, 2147483648
  %v750 = vor.u32 1.1754944e-38, %v749
  %v751 = vsel %vm748, %v750, %v746
  %v752 = vmul.f32 1.0, %v751
  %v753 = vtanh.pop %v714
  %v755 = vrot.slane %v665, 6
  %v757 = vmul.f32 %v737, %v755
  %v758 = vmul.f32 %v737, %v753
  %760 = vrot.lane.b32.xlu0 %v758, 64
  %v761 = vpop.permute.xlu0 %760
  %v763 = vadd.f32 %v757, %v761
  %v764 = vtanh.pop %v763
  %v765 = vmul.f32 %v752, %v764
  %v766 = vpack.c.bf16 %v765, %v765
  %v768 = vrot.slane %v766, 1
  %769 = vrot.lane.b32.xlu0 %v768, 64
  %v770 = vpop.permute.xlu0 %769
  %v772 = vsel %vm122, %v770, 0
  %774 = vmatpush.bf16.msra.mxu0 0
  %775 = vmatpush.bf16.msra.mxu0 0
  %776 = vmatpush.bf16.msra.mxu0 0
  %777 = vmatpush.bf16.msra.mxu0 0
  %778 = vmatpush.bf16.msra.mxu0 %v200
  %779 = vmatpush.bf16.msra.mxu0 %v198
  %780 = vmatpush.bf16.msra.mxu0 %v196
  %781 = vmatpush.bf16.msra.mxu0 %v194
  %782 = vmatmul.bf16.gmra.mxu0 %v772
  %v783 = vpop.f32.mrf.mxu0
  %v784 = vadd.f32 0.0, %v783
  %v785 = vpop.f32.mrf.mxu0
  %786 = vdwg.mxu0
  %787 = vmatpush.bf16.msra.mxu0 0
  %788 = vmatpush.bf16.msra.mxu0 0
  %789 = vmatpush.bf16.msra.mxu0 0
  %790 = vmatpush.bf16.msra.mxu0 0
  %791 = vmatpush.bf16.msra.mxu0 %v201
  %792 = vmatpush.bf16.msra.mxu0 %v199
  %793 = vmatpush.bf16.msra.mxu0 %v197
  %794 = vmatpush.bf16.msra.mxu0 %v195
  %795 = vmatmul.bf16.gmra.mxu0 %v772
  %v796 = vpop.f32.mrf.mxu0
  %v797 = vadd.f32 0.0, %v796
  %v798 = vpop.f32.mrf.mxu0
  %799 = vdwg.mxu0
  %v802 = vrot.slane %v784, 4
  %v803 = vrot.slane %v797, 4
  %v806 = vadd.f32 %v579, %v802
  %v807 = vadd.f32 %v580, %v803
  %v808 = vxor.u32 %v806, 2147483648
  %v809 = vxor.u32 %v807, 2147483648
  %v810 = vmul.f32 %v808, 1.442695
  %v811 = vpow.pop %v810
  %v812 = vmul.f32 %v809, 1.442695
  %v813 = vpow.pop %v812
  %v814 = vadd.f32 %v811, 1.0
  %v815 = vadd.f32 %v813, 1.0
  %v816 = vrcp.pop %v814
  %v817 = vmul.f32 %v814, %v816
  %v818 = vsub.f32 1.0, %v817
  %v819 = vmul.f32 %v816, %v818
  %v820 = vadd.f32 %v816, %v819
  %vm821 = vweird.f32 %v814
  %vm822 = vweird.f32 %v816
  %vm823 = vmor %vm821, %vm822
  %v824 = vsel %vm823, %v816, %v820
  %v825 = vand.u32 2147483647, %v814
  %vm826 = vcmp.eq.f32.partialorder %v825, 8.507059e+37
  %v827 = vand.u32 %v814, 2147483648
  %v828 = vor.u32 1.1754944e-38, %v827
  %v829 = vsel %vm826, %v828, %v824
  %v830 = vmul.f32 1.0, %v829
  %v831 = vrcp.pop %v815
  %v832 = vmul.f32 %v815, %v831
  %v833 = vsub.f32 1.0, %v832
  %v834 = vmul.f32 %v831, %v833
  %v835 = vadd.f32 %v831, %v834
  %vm836 = vweird.f32 %v815
  %vm837 = vweird.f32 %v831
  %vm838 = vmor %vm836, %vm837
  %v839 = vsel %vm838, %v831, %v835
  %v840 = vand.u32 2147483647, %v815
  %vm841 = vcmp.eq.f32.partialorder %v840, 8.507059e+37
  %v842 = vand.u32 %v815, 2147483648
  %v843 = vor.u32 1.1754944e-38, %v842
  %v844 = vsel %vm841, %v843, %v839
  %v845 = vmul.f32 1.0, %v844
  %v846 = vtanh.pop %v807
  %v848 = vrot.slane %v763, 6
  %v850 = vmul.f32 %v830, %v848
  %v851 = vmul.f32 %v830, %v846
  %853 = vrot.lane.b32.xlu0 %v851, 64
  %v854 = vpop.permute.xlu0 %853
  %v856 = vadd.f32 %v850, %v854
  %v857 = vtanh.pop %v856
  %v858 = vmul.f32 %v845, %v857
  %v859 = vpack.c.bf16 %v858, %v858
  %v861 = vrot.slane %v859, 2
  %862 = vrot.lane.b32.xlu0 %v861, 64
  %v863 = vpop.permute.xlu0 %862
  %v865 = vsel %vm122, %v863, 0
  %867 = vmatpush.bf16.msra.mxu0 0
  %868 = vmatpush.bf16.msra.mxu0 0
  %869 = vmatpush.bf16.msra.mxu0 0
  %870 = vmatpush.bf16.msra.mxu0 0
  %871 = vmatpush.bf16.msra.mxu0 %v200
  %872 = vmatpush.bf16.msra.mxu0 %v198
  %873 = vmatpush.bf16.msra.mxu0 %v196
  %874 = vmatpush.bf16.msra.mxu0 %v194
  %875 = vmatmul.bf16.gmra.mxu0 %v865
  %v876 = vpop.f32.mrf.mxu0
  %v877 = vadd.f32 0.0, %v876
  %v878 = vpop.f32.mrf.mxu0
  %879 = vdwg.mxu0
  %880 = vmatpush.bf16.msra.mxu0 0
  %881 = vmatpush.bf16.msra.mxu0 0
  %882 = vmatpush.bf16.msra.mxu0 0
  %883 = vmatpush.bf16.msra.mxu0 0
  %884 = vmatpush.bf16.msra.mxu0 %v201
  %885 = vmatpush.bf16.msra.mxu0 %v199
  %886 = vmatpush.bf16.msra.mxu0 %v197
  %887 = vmatpush.bf16.msra.mxu0 %v195
  %888 = vmatmul.bf16.gmra.mxu0 %v865
  %v889 = vpop.f32.mrf.mxu0
  %v890 = vadd.f32 0.0, %v889
  %v891 = vpop.f32.mrf.mxu0
  %892 = vdwg.mxu0
  %v895 = vrot.slane %v877, 2
  %v896 = vrot.slane %v890, 2
  %v899 = vadd.f32 %v672, %v895
  %v900 = vadd.f32 %v673, %v896
  %v901 = vxor.u32 %v899, 2147483648
  %v902 = vxor.u32 %v900, 2147483648
  %v903 = vmul.f32 %v901, 1.442695
  %v904 = vpow.pop %v903
  %v905 = vmul.f32 %v902, 1.442695
  %v906 = vpow.pop %v905
  %v907 = vadd.f32 %v904, 1.0
  %v908 = vadd.f32 %v906, 1.0
  %v909 = vrcp.pop %v907
  %v910 = vmul.f32 %v907, %v909
  %v911 = vsub.f32 1.0, %v910
  %v912 = vmul.f32 %v909, %v911
  %v913 = vadd.f32 %v909, %v912
  %vm914 = vweird.f32 %v907
  %vm915 = vweird.f32 %v909
  %vm916 = vmor %vm914, %vm915
  %v917 = vsel %vm916, %v909, %v913
  %v918 = vand.u32 2147483647, %v907
  %vm919 = vcmp.eq.f32.partialorder %v918, 8.507059e+37
  %v920 = vand.u32 %v907, 2147483648
  %v921 = vor.u32 1.1754944e-38, %v920
  %v922 = vsel %vm919, %v921, %v917
  %v923 = vmul.f32 1.0, %v922
  %v924 = vrcp.pop %v908
  %v925 = vmul.f32 %v908, %v924
  %v926 = vsub.f32 1.0, %v925
  %v927 = vmul.f32 %v924, %v926
  %v928 = vadd.f32 %v924, %v927
  %vm929 = vweird.f32 %v908
  %vm930 = vweird.f32 %v924
  %vm931 = vmor %vm929, %vm930
  %v932 = vsel %vm931, %v924, %v928
  %v933 = vand.u32 2147483647, %v908
  %vm934 = vcmp.eq.f32.partialorder %v933, 8.507059e+37
  %v935 = vand.u32 %v908, 2147483648
  %v936 = vor.u32 1.1754944e-38, %v935
  %v937 = vsel %vm934, %v936, %v932
  %v938 = vmul.f32 1.0, %v937
  %v939 = vtanh.pop %v900
  %v941 = vrot.slane %v856, 6
  %v943 = vmul.f32 %v923, %v941
  %v944 = vmul.f32 %v923, %v939
  %946 = vrot.lane.b32.xlu0 %v944, 64
  %v947 = vpop.permute.xlu0 %946
  %v949 = vadd.f32 %v943, %v947
  %v950 = vtanh.pop %v949
  %v951 = vmul.f32 %v938, %v950
  %953 = vrot.lane.b32.xlu0 %v288, 64
  %v954 = vpop.permute.xlu0 %953
  %v957 = vrot.slane %v951, 6
  %958 = vrot.lane.b32.xlu0 %v957, 64
  %v959 = vpop.permute.xlu0 %958
  %v961 = vsel %vm64, %v954, %v959
  %vm962 = vcmask 517120
  %963 = vst.msk [vmem:[#allocation2] sm:$0x3] %vm962, %v961
  %v965 = vrot.slane %v386, 2
  %966 = vrot.lane.b32.xlu0 %v965, 64
  %v967 = vpop.permute.xlu0 %966
  %v970 = vrot.slane %v858, 4
  %971 = vrot.lane.b32.xlu0 %v970, 64
  %v972 = vpop.permute.xlu0 %971
  %v974 = vsel %vm64, %v967, %v972
  %975 = vst.msk [vmem:[#allocation2 + $0x2] sm:$0x3] %vm962, %v974
  %v977 = vrot.slane %v479, 4
  %978 = vrot.lane.b32.xlu0 %v977, 64
  %v979 = vpop.permute.xlu0 %978
  %v982 = vrot.slane %v765, 2
  %983 = vrot.lane.b32.xlu0 %v982, 64
  %v984 = vpop.permute.xlu0 %983
  %v986 = vsel %vm64, %v979, %v984
  %987 = vst.msk [vmem:[#allocation2 + $0x4] sm:$0x3] %vm962, %v986
  %v989 = vrot.slane %v572, 6
  %990 = vrot.lane.b32.xlu0 %v989, 64
  %v991 = vpop.permute.xlu0 %990
  %994 = vrot.lane.b32.xlu0 %v667, 64
  %v995 = vpop.permute.xlu0 %994
  %v997 = vsel %vm64, %v991, %v995
  %998 = vst.msk [vmem:[#allocation2 + $0x6] sm:$0x3] %vm962, %v997
  %v999 = vsel %vm64, %v995, %v991
  %1000 = vst.msk [vmem:[#allocation2 + $0x8] sm:$0x3] %vm962, %v999
  %v1001 = vsel %vm64, %v984, %v979
  %1002 = vst.msk [vmem:[#allocation2 + $0xa] sm:$0x3] %vm962, %v1001
  %v1003 = vsel %vm64, %v972, %v967
  %1004 = vst.msk [vmem:[#allocation2 + $0xc] sm:$0x3] %vm962, %v1003
  %v1005 = vsel %vm64, %v959, %v954
  %1006 = vst.msk [vmem:[#allocation2 + $0xe] sm:$0x3] %vm962, %v1005
  %v1007 = vld [vmem:[#allocation2] sm:$0xff]
  %v1008 = vld [vmem:[#allocation2 + $0x8] sm:$0xff]
  %v1009 = vpack.c.bf16 %v1008, %v1007
  %v1010 = vld [vmem:[%s4] sm:$0xff]
  %v1011 = vld [vmem:[%s4 + $0x8] sm:$0xff]
  %v1012 = vld [vmem:[%s4 + $0x10] sm:$0xff]
  %v1013 = vld [vmem:[%s4 + $0x18] sm:$0xff]
  %v1014 = vld [vmem:[%s4 + $0x20] sm:$0xff]
  %v1015 = vld [vmem:[%s4 + $0x28] sm:$0xff]
  %v1016 = vld [vmem:[%s4 + $0x30] sm:$0xff]
  %v1017 = vld [vmem:[%s4 + $0x38] sm:$0xff]
  %v1018 = vld [vmem:[%s6] sm:$0x3]
  %v1020 = vperm.slane %v1018, 0
  %v1021 = vperm.slane %v1018, 1
  %v1032 = vunpack.c.l.b16 %v1010
  %v1033 = vunpack.c.h.b16 %v1010
  %v1034 = vunpack.c.l.b16 %v1011
  %v1035 = vunpack.c.h.b16 %v1011
  %v1036 = vunpack.c.l.b16 %v1012
  %v1037 = vunpack.c.h.b16 %v1012
  %v1038 = vunpack.c.l.b16 %v1013
  %v1039 = vunpack.c.h.b16 %v1013
  %v1040 = vunpack.c.l.b16 %v1014
  %v1041 = vunpack.c.h.b16 %v1014
  %v1042 = vunpack.c.l.b16 %v1015
  %v1043 = vunpack.c.h.b16 %v1015
  %v1044 = vunpack.c.l.b16 %v1016
  %v1045 = vunpack.c.h.b16 %v1016
  %v1046 = vunpack.c.l.b16 %v1017
  %v1047 = vunpack.c.h.b16 %v1017
  %v1048 = vpack.c.b16 %v1034, %v1032
  %v1049 = vpack.c.b16 %v1035, %v1033
  %v1050 = vpack.c.b16 %v1038, %v1036
  %v1051 = vpack.c.b16 %v1039, %v1037
  %v1052 = vpack.c.b16 %v1042, %v1040
  %v1053 = vpack.c.b16 %v1043, %v1041
  %v1054 = vpack.c.b16 %v1046, %v1044
  %v1055 = vpack.c.b16 %v1047, %v1045
  %v1065 = vsel %vm122, %v1009, 0
  %1067 = vmatpush.bf16.msra.mxu0 0
  %1068 = vmatpush.bf16.msra.mxu0 0
  %1069 = vmatpush.bf16.msra.mxu0 0
  %1070 = vmatpush.bf16.msra.mxu0 0
  %1071 = vmatpush.bf16.msra.mxu0 %v1054
  %1072 = vmatpush.bf16.msra.mxu0 %v1052
  %1073 = vmatpush.bf16.msra.mxu0 %v1050
  %1074 = vmatpush.bf16.msra.mxu0 %v1048
  %1075 = vmatmul.bf16.gmra.mxu0 %v1065
  %v1076 = vpop.f32.mrf.mxu0
  %v1077 = vadd.f32 %v1020, %v1076
  %v1078 = vpop.f32.mrf.mxu0
  %v1079 = vadd.f32 %v1020, %v1078
  %1080 = vdwg.mxu0
  %1081 = vmatpush.bf16.msra.mxu0 0
  %1082 = vmatpush.bf16.msra.mxu0 0
  %1083 = vmatpush.bf16.msra.mxu0 0
  %1084 = vmatpush.bf16.msra.mxu0 0
  %1085 = vmatpush.bf16.msra.mxu0 %v1055
  %1086 = vmatpush.bf16.msra.mxu0 %v1053
  %1087 = vmatpush.bf16.msra.mxu0 %v1051
  %1088 = vmatpush.bf16.msra.mxu0 %v1049
  %1089 = vmatmul.bf16.gmra.mxu0 %v1065
  %v1090 = vpop.f32.mrf.mxu0
  %v1091 = vadd.f32 %v1021, %v1090
  %v1092 = vpop.f32.mrf.mxu0
  %v1093 = vadd.f32 %v1021, %v1092
  %1094 = vdwg.mxu0
  %v1095 = vld [vmem:[%s5] sm:$0xff]
  %v1096 = vld [vmem:[%s5 + $0x8] sm:$0xff]
  %v1097 = vld [vmem:[%s5 + $0x10] sm:$0xff]
  %v1098 = vld [vmem:[%s5 + $0x18] sm:$0xff]
  %v1099 = vld [vmem:[%s5 + $0x20] sm:$0xff]
  %v1100 = vld [vmem:[%s5 + $0x28] sm:$0xff]
  %v1101 = vld [vmem:[%s5 + $0x30] sm:$0xff]
  %v1102 = vld [vmem:[%s5 + $0x38] sm:$0xff]
  %v1105 = vrot.slane %v1079, 6
  %v1106 = vrot.slane %v1093, 6
  %v1109 = vsel %vm62, %v1077, %v1105
  %v1110 = vsel %vm63, %v1091, %v1106
  %v1119 = vunpack.c.l.b16 %v1095
  %v1120 = vunpack.c.h.b16 %v1095
  %v1121 = vunpack.c.l.b16 %v1096
  %v1122 = vunpack.c.h.b16 %v1096
  %v1123 = vunpack.c.l.b16 %v1097
  %v1124 = vunpack.c.h.b16 %v1097
  %v1125 = vunpack.c.l.b16 %v1098
  %v1126 = vunpack.c.h.b16 %v1098
  %v1127 = vunpack.c.l.b16 %v1099
  %v1128 = vunpack.c.h.b16 %v1099
  %v1129 = vunpack.c.l.b16 %v1100
  %v1130 = vunpack.c.h.b16 %v1100
  %v1131 = vunpack.c.l.b16 %v1101
  %v1132 = vunpack.c.h.b16 %v1101
  %v1133 = vunpack.c.l.b16 %v1102
  %v1134 = vunpack.c.h.b16 %v1102
  %v1135 = vpack.c.b16 %v1121, %v1119
  %v1136 = vpack.c.b16 %v1122, %v1120
  %v1137 = vpack.c.b16 %v1125, %v1123
  %v1138 = vpack.c.b16 %v1126, %v1124
  %v1139 = vpack.c.b16 %v1129, %v1127
  %v1140 = vpack.c.b16 %v1130, %v1128
  %v1141 = vpack.c.b16 %v1133, %v1131
  %v1142 = vpack.c.b16 %v1134, %v1132
  %1151 = vmatpush.bf16.msra.mxu0 0
  %1152 = vmatpush.bf16.msra.mxu0 0
  %1153 = vmatpush.bf16.msra.mxu0 0
  %1154 = vmatpush.bf16.msra.mxu0 0
  %1155 = vmatpush.bf16.msra.mxu0 %v1141
  %1156 = vmatpush.bf16.msra.mxu0 %v1139
  %1157 = vmatpush.bf16.msra.mxu0 %v1137
  %1158 = vmatpush.bf16.msra.mxu0 %v1135
  %1159 = vmatmul.bf16.gmra.mxu0 %v211
  %v1160 = vpop.f32.mrf.mxu0
  %v1161 = vadd.f32 0.0, %v1160
  %v1162 = vpop.f32.mrf.mxu0
  %1163 = vdwg.mxu0
  %1164 = vmatpush.bf16.msra.mxu0 0
  %1165 = vmatpush.bf16.msra.mxu0 0
  %1166 = vmatpush.bf16.msra.mxu0 0
  %1167 = vmatpush.bf16.msra.mxu0 0
  %1168 = vmatpush.bf16.msra.mxu0 %v1142
  %1169 = vmatpush.bf16.msra.mxu0 %v1140
  %1170 = vmatpush.bf16.msra.mxu0 %v1138
  %1171 = vmatpush.bf16.msra.mxu0 %v1136
  %1172 = vmatmul.bf16.gmra.mxu0 %v211
  %v1173 = vpop.f32.mrf.mxu0
  %v1174 = vadd.f32 0.0, %v1173
  %v1175 = vpop.f32.mrf.mxu0
  %1176 = vdwg.mxu0
  %v1177 = vadd.f32 %v1109, %v1161
  %v1178 = vadd.f32 %v1110, %v1174
  %v1179 = vxor.u32 %v1177, 2147483648
  %v1180 = vxor.u32 %v1178, 2147483648
  %v1181 = vmul.f32 %v1179, 1.442695
  %v1182 = vpow.pop %v1181
  %v1183 = vmul.f32 %v1180, 1.442695
  %v1184 = vpow.pop %v1183
  %v1185 = vadd.f32 %v1182, 1.0
  %v1186 = vadd.f32 %v1184, 1.0
  %v1187 = vrcp.pop %v1185
  %v1188 = vmul.f32 %v1185, %v1187
  %v1189 = vsub.f32 1.0, %v1188
  %v1190 = vmul.f32 %v1187, %v1189
  %v1191 = vadd.f32 %v1187, %v1190
  %vm1192 = vweird.f32 %v1185
  %vm1193 = vweird.f32 %v1187
  %vm1194 = vmor %vm1192, %vm1193
  %v1195 = vsel %vm1194, %v1187, %v1191
  %v1196 = vand.u32 2147483647, %v1185
  %vm1197 = vcmp.eq.f32.partialorder %v1196, 8.507059e+37
  %v1198 = vand.u32 %v1185, 2147483648
  %v1199 = vor.u32 1.1754944e-38, %v1198
  %v1200 = vsel %vm1197, %v1199, %v1195
  %v1201 = vmul.f32 1.0, %v1200
  %v1202 = vrcp.pop %v1186
  %v1203 = vmul.f32 %v1186, %v1202
  %v1204 = vsub.f32 1.0, %v1203
  %v1205 = vmul.f32 %v1202, %v1204
  %v1206 = vadd.f32 %v1202, %v1205
  %vm1207 = vweird.f32 %v1186
  %vm1208 = vweird.f32 %v1202
  %vm1209 = vmor %vm1207, %vm1208
  %v1210 = vsel %vm1209, %v1202, %v1206
  %v1211 = vand.u32 2147483647, %v1186
  %vm1212 = vcmp.eq.f32.partialorder %v1211, 8.507059e+37
  %v1213 = vand.u32 %v1186, 2147483648
  %v1214 = vor.u32 1.1754944e-38, %v1213
  %v1215 = vsel %vm1212, %v1214, %v1210
  %v1216 = vmul.f32 1.0, %v1215
  %v1217 = vtanh.pop %v1178
  %v1218 = vmul.f32 %v1201, 0.0
  %v1219 = vmul.f32 %v1201, %v1217
  %1221 = vrot.lane.b32.xlu0 %v1219, 64
  %v1222 = vpop.permute.xlu0 %1221
  %v1224 = vadd.f32 %v1218, %v1222
  %v1225 = vtanh.pop %v1224
  %v1226 = vmul.f32 %v1216, %v1225
  %v1227 = vrot.slane %v1079, 2
  %v1228 = vrot.slane %v1093, 2
  %v1231 = vsel %vm62, %v1077, %v1227
  %v1232 = vsel %vm63, %v1091, %v1228
  %v1233 = vpack.c.bf16 %v1226, %v1226
  %1235 = vrot.lane.b32.xlu0 %v1233, 64
  %v1236 = vpop.permute.xlu0 %1235
  %v1238 = vsel %vm122, %v1236, 0
  %1240 = vmatpush.bf16.msra.mxu0 0
  %1241 = vmatpush.bf16.msra.mxu0 0
  %1242 = vmatpush.bf16.msra.mxu0 0
  %1243 = vmatpush.bf16.msra.mxu0 0
  %1244 = vmatpush.bf16.msra.mxu0 %v1141
  %1245 = vmatpush.bf16.msra.mxu0 %v1139
  %1246 = vmatpush.bf16.msra.mxu0 %v1137
  %1247 = vmatpush.bf16.msra.mxu0 %v1135
  %1248 = vmatmul.bf16.gmra.mxu0 %v1238
  %v1249 = vpop.f32.mrf.mxu0
  %v1250 = vadd.f32 0.0, %v1249
  %v1251 = vpop.f32.mrf.mxu0
  %1252 = vdwg.mxu0
  %1253 = vmatpush.bf16.msra.mxu0 0
  %1254 = vmatpush.bf16.msra.mxu0 0
  %1255 = vmatpush.bf16.msra.mxu0 0
  %1256 = vmatpush.bf16.msra.mxu0 0
  %1257 = vmatpush.bf16.msra.mxu0 %v1142
  %1258 = vmatpush.bf16.msra.mxu0 %v1140
  %1259 = vmatpush.bf16.msra.mxu0 %v1138
  %1260 = vmatpush.bf16.msra.mxu0 %v1136
  %1261 = vmatmul.bf16.gmra.mxu0 %v1238
  %v1262 = vpop.f32.mrf.mxu0
  %v1263 = vadd.f32 0.0, %v1262
  %v1264 = vpop.f32.mrf.mxu0
  %1265 = vdwg.mxu0
  %v1268 = vrot.slane %v1250, 6
  %v1269 = vrot.slane %v1263, 6
  %v1272 = vadd.f32 %v1231, %v1268
  %v1273 = vadd.f32 %v1232, %v1269
  %v1274 = vxor.u32 %v1272, 2147483648
  %v1275 = vxor.u32 %v1273, 2147483648
  %v1276 = vmul.f32 %v1274, 1.442695
  %v1277 = vpow.pop %v1276
  %v1278 = vmul.f32 %v1275, 1.442695
  %v1279 = vpow.pop %v1278
  %v1280 = vadd.f32 %v1277, 1.0
  %v1281 = vadd.f32 %v1279, 1.0
  %v1282 = vrcp.pop %v1280
  %v1283 = vmul.f32 %v1280, %v1282
  %v1284 = vsub.f32 1.0, %v1283
  %v1285 = vmul.f32 %v1282, %v1284
  %v1286 = vadd.f32 %v1282, %v1285
  %vm1287 = vweird.f32 %v1280
  %vm1288 = vweird.f32 %v1282
  %vm1289 = vmor %vm1287, %vm1288
  %v1290 = vsel %vm1289, %v1282, %v1286
  %v1291 = vand.u32 2147483647, %v1280
  %vm1292 = vcmp.eq.f32.partialorder %v1291, 8.507059e+37
  %v1293 = vand.u32 %v1280, 2147483648
  %v1294 = vor.u32 1.1754944e-38, %v1293
  %v1295 = vsel %vm1292, %v1294, %v1290
  %v1296 = vmul.f32 1.0, %v1295
  %v1297 = vrcp.pop %v1281
  %v1298 = vmul.f32 %v1281, %v1297
  %v1299 = vsub.f32 1.0, %v1298
  %v1300 = vmul.f32 %v1297, %v1299
  %v1301 = vadd.f32 %v1297, %v1300
  %vm1302 = vweird.f32 %v1281
  %vm1303 = vweird.f32 %v1297
  %vm1304 = vmor %vm1302, %vm1303
  %v1305 = vsel %vm1304, %v1297, %v1301
  %v1306 = vand.u32 2147483647, %v1281
  %vm1307 = vcmp.eq.f32.partialorder %v1306, 8.507059e+37
  %v1308 = vand.u32 %v1281, 2147483648
  %v1309 = vor.u32 1.1754944e-38, %v1308
  %v1310 = vsel %vm1307, %v1309, %v1305
  %v1311 = vmul.f32 1.0, %v1310
  %v1312 = vtanh.pop %v1273
  %v1314 = vrot.slane %v1224, 6
  %v1316 = vmul.f32 %v1296, %v1314
  %v1317 = vmul.f32 %v1296, %v1312
  %1319 = vrot.lane.b32.xlu0 %v1317, 64
  %v1320 = vpop.permute.xlu0 %1319
  %v1322 = vadd.f32 %v1316, %v1320
  %v1323 = vtanh.pop %v1322
  %v1324 = vmul.f32 %v1311, %v1323
  %v1325 = vpack.c.bf16 %v1324, %v1324
  %v1327 = vrot.slane %v1325, 1
  %1328 = vrot.lane.b32.xlu0 %v1327, 64
  %v1329 = vpop.permute.xlu0 %1328
  %v1331 = vsel %vm122, %v1329, 0
  %1333 = vmatpush.bf16.msra.mxu0 0
  %1334 = vmatpush.bf16.msra.mxu0 0
  %1335 = vmatpush.bf16.msra.mxu0 0
  %1336 = vmatpush.bf16.msra.mxu0 0
  %1337 = vmatpush.bf16.msra.mxu0 %v1141
  %1338 = vmatpush.bf16.msra.mxu0 %v1139
  %1339 = vmatpush.bf16.msra.mxu0 %v1137
  %1340 = vmatpush.bf16.msra.mxu0 %v1135
  %1341 = vmatmul.bf16.gmra.mxu0 %v1331
  %v1342 = vpop.f32.mrf.mxu0
  %v1343 = vadd.f32 0.0, %v1342
  %v1344 = vpop.f32.mrf.mxu0
  %1345 = vdwg.mxu0
  %1346 = vmatpush.bf16.msra.mxu0 0
  %1347 = vmatpush.bf16.msra.mxu0 0
  %1348 = vmatpush.bf16.msra.mxu0 0
  %1349 = vmatpush.bf16.msra.mxu0 0
  %1350 = vmatpush.bf16.msra.mxu0 %v1142
  %1351 = vmatpush.bf16.msra.mxu0 %v1140
  %1352 = vmatpush.bf16.msra.mxu0 %v1138
  %1353 = vmatpush.bf16.msra.mxu0 %v1136
  %1354 = vmatmul.bf16.gmra.mxu0 %v1331
  %v1355 = vpop.f32.mrf.mxu0
  %v1356 = vadd.f32 0.0, %v1355
  %v1357 = vpop.f32.mrf.mxu0
  %1358 = vdwg.mxu0
  %v1361 = vrot.slane %v1343, 4
  %v1362 = vrot.slane %v1356, 4
  %v1365 = vadd.f32 %v1109, %v1361
  %v1366 = vadd.f32 %v1110, %v1362
  %v1367 = vxor.u32 %v1365, 2147483648
  %v1368 = vxor.u32 %v1366, 2147483648
  %v1369 = vmul.f32 %v1367, 1.442695
  %v1370 = vpow.pop %v1369
  %v1371 = vmul.f32 %v1368, 1.442695
  %v1372 = vpow.pop %v1371
  %v1373 = vadd.f32 %v1370, 1.0
  %v1374 = vadd.f32 %v1372, 1.0
  %v1375 = vrcp.pop %v1373
  %v1376 = vmul.f32 %v1373, %v1375
  %v1377 = vsub.f32 1.0, %v1376
  %v1378 = vmul.f32 %v1375, %v1377
  %v1379 = vadd.f32 %v1375, %v1378
  %vm1380 = vweird.f32 %v1373
  %vm1381 = vweird.f32 %v1375
  %vm1382 = vmor %vm1380, %vm1381
  %v1383 = vsel %vm1382, %v1375, %v1379
  %v1384 = vand.u32 2147483647, %v1373
  %vm1385 = vcmp.eq.f32.partialorder %v1384, 8.507059e+37
  %v1386 = vand.u32 %v1373, 2147483648
  %v1387 = vor.u32 1.1754944e-38, %v1386
  %v1388 = vsel %vm1385, %v1387, %v1383
  %v1389 = vmul.f32 1.0, %v1388
  %v1390 = vrcp.pop %v1374
  %v1391 = vmul.f32 %v1374, %v1390
  %v1392 = vsub.f32 1.0, %v1391
  %v1393 = vmul.f32 %v1390, %v1392
  %v1394 = vadd.f32 %v1390, %v1393
  %vm1395 = vweird.f32 %v1374
  %vm1396 = vweird.f32 %v1390
  %vm1397 = vmor %vm1395, %vm1396
  %v1398 = vsel %vm1397, %v1390, %v1394
  %v1399 = vand.u32 2147483647, %v1374
  %vm1400 = vcmp.eq.f32.partialorder %v1399, 8.507059e+37
  %v1401 = vand.u32 %v1374, 2147483648
  %v1402 = vor.u32 1.1754944e-38, %v1401
  %v1403 = vsel %vm1400, %v1402, %v1398
  %v1404 = vmul.f32 1.0, %v1403
  %v1405 = vtanh.pop %v1366
  %v1407 = vrot.slane %v1322, 6
  %v1409 = vmul.f32 %v1389, %v1407
  %v1410 = vmul.f32 %v1389, %v1405
  %1412 = vrot.lane.b32.xlu0 %v1410, 64
  %v1413 = vpop.permute.xlu0 %1412
  %v1415 = vadd.f32 %v1409, %v1413
  %v1416 = vtanh.pop %v1415
  %v1417 = vmul.f32 %v1404, %v1416
  %v1418 = vpack.c.bf16 %v1417, %v1417
  %v1420 = vrot.slane %v1418, 2
  %1421 = vrot.lane.b32.xlu0 %v1420, 64
  %v1422 = vpop.permute.xlu0 %1421
  %v1424 = vsel %vm122, %v1422, 0
  %1426 = vmatpush.bf16.msra.mxu0 0
  %1427 = vmatpush.bf16.msra.mxu0 0
  %1428 = vmatpush.bf16.msra.mxu0 0
  %1429 = vmatpush.bf16.msra.mxu0 0
  %1430 = vmatpush.bf16.msra.mxu0 %v1141
  %1431 = vmatpush.bf16.msra.mxu0 %v1139
  %1432 = vmatpush.bf16.msra.mxu0 %v1137
  %1433 = vmatpush.bf16.msra.mxu0 %v1135
  %1434 = vmatmul.bf16.gmra.mxu0 %v1424
  %v1435 = vpop.f32.mrf.mxu0
  %v1436 = vadd.f32 0.0, %v1435
  %v1437 = vpop.f32.mrf.mxu0
  %1438 = vdwg.mxu0
  %1439 = vmatpush.bf16.msra.mxu0 0
  %1440 = vmatpush.bf16.msra.mxu0 0
  %1441 = vmatpush.bf16.msra.mxu0 0
  %1442 = vmatpush.bf16.msra.mxu0 0
  %1443 = vmatpush.bf16.msra.mxu0 %v1142
  %1444 = vmatpush.bf16.msra.mxu0 %v1140
  %1445 = vmatpush.bf16.msra.mxu0 %v1138
  %1446 = vmatpush.bf16.msra.mxu0 %v1136
  %1447 = vmatmul.bf16.gmra.mxu0 %v1424
  %v1448 = vpop.f32.mrf.mxu0
  %v1449 = vadd.f32 0.0, %v1448
  %v1450 = vpop.f32.mrf.mxu0
  %1451 = vdwg.mxu0
  %v1454 = vrot.slane %v1436, 2
  %v1455 = vrot.slane %v1449, 2
  %v1458 = vadd.f32 %v1231, %v1454
  %v1459 = vadd.f32 %v1232, %v1455
  %v1460 = vxor.u32 %v1458, 2147483648
  %v1461 = vxor.u32 %v1459, 2147483648
  %v1462 = vmul.f32 %v1460, 1.442695
  %v1463 = vpow.pop %v1462
  %v1464 = vmul.f32 %v1461, 1.442695
  %v1465 = vpow.pop %v1464
  %v1466 = vadd.f32 %v1463, 1.0
  %v1467 = vadd.f32 %v1465, 1.0
  %v1468 = vrcp.pop %v1466
  %v1469 = vmul.f32 %v1466, %v1468
  %v1470 = vsub.f32 1.0, %v1469
  %v1471 = vmul.f32 %v1468, %v1470
  %v1472 = vadd.f32 %v1468, %v1471
  %vm1473 = vweird.f32 %v1466
  %vm1474 = vweird.f32 %v1468
  %vm1475 = vmor %vm1473, %vm1474
  %v1476 = vsel %vm1475, %v1468, %v1472
  %v1477 = vand.u32 2147483647, %v1466
  %vm1478 = vcmp.eq.f32.partialorder %v1477, 8.507059e+37
  %v1479 = vand.u32 %v1466, 2147483648
  %v1480 = vor.u32 1.1754944e-38, %v1479
  %v1481 = vsel %vm1478, %v1480, %v1476
  %v1482 = vmul.f32 1.0, %v1481
  %v1483 = vrcp.pop %v1467
  %v1484 = vmul.f32 %v1467, %v1483
  %v1485 = vsub.f32 1.0, %v1484
  %v1486 = vmul.f32 %v1483, %v1485
  %v1487 = vadd.f32 %v1483, %v1486
  %vm1488 = vweird.f32 %v1467
  %vm1489 = vweird.f32 %v1483
  %vm1490 = vmor %vm1488, %vm1489
  %v1491 = vsel %vm1490, %v1483, %v1487
  %v1492 = vand.u32 2147483647, %v1467
  %vm1493 = vcmp.eq.f32.partialorder %v1492, 8.507059e+37
  %v1494 = vand.u32 %v1467, 2147483648
  %v1495 = vor.u32 1.1754944e-38, %v1494
  %v1496 = vsel %vm1493, %v1495, %v1491
  %v1497 = vmul.f32 1.0, %v1496
  %v1498 = vtanh.pop %v1459
  %v1500 = vrot.slane %v1415, 6
  %v1502 = vmul.f32 %v1482, %v1500
  %v1503 = vmul.f32 %v1482, %v1498
  %1505 = vrot.lane.b32.xlu0 %v1503, 64
  %v1506 = vpop.permute.xlu0 %1505
  %v1508 = vadd.f32 %v1502, %v1506
  %v1509 = vtanh.pop %v1508
  %v1510 = vmul.f32 %v1497, %v1509
  %v1513 = vrot.slane %v1077, 6
  %v1514 = vrot.slane %v1091, 6
  %v1517 = vsel %vm62, %v1079, %v1513
  %v1518 = vsel %vm63, %v1093, %v1514
  %v1519 = vpack.c.bf16 %v1510, %v1510
  %v1521 = vrot.slane %v1519, 3
  %1522 = vrot.lane.b32.xlu0 %v1521, 64
  %v1523 = vpop.permute.xlu0 %1522
  %v1525 = vsel %vm122, %v1523, 0
  %1527 = vmatpush.bf16.msra.mxu0 0
  %1528 = vmatpush.bf16.msra.mxu0 0
  %1529 = vmatpush.bf16.msra.mxu0 0
  %1530 = vmatpush.bf16.msra.mxu0 0
  %1531 = vmatpush.bf16.msra.mxu0 %v1141
  %1532 = vmatpush.bf16.msra.mxu0 %v1139
  %1533 = vmatpush.bf16.msra.mxu0 %v1137
  %1534 = vmatpush.bf16.msra.mxu0 %v1135
  %1535 = vmatmul.bf16.gmra.mxu0 %v1525
  %v1536 = vpop.f32.mrf.mxu0
  %v1537 = vadd.f32 0.0, %v1536
  %v1538 = vpop.f32.mrf.mxu0
  %1539 = vdwg.mxu0
  %1540 = vmatpush.bf16.msra.mxu0 0
  %1541 = vmatpush.bf16.msra.mxu0 0
  %1542 = vmatpush.bf16.msra.mxu0 0
  %1543 = vmatpush.bf16.msra.mxu0 0
  %1544 = vmatpush.bf16.msra.mxu0 %v1142
  %1545 = vmatpush.bf16.msra.mxu0 %v1140
  %1546 = vmatpush.bf16.msra.mxu0 %v1138
  %1547 = vmatpush.bf16.msra.mxu0 %v1136
  %1548 = vmatmul.bf16.gmra.mxu0 %v1525
  %v1549 = vpop.f32.mrf.mxu0
  %v1550 = vadd.f32 0.0, %v1549
  %v1551 = vpop.f32.mrf.mxu0
  %1552 = vdwg.mxu0
  %v1553 = vadd.f32 %v1517, %v1537
  %v1554 = vadd.f32 %v1518, %v1550
  %v1555 = vxor.u32 %v1553, 2147483648
  %v1556 = vxor.u32 %v1554, 2147483648
  %v1557 = vmul.f32 %v1555, 1.442695
  %v1558 = vpow.pop %v1557
  %v1559 = vmul.f32 %v1556, 1.442695
  %v1560 = vpow.pop %v1559
  %v1561 = vadd.f32 %v1558, 1.0
  %v1562 = vadd.f32 %v1560, 1.0
  %v1563 = vrcp.pop %v1561
  %v1564 = vmul.f32 %v1561, %v1563
  %v1565 = vsub.f32 1.0, %v1564
  %v1566 = vmul.f32 %v1563, %v1565
  %v1567 = vadd.f32 %v1563, %v1566
  %vm1568 = vweird.f32 %v1561
  %vm1569 = vweird.f32 %v1563
  %vm1570 = vmor %vm1568, %vm1569
  %v1571 = vsel %vm1570, %v1563, %v1567
  %v1572 = vand.u32 2147483647, %v1561
  %vm1573 = vcmp.eq.f32.partialorder %v1572, 8.507059e+37
  %v1574 = vand.u32 %v1561, 2147483648
  %v1575 = vor.u32 1.1754944e-38, %v1574
  %v1576 = vsel %vm1573, %v1575, %v1571
  %v1577 = vmul.f32 1.0, %v1576
  %v1578 = vrcp.pop %v1562
  %v1579 = vmul.f32 %v1562, %v1578
  %v1580 = vsub.f32 1.0, %v1579
  %v1581 = vmul.f32 %v1578, %v1580
  %v1582 = vadd.f32 %v1578, %v1581
  %vm1583 = vweird.f32 %v1562
  %vm1584 = vweird.f32 %v1578
  %vm1585 = vmor %vm1583, %vm1584
  %v1586 = vsel %vm1585, %v1578, %v1582
  %v1587 = vand.u32 2147483647, %v1562
  %vm1588 = vcmp.eq.f32.partialorder %v1587, 8.507059e+37
  %v1589 = vand.u32 %v1562, 2147483648
  %v1590 = vor.u32 1.1754944e-38, %v1589
  %v1591 = vsel %vm1588, %v1590, %v1586
  %v1592 = vmul.f32 1.0, %v1591
  %v1593 = vtanh.pop %v1554
  %v1595 = vrot.slane %v1508, 6
  %v1597 = vmul.f32 %v1577, %v1595
  %v1598 = vmul.f32 %v1577, %v1593
  %1600 = vrot.lane.b32.xlu0 %v1598, 64
  %v1601 = vpop.permute.xlu0 %1600
  %v1603 = vadd.f32 %v1597, %v1601
  %v1604 = vtanh.pop %v1603
  %v1605 = vmul.f32 %v1592, %v1604
  %v1606 = vrot.slane %v1077, 2
  %v1607 = vrot.slane %v1091, 2
  %v1610 = vsel %vm62, %v1079, %v1606
  %v1611 = vsel %vm63, %v1093, %v1607
  %v1612 = vpack.c.bf16 %v1605, %v1605
  %1614 = vrot.lane.b32.xlu0 %v1612, 64
  %v1615 = vpop.permute.xlu0 %1614
  %v1617 = vsel %vm122, %v1615, 0
  %1619 = vmatpush.bf16.msra.mxu0 0
  %1620 = vmatpush.bf16.msra.mxu0 0
  %1621 = vmatpush.bf16.msra.mxu0 0
  %1622 = vmatpush.bf16.msra.mxu0 0
  %1623 = vmatpush.bf16.msra.mxu0 %v1141
  %1624 = vmatpush.bf16.msra.mxu0 %v1139
  %1625 = vmatpush.bf16.msra.mxu0 %v1137
  %1626 = vmatpush.bf16.msra.mxu0 %v1135
  %1627 = vmatmul.bf16.gmra.mxu0 %v1617
  %v1628 = vpop.f32.mrf.mxu0
  %v1629 = vadd.f32 0.0, %v1628
  %v1630 = vpop.f32.mrf.mxu0
  %1631 = vdwg.mxu0
  %1632 = vmatpush.bf16.msra.mxu0 0
  %1633 = vmatpush.bf16.msra.mxu0 0
  %1634 = vmatpush.bf16.msra.mxu0 0
  %1635 = vmatpush.bf16.msra.mxu0 0
  %1636 = vmatpush.bf16.msra.mxu0 %v1142
  %1637 = vmatpush.bf16.msra.mxu0 %v1140
  %1638 = vmatpush.bf16.msra.mxu0 %v1138
  %1639 = vmatpush.bf16.msra.mxu0 %v1136
  %1640 = vmatmul.bf16.gmra.mxu0 %v1617
  %v1641 = vpop.f32.mrf.mxu0
  %v1642 = vadd.f32 0.0, %v1641
  %v1643 = vpop.f32.mrf.mxu0
  %1644 = vdwg.mxu0
  %v1647 = vrot.slane %v1629, 6
  %v1648 = vrot.slane %v1642, 6
  %v1651 = vadd.f32 %v1610, %v1647
  %v1652 = vadd.f32 %v1611, %v1648
  %v1653 = vxor.u32 %v1651, 2147483648
  %v1654 = vxor.u32 %v1652, 2147483648
  %v1655 = vmul.f32 %v1653, 1.442695
  %v1656 = vpow.pop %v1655
  %v1657 = vmul.f32 %v1654, 1.442695
  %v1658 = vpow.pop %v1657
  %v1659 = vadd.f32 %v1656, 1.0
  %v1660 = vadd.f32 %v1658, 1.0
  %v1661 = vrcp.pop %v1659
  %v1662 = vmul.f32 %v1659, %v1661
  %v1663 = vsub.f32 1.0, %v1662
  %v1664 = vmul.f32 %v1661, %v1663
  %v1665 = vadd.f32 %v1661, %v1664
  %vm1666 = vweird.f32 %v1659
  %vm1667 = vweird.f32 %v1661
  %vm1668 = vmor %vm1666, %vm1667
  %v1669 = vsel %vm1668, %v1661, %v1665
  %v1670 = vand.u32 2147483647, %v1659
  %vm1671 = vcmp.eq.f32.partialorder %v1670, 8.507059e+37
  %v1672 = vand.u32 %v1659, 2147483648
  %v1673 = vor.u32 1.1754944e-38, %v1672
  %v1674 = vsel %vm1671, %v1673, %v1669
  %v1675 = vmul.f32 1.0, %v1674
  %v1676 = vrcp.pop %v1660
  %v1677 = vmul.f32 %v1660, %v1676
  %v1678 = vsub.f32 1.0, %v1677
  %v1679 = vmul.f32 %v1676, %v1678
  %v1680 = vadd.f32 %v1676, %v1679
  %vm1681 = vweird.f32 %v1660
  %vm1682 = vweird.f32 %v1676
  %vm1683 = vmor %vm1681, %vm1682
  %v1684 = vsel %vm1683, %v1676, %v1680
  %v1685 = vand.u32 2147483647, %v1660
  %vm1686 = vcmp.eq.f32.partialorder %v1685, 8.507059e+37
  %v1687 = vand.u32 %v1660, 2147483648
  %v1688 = vor.u32 1.1754944e-38, %v1687
  %v1689 = vsel %vm1686, %v1688, %v1684
  %v1690 = vmul.f32 1.0, %v1689
  %v1691 = vtanh.pop %v1652
  %v1693 = vrot.slane %v1603, 6
  %v1695 = vmul.f32 %v1675, %v1693
  %v1696 = vmul.f32 %v1675, %v1691
  %1698 = vrot.lane.b32.xlu0 %v1696, 64
  %v1699 = vpop.permute.xlu0 %1698
  %v1701 = vadd.f32 %v1695, %v1699
  %v1702 = vtanh.pop %v1701
  %v1703 = vmul.f32 %v1690, %v1702
  %v1704 = vpack.c.bf16 %v1703, %v1703
  %v1706 = vrot.slane %v1704, 1
  %1707 = vrot.lane.b32.xlu0 %v1706, 64
  %v1708 = vpop.permute.xlu0 %1707
  %v1710 = vsel %vm122, %v1708, 0
  %1712 = vmatpush.bf16.msra.mxu0 0
  %1713 = vmatpush.bf16.msra.mxu0 0
  %1714 = vmatpush.bf16.msra.mxu0 0
  %1715 = vmatpush.bf16.msra.mxu0 0
  %1716 = vmatpush.bf16.msra.mxu0 %v1141
  %1717 = vmatpush.bf16.msra.mxu0 %v1139
  %1718 = vmatpush.bf16.msra.mxu0 %v1137
  %1719 = vmatpush.bf16.msra.mxu0 %v1135
  %1720 = vmatmul.bf16.gmra.mxu0 %v1710
  %v1721 = vpop.f32.mrf.mxu0
  %v1722 = vadd.f32 0.0, %v1721
  %v1723 = vpop.f32.mrf.mxu0
  %1724 = vdwg.mxu0
  %1725 = vmatpush.bf16.msra.mxu0 0
  %1726 = vmatpush.bf16.msra.mxu0 0
  %1727 = vmatpush.bf16.msra.mxu0 0
  %1728 = vmatpush.bf16.msra.mxu0 0
  %1729 = vmatpush.bf16.msra.mxu0 %v1142
  %1730 = vmatpush.bf16.msra.mxu0 %v1140
  %1731 = vmatpush.bf16.msra.mxu0 %v1138
  %1732 = vmatpush.bf16.msra.mxu0 %v1136
  %1733 = vmatmul.bf16.gmra.mxu0 %v1710
  %v1734 = vpop.f32.mrf.mxu0
  %v1735 = vadd.f32 0.0, %v1734
  %v1736 = vpop.f32.mrf.mxu0
  %1737 = vdwg.mxu0
  %v1740 = vrot.slane %v1722, 4
  %v1741 = vrot.slane %v1735, 4
  %v1744 = vadd.f32 %v1517, %v1740
  %v1745 = vadd.f32 %v1518, %v1741
  %v1746 = vxor.u32 %v1744, 2147483648
  %v1747 = vxor.u32 %v1745, 2147483648
  %v1748 = vmul.f32 %v1746, 1.442695
  %v1749 = vpow.pop %v1748
  %v1750 = vmul.f32 %v1747, 1.442695
  %v1751 = vpow.pop %v1750
  %v1752 = vadd.f32 %v1749, 1.0
  %v1753 = vadd.f32 %v1751, 1.0
  %v1754 = vrcp.pop %v1752
  %v1755 = vmul.f32 %v1752, %v1754
  %v1756 = vsub.f32 1.0, %v1755
  %v1757 = vmul.f32 %v1754, %v1756
  %v1758 = vadd.f32 %v1754, %v1757
  %vm1759 = vweird.f32 %v1752
  %vm1760 = vweird.f32 %v1754
  %vm1761 = vmor %vm1759, %vm1760
  %v1762 = vsel %vm1761, %v1754, %v1758
  %v1763 = vand.u32 2147483647, %v1752
  %vm1764 = vcmp.eq.f32.partialorder %v1763, 8.507059e+37
  %v1765 = vand.u32 %v1752, 2147483648
  %v1766 = vor.u32 1.1754944e-38, %v1765
  %v1767 = vsel %vm1764, %v1766, %v1762
  %v1768 = vmul.f32 1.0, %v1767
  %v1769 = vrcp.pop %v1753
  %v1770 = vmul.f32 %v1753, %v1769
  %v1771 = vsub.f32 1.0, %v1770
  %v1772 = vmul.f32 %v1769, %v1771
  %v1773 = vadd.f32 %v1769, %v1772
  %vm1774 = vweird.f32 %v1753
  %vm1775 = vweird.f32 %v1769
  %vm1776 = vmor %vm1774, %vm1775
  %v1777 = vsel %vm1776, %v1769, %v1773
  %v1778 = vand.u32 2147483647, %v1753
  %vm1779 = vcmp.eq.f32.partialorder %v1778, 8.507059e+37
  %v1780 = vand.u32 %v1753, 2147483648
  %v1781 = vor.u32 1.1754944e-38, %v1780
  %v1782 = vsel %vm1779, %v1781, %v1777
  %v1783 = vmul.f32 1.0, %v1782
  %v1784 = vtanh.pop %v1745
  %v1786 = vrot.slane %v1701, 6
  %v1788 = vmul.f32 %v1768, %v1786
  %v1789 = vmul.f32 %v1768, %v1784
  %1791 = vrot.lane.b32.xlu0 %v1789, 64
  %v1792 = vpop.permute.xlu0 %1791
  %v1794 = vadd.f32 %v1788, %v1792
  %v1795 = vtanh.pop %v1794
  %v1796 = vmul.f32 %v1783, %v1795
  %v1797 = vpack.c.bf16 %v1796, %v1796
  %v1799 = vrot.slane %v1797, 2
  %1800 = vrot.lane.b32.xlu0 %v1799, 64
  %v1801 = vpop.permute.xlu0 %1800
  %v1803 = vsel %vm122, %v1801, 0
  %1805 = vmatpush.bf16.msra.mxu0 0
  %1806 = vmatpush.bf16.msra.mxu0 0
  %1807 = vmatpush.bf16.msra.mxu0 0
  %1808 = vmatpush.bf16.msra.mxu0 0
  %1809 = vmatpush.bf16.msra.mxu0 %v1141
  %1810 = vmatpush.bf16.msra.mxu0 %v1139
  %1811 = vmatpush.bf16.msra.mxu0 %v1137
  %1812 = vmatpush.bf16.msra.mxu0 %v1135
  %1813 = vmatmul.bf16.gmra.mxu0 %v1803
  %v1814 = vpop.f32.mrf.mxu0
  %v1815 = vadd.f32 0.0, %v1814
  %v1816 = vpop.f32.mrf.mxu0
  %1817 = vdwg.mxu0
  %1818 = vmatpush.bf16.msra.mxu0 0
  %1819 = vmatpush.bf16.msra.mxu0 0
  %1820 = vmatpush.bf16.msra.mxu0 0
  %1821 = vmatpush.bf16.msra.mxu0 0
  %1822 = vmatpush.bf16.msra.mxu0 %v1142
  %1823 = vmatpush.bf16.msra.mxu0 %v1140
  %1824 = vmatpush.bf16.msra.mxu0 %v1138
  %1825 = vmatpush.bf16.msra.mxu0 %v1136
  %1826 = vmatmul.bf16.gmra.mxu0 %v1803
  %v1827 = vpop.f32.mrf.mxu0
  %v1828 = vadd.f32 0.0, %v1827
  %v1829 = vpop.f32.mrf.mxu0
  %1830 = vdwg.mxu0
  %v1833 = vrot.slane %v1815, 2
  %v1834 = vrot.slane %v1828, 2
  %v1837 = vadd.f32 %v1610, %v1833
  %v1838 = vadd.f32 %v1611, %v1834
  %v1839 = vxor.u32 %v1837, 2147483648
  %v1840 = vxor.u32 %v1838, 2147483648
  %v1841 = vmul.f32 %v1839, 1.442695
  %v1842 = vpow.pop %v1841
  %v1843 = vmul.f32 %v1840, 1.442695
  %v1844 = vpow.pop %v1843
  %v1845 = vadd.f32 %v1842, 1.0
  %v1846 = vadd.f32 %v1844, 1.0
  %v1847 = vrcp.pop %v1845
  %v1848 = vmul.f32 %v1845, %v1847
  %v1849 = vsub.f32 1.0, %v1848
  %v1850 = vmul.f32 %v1847, %v1849
  %v1851 = vadd.f32 %v1847, %v1850
  %vm1852 = vweird.f32 %v1845
  %vm1853 = vweird.f32 %v1847
  %vm1854 = vmor %vm1852, %vm1853
  %v1855 = vsel %vm1854, %v1847, %v1851
  %v1856 = vand.u32 2147483647, %v1845
  %vm1857 = vcmp.eq.f32.partialorder %v1856, 8.507059e+37
  %v1858 = vand.u32 %v1845, 2147483648
  %v1859 = vor.u32 1.1754944e-38, %v1858
  %v1860 = vsel %vm1857, %v1859, %v1855
  %v1861 = vmul.f32 1.0, %v1860
  %v1862 = vrcp.pop %v1846
  %v1863 = vmul.f32 %v1846, %v1862
  %v1864 = vsub.f32 1.0, %v1863
  %v1865 = vmul.f32 %v1862, %v1864
  %v1866 = vadd.f32 %v1862, %v1865
  %vm1867 = vweird.f32 %v1846
  %vm1868 = vweird.f32 %v1862
  %vm1869 = vmor %vm1867, %vm1868
  %v1870 = vsel %vm1869, %v1862, %v1866
  %v1871 = vand.u32 2147483647, %v1846
  %vm1872 = vcmp.eq.f32.partialorder %v1871, 8.507059e+37
  %v1873 = vand.u32 %v1846, 2147483648
  %v1874 = vor.u32 1.1754944e-38, %v1873
  %v1875 = vsel %vm1872, %v1874, %v1870
  %v1876 = vmul.f32 1.0, %v1875
  %v1877 = vtanh.pop %v1838
  %v1879 = vrot.slane %v1794, 6
  %v1881 = vmul.f32 %v1861, %v1879
  %v1882 = vmul.f32 %v1861, %v1877
  %1884 = vrot.lane.b32.xlu0 %v1882, 64
  %v1885 = vpop.permute.xlu0 %1884
  %v1887 = vadd.f32 %v1881, %v1885
  %v1888 = vtanh.pop %v1887
  %v1889 = vmul.f32 %v1876, %v1888
  %v1890 = vpack.c.bf16 %v1889, %v1889
  %v1891 = vld [vmem:[%s7] sm:$0xf]
  %v1892 = vld [vmem:[%s7 + $0x4] sm:$0xf]
  %v1893 = vld [vmem:[%s7 + $0x8] sm:$0xf]
  %v1894 = vld [vmem:[%s7 + $0xc] sm:$0xf]
  %v1895 = vld [vmem:[%s7 + $0x10] sm:$0xf]
  %v1896 = vld [vmem:[%s7 + $0x14] sm:$0xf]
  %v1897 = vld [vmem:[%s7 + $0x18] sm:$0xf]
  %v1898 = vld [vmem:[%s7 + $0x1c] sm:$0xf]
  %v1899 = vld [vmem:[#allocation3] sm:$0x1]
  %v1901 = vperm.slane %v1899, 0
  %v1904 = vrot.slane %v1890, 3
  %1905 = vrot.lane.b32.xlu0 %v1904, 64
  %v1906 = vpop.permute.xlu0 %1905
  %v1915 = vunpack.c.l.b16 %v1891
  %v1916 = vunpack.c.l.b16 %v1892
  %v1917 = vunpack.c.l.b16 %v1893
  %v1918 = vunpack.c.l.b16 %v1894
  %v1919 = vunpack.c.l.b16 %v1895
  %v1920 = vunpack.c.l.b16 %v1896
  %v1921 = vunpack.c.l.b16 %v1897
  %v1922 = vunpack.c.l.b16 %v1898
  %v1923 = vpack.c.b16 %v1916, %v1915
  %v1924 = vpack.c.b16 %v1918, %v1917
  %v1925 = vpack.c.b16 %v1920, %v1919
  %v1926 = vpack.c.b16 %v1922, %v1921
  %v1932 = vsel %vm122, %v1906, 0
  %1934 = vmatpush.bf16.msra.mxu0 0
  %1935 = vmatpush.bf16.msra.mxu0 0
  %1936 = vmatpush.bf16.msra.mxu0 0
  %1937 = vmatpush.bf16.msra.mxu0 0
  %1938 = vmatpush.bf16.msra.mxu0 %v1926
  %1939 = vmatpush.bf16.msra.mxu0 %v1925
  %1940 = vmatpush.bf16.msra.mxu0 %v1924
  %1941 = vmatpush.bf16.msra.mxu0 %v1923
  %1942 = vmatmul.bf16.gmra.mxu0 %v1932
  %v1943 = vpop.f32.mrf.mxu0
  %v1944 = vadd.f32 %v1901, %v1943
  %v1945 = vpop.f32.mrf.mxu0
  %1946 = vdwg.mxu0
  %vm1947 = vcmask 1024
  %1948 = vst.msk [vmem:[%s9] sm:$0x3] %vm1947, %v1944
  // Predicated region
  $region38: #{te_bilstm_forward.5} parent=0 // pred_check
    _
  $region39: #{te_bilstm_forward.5} parent=0 // pred_check_branch
    %1950 = sbr.rel (0) target = $region41
  $region40: #{te_bilstm_forward.5} parent=0 // pred_region
    _
  $region41: #{te_bilstm_forward.5} parent=0 // pred_fallthru
    _
  // Predicated region
  $region42: #{te_bilstm_forward.5} parent=0 // pred_check
    _
  $region43: #{te_bilstm_forward.5} parent=0 // pred_check_branch
    %1952 = sbr.rel (0) target = $region45
  $region44: #{te_bilstm_forward.5} parent=0 // pred_region
    _
  $region45: #{te_bilstm_forward.5} parent=0 // pred_fallthru
    _

</llo_original>
